<compile_context>
chip_gen: v7x
topology: tpu7x:2x2x1
jax: 0.10.0
libtpu: 0.0.40
codegen_flags: <defaults>
</compile_context>

<pallas_src>
import functools

import jax
import jax.numpy as jnp
from jax.experimental import pallas as pl
from jax.experimental.pallas import tpu as pltpu

# pytorch3d BlendParams defaults / softmax_feature_blend constants
SIGMA = 1e-4
GAMMA = 1e-4
ZNEAR = 1.0
ZFAR = 100.0
EPS = 1e-10
NORM_EPS = 1e-8            # feat + 1e-8 before F.normalize
TORCH_NORM_CLAMP = 1e-12   # torch.nn.functional.normalize default eps


# ----------------------------------------------------------------------------
# Pallas kernel: interpolate_face_attributes + softmax_feature_blend + L2 norm
# (channel-major: pixels on lanes; gather runs on the MXU via bf16 one-hots)
# ----------------------------------------------------------------------------
def _blend_kernel(frag_ref, ff_ref, out_ref, *, K, D, Fp, FCHUNK):
    frag = frag_ref[...]                       # (6K, TP) f32, pixels on lanes
    TP = frag.shape[-1]

    p2f_f = frag[0:K, :]                       # (K, TP) face index as f32 (-1 = none)
    zbuf = frag[K:2 * K, :]                    # (K, TP)
    dists = frag[2 * K:3 * K, :]               # (K, TP)
    bary = frag[3 * K:6 * K, :]                # (3K, TP), row = 3k + j

    fg = (p2f_f >= 0.0).astype(jnp.float32)                          # mask per k
    prob = jax.nn.sigmoid(dists * (-1.0 / (SIGMA + 1e-8))) * fg      # prob_map
    z_inv = (ZFAR - zbuf) * (1.0 / (ZFAR - ZNEAR)) * fg
    z_inv_max = jnp.maximum(jnp.max(z_inv, axis=0, keepdims=True), EPS)
    wnum = prob * jnp.exp((z_inv - z_inv_max) * (1.0 / GAMMA))       # (K, TP)
    delta = jnp.maximum(jnp.exp((EPS - z_inv_max) * (1.0 / GAMMA)), EPS)
    wsum = jnp.sum(wnum, axis=0, keepdims=True)                      # (1, TP)
    denom = wsum + delta

    # mask channel = softmax blend of the constant per-K "valid" feature
    # (background = 0 since D != 3): exact divide, it is consumed directly.
    mask_out = wsum / denom                                          # (1, TP)
    # per-face weights: approx EUP reciprocal — any uniform per-pixel scale
    # error cancels in the channel-wise L2 normalize below.
    wk = wnum * pl.reciprocal(denom, approx=True)                    # (K, TP)

    # weighted barycentric rows  wb[k][j] = wk_k * bary_{k,j}   (tiny, hoisted)
    wb = [[wk[k:k + 1, :] * bary[3 * k + j:3 * k + j + 1, :] for j in range(3)]
          for k in range(K)]
    p2f_i = p2f_f.astype(jnp.int32)                                  # exact (Fc < 2^24)

    # MXU gather: per top-K face, one bf16 one-hot over the face-id chunk and a
    # single (3D, FCHUNK) @ (FCHUNK, TP) matmul pulls all three vertex features
    # at once; 3 tiny (D, TP) axpy's then apply the softmax/bary weights.
    # Face axis is chunked so live VMEM stays ~FCHUNK*TP regardless of mesh size.
    # TODO(synk): for very large meshes (Fc >> ~2K) switch the static chunk loop
    # to lax.fori_loop, or pre-gather the K*3 vertex features in the wrapper
    # (O(K*D) per pixel, mesh-size independent) and skip the one-hot entirely.
    proj = jnp.zeros((D, TP), jnp.float32)
    for c in range(Fp // FCHUNK):
        base = c * FCHUNK
        face_iota = jax.lax.broadcasted_iota(jnp.int32, (FCHUNK, TP), 0) + base
        ff_c = ff_ref[:, base:base + FCHUNK]                         # (3D, FCHUNK) bf16
        for k in range(K):
            onehot = (face_iota == p2f_i[k:k + 1, :]).astype(jnp.bfloat16)
            g = jnp.dot(ff_c, onehot,
                        preferred_element_type=jnp.float32)          # (3D, TP) f32
            for j in range(3):
                proj = proj + wb[k][j] * g[j * D:(j + 1) * D, :]

    # projected_map (background = 0), then F.normalize(feat + 1e-8, dim=channel)
    p = proj + NORM_EPS
    inv_nrm = jax.lax.rsqrt(jnp.maximum(
        jnp.sum(p * p, axis=0, keepdims=True),
        TORCH_NORM_CLAMP * TORCH_NORM_CLAMP))                         # EUP rsqrt
    out_ref[0:D, :] = p * inv_nrm          # D multiple-of-8 rows -> unmasked stores
    out_ref[D:D + 1, :] = mask_out         # single-sublane row (negligible)


def blend_pallas(frag, face_feat, *, K, D, tile, fchunk):
    N, C, HWpad = frag.shape
    assert C == 6 * K and HWpad % tile == 0 and tile % 128 == 0
    TD, Fp = face_feat.shape
    assert TD == 3 * D and Fp % fchunk == 0
    d_out = D + 1

    kernel = functools.partial(_blend_kernel, K=K, D=D, Fp=Fp, FCHUNK=fchunk)

    # Explicit scoped-VMEM budget (v5e default is only 16 MiB):
    vmem_est = (2 * 6 * K * tile * 4            # frag input, double-buffered
                + 2 * 3 * D * Fp * 2            # bf16 face-feature table
                + 2 * d_out * tile * 4          # output, double-buffered
                + 6 * K * tile * 4              # live frag copy
                + fchunk * tile * (4 + 2)       # chunk iota (i32) + bf16 one-hot
                + (3 * D + 2 * D) * tile * 4    # gather result + accum + normed
                + 12 * K * tile * 4             # per-K temporaries
                + (4 << 20))                    # headroom
    vmem_limit = int(min(max(vmem_est, 32 << 20), 64 << 20))

    return pl.pallas_call(
        kernel,
        out_shape=jax.ShapeDtypeStruct((N, d_out, HWpad), jnp.float32),
        grid_spec=pltpu.PrefetchScalarGridSpec(
            num_scalar_prefetch=0,
            grid=(N, HWpad // tile),
            in_specs=[
                # one packed, lane-dense fragment DMA per grid step
                pl.BlockSpec((None, 6 * K, tile), lambda n, t: (n, 0, t)),
                # small bf16 face-feature table, resident (constant block index)
                pl.BlockSpec((3 * D, Fp), lambda n, t: (0, 0)),
            ],
            out_specs=pl.BlockSpec((None, d_out, tile), lambda n, t: (n, 0, t)),
        ),
        compiler_params=pltpu.CompilerParams(
            dimension_semantics=("parallel", "parallel"),
            vmem_limit_bytes=vmem_limit),
    )(frag, face_feat)


# ----------------------------------------------------------------------------
# Simple brute-force rasterizer (plain JAX glue; stands in for the injected
# pytorch3d MeshRasterizer dependency).  Everything that feeds the Pallas
# kernel is produced lane-dense (pixels on the last axis) so no wrapper-side
# (N,HW,6K)->(N,6K,HW) transpose is needed.
# ----------------------------------------------------------------------------
def simple_rasterize(verts, faces, R, T, H, W, K):
    # TODO(synk): at production resolutions the (N, HW, Fc) depth buffer +
    # top_k here is the dominant HBM cost; a real deployment should rasterize
    # in face chunks with a running top-K merge fused into the same pipeline.
    N = verts.shape[0]
    HW = H * W
    cam = jnp.einsum('nvi,nij->nvj', verts, R) + T[:, None, :]    # X @ R + T
    z = cam[..., 2]
    x = cam[..., 0] / z
    y = cam[..., 1] / z

    fx, fy = x[:, faces], y[:, faces]                             # (N, Fc, 3)
    fz = z[:, faces]
    x0, x1, x2 = fx[..., 0], fx[..., 1], fx[..., 2]               # (N, Fc)
    y0, y1, y2 = fy[..., 0], fy[..., 1], fy[..., 2]
    z0, z1, z2 = fz[..., 0], fz[..., 1], fz[..., 2]
    area = (x1 - x0) * (y2 - y0) - (x2 - x0) * (y1 - y0)
    safe_area = jnp.where(jnp.abs(area) < 1e-9, 1.0, area)

    xs = (jnp.arange(W, dtype=jnp.float32) + 0.5) / W * 2.0 - 1.0
    ys = (jnp.arange(H, dtype=jnp.float32) + 0.5) / H * 2.0 - 1.0
    PX, PY = jnp.meshgrid(xs, ys, indexing='xy')                  # (H, W)
    px = PX.reshape(HW)
    py = PY.reshape(HW)

    # coarse depth/coverage pass, faces-last so top_k reduces the minor axis
    def edge_all(ax, ay, bx, by):                                 # -> (N, HW, Fc)
        return ((bx - ax)[:, None, :] * (py[None, :, None] - ay[:, None, :])
                - (by - ay)[:, None, :] * (px[None, :, None] - ax[:, None, :]))

    w0 = edge_all(x1, y1, x2, y2) / safe_area[:, None, :]
    w1 = edge_all(x2, y2, x0, y0) / safe_area[:, None, :]
    w2 = edge_all(x0, y0, x1, y1) / safe_area[:, None, :]
    inside = ((w0 >= 0) & (w1 >= 0) & (w2 >= 0)
              & (jnp.abs(area)[:, None, :] > 1e-9))
    z_pix = (w0 * z0[:, None, :] + w1 * z1[:, None, :] + w2 * z2[:, None, :])
    valid = inside & (z_pix > 1e-3)
    depth_key = jnp.where(valid, z_pix, jnp.inf)                  # (N, HW, Fc)

    neg_vals, idx = jax.lax.top_k(-depth_key, K)                  # K nearest faces
    vals = -neg_vals
    sel_valid = jnp.isfinite(vals)                                # (N, HW, K)

    # switch to lane-dense layout: only the small K-channel tensors are
    # transposed, the heavier bary/dists channels are computed directly with
    # pixels on the last axis.
    idx_t = jnp.transpose(idx, (0, 2, 1))                         # (N, K, HW)
    sel_valid_t = jnp.transpose(sel_valid, (0, 2, 1))
    pix_to_face = jnp.where(sel_valid_t, idx_t, -1).astype(jnp.int32)
    zbuf = jnp.where(sel_valid_t, jnp.transpose(vals, (0, 2, 1)), -1.0)

    def gather_f(attr):                                           # (N,Fc)->(N,K,HW)
        g = jnp.take_along_axis(attr, idx_t.reshape(N, K * HW), axis=1)
        return g.reshape(N, K, HW)

    sx0, sx1, sx2 = gather_f(x0), gather_f(x1), gather_f(x2)
    sy0, sy1, sy2 = gather_f(y0), gather_f(y1), gather_f(y2)
    s_area = (sx1 - sx0) * (sy2 - sy0) - (sx2 - sx0) * (sy1 - sy0)
    s_safe = jnp.where(jnp.abs(s_area) < 1e-9, 1.0, s_area)
    pxk = px[None, None, :]
    pyk = py[None, None, :]

    def edge_sel(ax, ay, bx, by):
        return (bx - ax) * (pyk - ay) - (by - ay) * (pxk - ax)

    b0 = edge_sel(sx1, sy1, sx2, sy2) / s_safe
    b1 = edge_sel(sx2, sy2, sx0, sy0) / s_safe
    b2 = edge_sel(sx0, sy0, sx1, sy1) / s_safe
    bary = jnp.stack([b0, b1, b2], axis=2)                        # (N, K, 3, HW)
    bary = jnp.where(sel_valid_t[:, :, None, :], bary, 0.0)
    bary = bary.reshape(N, 3 * K, HW)                             # row = 3k + j

    def edge_dist(ax, ay, bx, by):
        ex, ey = bx - ax, by - ay
        num = jnp.abs(ex * (pyk - ay) - ey * (pxk - ax))
        den = jnp.sqrt(ex * ex + ey * ey) + 1e-12
        return num / den

    min_d = jnp.minimum(jnp.minimum(edge_dist(sx1, sy1, sx2, sy2),
                                    edge_dist(sx2, sy2, sx0, sy0)),
                        edge_dist(sx0, sy0, sx1, sy1))
    dists = jnp.where(sel_valid_t, -(min_d * min_d), 1.0)         # masked anyway
    return pix_to_face, bary, zbuf, dists        # (N,K,HW),(N,3K,HW),(N,K,HW),(N,K,HW)


# ----------------------------------------------------------------------------
# NeuralMeshModel.forward equivalent
# ----------------------------------------------------------------------------
def neural_mesh_model_forward(verts, faces, features, R, T, *, H, W, K,
                              tile=512, face_chunk=512):
    # NOTE: pytorch3d uses packed vertex/face indices; features[faces % V]
    # maps them back to the shared (V, D) feature buffer, so sharing local
    # face indices across the batch is semantically identical.
    N = verts.shape[0]
    V, D = features.shape
    Fc = faces.shape[0]
    HW = H * W

    # Lane-aligned pixel tile; keep >= 2 parallel grid steps (both v7x TCs
    # busy) even at batch 1.  tile=512 is VMEM-safe on v7x; v5e/v6e can go 1024.
    tile = max(128, (tile // 128) * 128)
    while N * (-(-HW // tile)) < 2 and tile > 128:
        tile = max(128, (tile // 2) // 128 * 128)
    HWpad = -(-HW // tile) * tile

    # Lane-aligned face chunks so in-kernel feature-table slices stay aligned.
    face_chunk = max(128, (face_chunk // 128) * 128)
    FCHUNK = min(face_chunk, -(-Fc // 128) * 128)
    Fp = -(-Fc // FCHUNK) * FCHUNK

    p2f, bary, zbuf, dists = simple_rasterize(verts, faces, R, T, H, W, K)

    # Pack per-pixel fragments channel-major (already lane-dense): (N, 6K, HWpad)
    frag = jnp.concatenate([p2f.astype(jnp.float32),               # exact in f32
                            zbuf, dists, bary], axis=1)            # (N, 6K, HW)
    frag = jnp.pad(frag, ((0, 0), (0, 0), (0, HWpad - HW)), constant_values=-1.0)

    # Per-face per-vertex features laid out (row = j*D + d, col = face), bf16
    # for the MXU (accumulation stays f32 inside the kernel).
    ffeat = jnp.transpose(features[faces], (1, 2, 0)).reshape(3 * D, Fc)
    ffeat = jnp.pad(ffeat, ((0, 0), (0, Fp - Fc))).astype(jnp.bfloat16)

    out = blend_pallas(frag, ffeat, K=K, D=D, tile=tile, fchunk=FCHUNK)
    out = out[:, :, :HW].reshape(N, D + 1, H, W)                   # already NCHW
    projected_map = out[:, :D]                                     # L2-normalized
    mask = out[:, D:D + 1]

    # TODO(synk): pytorch3d get_visibility source not provided; approximate as
    # "vertex belongs to at least one rasterized face" (plain JAX scatter glue).
    p2f_nb = p2f.reshape(N, -1)
    valid = p2f_nb >= 0
    safe = jnp.where(valid, p2f_nb, 0)
    face_vis = jnp.zeros((N, Fc), jnp.float32).at[
        jnp.arange(N)[:, None], safe].max(valid.astype(jnp.float32))
    vert_vis = jnp.zeros((N, V), jnp.float32).at[
        jnp.arange(N)[:, None, None],
        jnp.broadcast_to(faces[None], (N, Fc, 3))].max(
        jnp.broadcast_to(face_vis[:, :, None], (N, Fc, 3)))

    return {
        'mask': mask,                                              # (N, 1, H, W)
        'vert_visibility': vert_vis.reshape(N * V),                # (N*V,)
        'pixel_orient_weights': jnp.ones((N, 1, 56, 56), jnp.float32),
        'projected_map': projected_map,                            # (N, D, H, W)
    }


if __name__ == "__main__":
    key = jax.random.PRNGKey(0)
    N, H, W, K, D = 2, 16, 16, 4, 8
    G = 12  # 12x12 vertex grid -> V=144, Fc=242 (exercises 2 face chunks)

    k1, k2, k3 = jax.random.split(key, 3)
    gx, gy = jnp.meshgrid(jnp.linspace(-0.6, 0.6, G),
                          jnp.linspace(-0.6, 0.6, G), indexing='xy')
    zj = 0.05 * jax.random.normal(k1, (G, G))
    base_verts = jnp.stack([gx, gy, zj], axis=-1).reshape(-1, 3).astype(jnp.float32)
    V = base_verts.shape[0]
    verts = (jnp.broadcast_to(base_verts, (N, V, 3))
             + 0.02 * jax.random.normal(k2, (N, V, 3))).astype(jnp.float32)

    faces = []
    for i in range(G - 1):
        for j in range(G - 1):
            v00 = i * G + j
            v01 = i * G + j + 1
            v10 = (i + 1) * G + j
            v11 = (i + 1) * G + j + 1
            faces.append([v00, v10, v11])
            faces.append([v00, v11, v01])
    faces = jnp.array(faces, dtype=jnp.int32)                      # (242, 3)

    # deterministic per-vertex feature buffer (the module's registered buffer)
    features = jax.random.normal(k3, (V, D), jnp.float32)

    # camera: identity rotation, translated 2.5 along +z
    R = jnp.broadcast_to(jnp.eye(3, dtype=jnp.float32), (N, 3, 3))
    T = jnp.broadcast_to(jnp.array([0.0, 0.0, 2.5], jnp.float32), (N, 3))

    fwd = jax.jit(functools.partial(neural_mesh_model_forward,
                                    H=H, W=W, K=K, tile=512, face_chunk=128))
    ret = fwd(verts, faces, features, R, T)
    jax.block_until_ready(ret)
    print("KERNEL_OK")
</pallas_src>

<mosaic_0001>
module attributes {stable_mosaic.version = 11 : i64} {
  func.func private @main(%arg0: i32) attributes {dimension_semantics = [#tpu.dimension_semantics<core_parallel>], iteration_bounds = array<i64: 2>, tpu.core_type = #tpu.core_type<sc_scalar_subcore>, window_params = []} {
    return
  }
}

module attributes {stable_mosaic.version = 11 : i64} {
  func.func private @main(%arg0: i32) attributes {dimension_semantics = [#tpu.dimension_semantics<core_parallel>], iteration_bounds = array<i64: 2>, tpu.core_type = #tpu.core_type<sc_scalar_subcore>, window_params = []} {
    return
  }
}

module attributes {stable_mosaic.version = 11 : i64} {
  func.func @_blend_kernel(%arg0: i32, %arg1: i32, %arg2: memref<1x24x512xf32, #tpu.memory_space<vmem>>, %arg3: memref<24x256xbf16, #tpu.memory_space<vmem>>, %arg4: memref<1x9x512xf32, #tpu.memory_space<vmem>>) attributes {dimension_semantics = [#tpu.dimension_semantics<parallel>, #tpu.dimension_semantics<parallel>], iteration_bounds = array<i64: 2, 1>, scalar_prefetch = 0 : i64, scratch_operands = 0 : i64, tpu.core_type = #tpu.core_type<tc>, window_params = [{transform_indices = @transform_0, window_bounds = array<i64: 1, 24, 512>}, {pipeline_mode = #tpu.pipeline_mode<synchronous>, transform_indices = @transform_1, window_bounds = array<i64: 24, 256>}, {transform_indices = @transform_2, window_bounds = array<i64: 1, 9, 512>}]} {
    %c0 = arith.constant 0 : index
    %c0_0 = arith.constant 0 : index
    %c0_1 = arith.constant 0 : index
    %0 = vector.load %arg2[%c0, %c0_0, %c0_1] : memref<1x24x512xf32, #tpu.memory_space<vmem>>, vector<1x24x512xf32>
    %1 = vector.shape_cast %0 : vector<1x24x512xf32> to vector<24x512xf32>
    %2 = vector.extract_strided_slice %1 {offsets = [0, 0], sizes = [4, 512], strides = [1, 1]} : vector<24x512xf32> to vector<4x512xf32>
    %3 = vector.extract_strided_slice %1 {offsets = [4, 0], sizes = [4, 512], strides = [1, 1]} : vector<24x512xf32> to vector<4x512xf32>
    %4 = vector.extract_strided_slice %1 {offsets = [8, 0], sizes = [4, 512], strides = [1, 1]} : vector<24x512xf32> to vector<4x512xf32>
    %5 = vector.extract_strided_slice %1 {offsets = [12, 0], sizes = [12, 512], strides = [1, 1]} : vector<24x512xf32> to vector<12x512xf32>
    %cst = arith.constant 0.000000e+00 : f32
    %6 = vector.broadcast %cst : f32 to vector<4x512xf32>
    %7 = arith.cmpf oge, %2, %6 : vector<4x512xf32>
    %8 = arith.extui %7 : vector<4x512xi1> to vector<4x512xi32>
    %9 = arith.sitofp %8 : vector<4x512xi32> to vector<4x512xf32>
    %cst_2 = arith.constant -9.999000e+03 : f32
    %10 = vector.broadcast %cst_2 : f32 to vector<4x512xf32>
    %11 = arith.mulf %4, %10 : vector<4x512xf32>
    %12 = arith.negf %11 : vector<4x512xf32>
    %13 = math.exp %12 : vector<4x512xf32>
    %cst_3 = arith.constant 1.000000e+00 : f32
    %14 = vector.broadcast %cst_3 : f32 to vector<4x512xf32>
    %15 = arith.addf %14, %13 : vector<4x512xf32>
    %16 = arith.divf %14, %15 : vector<4x512xf32>
    %17 = arith.mulf %16, %9 : vector<4x512xf32>
    %cst_4 = arith.constant 1.000000e+02 : f32
    %18 = vector.broadcast %cst_4 : f32 to vector<4x512xf32>
    %19 = arith.subf %18, %3 : vector<4x512xf32>
    %cst_5 = arith.constant 0.0101010101 : f32
    %20 = vector.broadcast %cst_5 : f32 to vector<4x512xf32>
    %21 = arith.mulf %19, %20 : vector<4x512xf32>
    %22 = arith.mulf %21, %9 : vector<4x512xf32>
    %cst_6 = arith.constant dense<0xFF800000> : vector<512xf32>
    %23 = vector.multi_reduction <maximumf>, %22, %cst_6 [0] : vector<4x512xf32> to vector<512xf32>
    %24 = vector.shape_cast %23 : vector<512xf32> to vector<1x512xf32>
    %cst_7 = arith.constant 1.000000e-10 : f32
    %25 = vector.broadcast %cst_7 : f32 to vector<1x512xf32>
    %26 = arith.maximumf %24, %25 : vector<1x512xf32>
    %27 = vector.broadcast %26 : vector<1x512xf32> to vector<4x512xf32>
    %28 = arith.subf %22, %27 : vector<4x512xf32>
    %cst_8 = arith.constant 1.000000e+04 : f32
    %29 = vector.broadcast %cst_8 : f32 to vector<4x512xf32>
    %30 = arith.mulf %28, %29 : vector<4x512xf32>
    %31 = math.exp %30 : vector<4x512xf32>
    %32 = arith.mulf %17, %31 : vector<4x512xf32>
    %cst_9 = arith.constant 1.000000e-10 : f32
    %33 = vector.broadcast %cst_9 : f32 to vector<1x512xf32>
    %34 = arith.subf %33, %26 : vector<1x512xf32>
    %cst_10 = arith.constant 1.000000e+04 : f32
    %35 = vector.broadcast %cst_10 : f32 to vector<1x512xf32>
    %36 = arith.mulf %34, %35 : vector<1x512xf32>
    %37 = math.exp %36 : vector<1x512xf32>
    %cst_11 = arith.constant 1.000000e-10 : f32
    %38 = vector.broadcast %cst_11 : f32 to vector<1x512xf32>
    %39 = arith.maximumf %37, %38 : vector<1x512xf32>
    %cst_12 = arith.constant dense<0.000000e+00> : vector<512xf32>
    %40 = vector.multi_reduction <add>, %32, %cst_12 [0] : vector<4x512xf32> to vector<512xf32>
    %41 = vector.shape_cast %40 : vector<512xf32> to vector<1x512xf32>
    %42 = arith.addf %41, %39 : vector<1x512xf32>
    %43 = arith.divf %41, %42 : vector<1x512xf32>
    %44 = tpu.reciprocal %42 {approx = true} : vector<1x512xf32> -> vector<1x512xf32>
    %45 = vector.broadcast %44 : vector<1x512xf32> to vector<4x512xf32>
    %46 = arith.mulf %32, %45 : vector<4x512xf32>
    %47 = vector.extract_strided_slice %46 {offsets = [0, 0], sizes = [1, 512], strides = [1, 1]} : vector<4x512xf32> to vector<1x512xf32>
    %48 = vector.extract_strided_slice %5 {offsets = [0, 0], sizes = [1, 512], strides = [1, 1]} : vector<12x512xf32> to vector<1x512xf32>
    %49 = arith.mulf %47, %48 : vector<1x512xf32>
    %50 = vector.extract_strided_slice %46 {offsets = [0, 0], sizes = [1, 512], strides = [1, 1]} : vector<4x512xf32> to vector<1x512xf32>
    %51 = vector.extract_strided_slice %5 {offsets = [1, 0], sizes = [1, 512], strides = [1, 1]} : vector<12x512xf32> to vector<1x512xf32>
    %52 = arith.mulf %50, %51 : vector<1x512xf32>
    %53 = vector.extract_strided_slice %46 {offsets = [0, 0], sizes = [1, 512], strides = [1, 1]} : vector<4x512xf32> to vector<1x512xf32>
    %54 = vector.extract_strided_slice %5 {offsets = [2, 0], sizes = [1, 512], strides = [1, 1]} : vector<12x512xf32> to vector<1x512xf32>
    %55 = arith.mulf %53, %54 : vector<1x512xf32>
    %56 = vector.extract_strided_slice %46 {offsets = [1, 0], sizes = [1, 512], strides = [1, 1]} : vector<4x512xf32> to vector<1x512xf32>
    %57 = vector.extract_strided_slice %5 {offsets = [3, 0], sizes = [1, 512], strides = [1, 1]} : vector<12x512xf32> to vector<1x512xf32>
    %58 = arith.mulf %56, %57 : vector<1x512xf32>
    %59 = vector.extract_strided_slice %46 {offsets = [1, 0], sizes = [1, 512], strides = [1, 1]} : vector<4x512xf32> to vector<1x512xf32>
    %60 = vector.extract_strided_slice %5 {offsets = [4, 0], sizes = [1, 512], strides = [1, 1]} : vector<12x512xf32> to vector<1x512xf32>
    %61 = arith.mulf %59, %60 : vector<1x512xf32>
    %62 = vector.extract_strided_slice %46 {offsets = [1, 0], sizes = [1, 512], strides = [1, 1]} : vector<4x512xf32> to vector<1x512xf32>
    %63 = vector.extract_strided_slice %5 {offsets = [5, 0], sizes = [1, 512], strides = [1, 1]} : vector<12x512xf32> to vector<1x512xf32>
    %64 = arith.mulf %62, %63 : vector<1x512xf32>
    %65 = vector.extract_strided_slice %46 {offsets = [2, 0], sizes = [1, 512], strides = [1, 1]} : vector<4x512xf32> to vector<1x512xf32>
    %66 = vector.extract_strided_slice %5 {offsets = [6, 0], sizes = [1, 512], strides = [1, 1]} : vector<12x512xf32> to vector<1x512xf32>
    %67 = arith.mulf %65, %66 : vector<1x512xf32>
    %68 = vector.extract_strided_slice %46 {offsets = [2, 0], sizes = [1, 512], strides = [1, 1]} : vector<4x512xf32> to vector<1x512xf32>
    %69 = vector.extract_strided_slice %5 {offsets = [7, 0], sizes = [1, 512], strides = [1, 1]} : vector<12x512xf32> to vector<1x512xf32>
    %70 = arith.mulf %68, %69 : vector<1x512xf32>
    %71 = vector.extract_strided_slice %46 {offsets = [2, 0], sizes = [1, 512], strides = [1, 1]} : vector<4x512xf32> to vector<1x512xf32>
    %72 = vector.extract_strided_slice %5 {offsets = [8, 0], sizes = [1, 512], strides = [1, 1]} : vector<12x512xf32> to vector<1x512xf32>
    %73 = arith.mulf %71, %72 : vector<1x512xf32>
    %74 = vector.extract_strided_slice %46 {offsets = [3, 0], sizes = [1, 512], strides = [1, 1]} : vector<4x512xf32> to vector<1x512xf32>
    %75 = vector.extract_strided_slice %5 {offsets = [9, 0], sizes = [1, 512], strides = [1, 1]} : vector<12x512xf32> to vector<1x512xf32>
    %76 = arith.mulf %74, %75 : vector<1x512xf32>
    %77 = vector.extract_strided_slice %46 {offsets = [3, 0], sizes = [1, 512], strides = [1, 1]} : vector<4x512xf32> to vector<1x512xf32>
    %78 = vector.extract_strided_slice %5 {offsets = [10, 0], sizes = [1, 512], strides = [1, 1]} : vector<12x512xf32> to vector<1x512xf32>
    %79 = arith.mulf %77, %78 : vector<1x512xf32>
    %80 = vector.extract_strided_slice %46 {offsets = [3, 0], sizes = [1, 512], strides = [1, 1]} : vector<4x512xf32> to vector<1x512xf32>
    %81 = vector.extract_strided_slice %5 {offsets = [11, 0], sizes = [1, 512], strides = [1, 1]} : vector<12x512xf32> to vector<1x512xf32>
    %82 = arith.mulf %80, %81 : vector<1x512xf32>
    %83 = arith.fptosi %2 : vector<4x512xf32> to vector<4x512xi32>
    %cst_13 = arith.constant 0.000000e+00 : f32
    %84 = vector.broadcast %cst_13 : f32 to vector<8x512xf32>
    %85 = tpu.iota {dimensions = array<i32: 0>} : vector<128x512xi32>
    %c0_i32 = arith.constant 0 : i32
    %86 = vector.broadcast %c0_i32 : i32 to vector<128x512xi32>
    %87 = arith.addi %85, %86 : vector<128x512xi32>
    %c0_14 = arith.constant 0 : index
    %c0_15 = arith.constant 0 : index
    %88 = vector.load %arg3[%c0_14, %c0_15] : memref<24x256xbf16, #tpu.memory_space<vmem>>, vector<24x128xbf16>
    %89 = vector.extract_strided_slice %83 {offsets = [0, 0], sizes = [1, 512], strides = [1, 1]} : vector<4x512xi32> to vector<1x512xi32>
    %90 = vector.broadcast %89 : vector<1x512xi32> to vector<128x512xi32>
    %91 = arith.cmpi eq, %87, %90 : vector<128x512xi32>
    %92 = arith.extui %91 : vector<128x512xi1> to vector<128x512xi32>
    %93 = arith.sitofp %92 : vector<128x512xi32> to vector<128x512xf32>
    %94 = arith.truncf %93 : vector<128x512xf32> to vector<128x512xbf16>
    %cst_16 = arith.constant dense<0.000000e+00> : vector<24x512xf32>
    %95 = tpu.matmul %88, %94, %cst_16 {dimension_numbers = #tpu.dot_dimension_numbers<[1], [0], [0], [1], [0, 0, 1, 1], [], []>} : vector<24x128xbf16>, vector<128x512xbf16>, vector<24x512xf32> -> vector<24x512xf32>
    %96 = vector.extract_strided_slice %95 {offsets = [0, 0], sizes = [8, 512], strides = [1, 1]} : vector<24x512xf32> to vector<8x512xf32>
    %97 = vector.broadcast %49 : vector<1x512xf32> to vector<8x512xf32>
    %98 = arith.mulf %97, %96 : vector<8x512xf32>
    %99 = arith.addf %84, %98 : vector<8x512xf32>
    %100 = vector.extract_strided_slice %95 {offsets = [8, 0], sizes = [8, 512], strides = [1, 1]} : vector<24x512xf32> to vector<8x512xf32>
    %101 = vector.broadcast %52 : vector<1x512xf32> to vector<8x512xf32>
    %102 = arith.mulf %101, %100 : vector<8x512xf32>
    %103 = arith.addf %99, %102 : vector<8x512xf32>
    %104 = vector.extract_strided_slice %95 {offsets = [16, 0], sizes = [8, 512], strides = [1, 1]} : vector<24x512xf32> to vector<8x512xf32>
    %105 = vector.broadcast %55 : vector<1x512xf32> to vector<8x512xf32>
    %106 = arith.mulf %105, %104 : vector<8x512xf32>
    %107 = arith.addf %103, %106 : vector<8x512xf32>
    %108 = vector.extract_strided_slice %83 {offsets = [1, 0], sizes = [1, 512], strides = [1, 1]} : vector<4x512xi32> to vector<1x512xi32>
    %109 = vector.broadcast %108 : vector<1x512xi32> to vector<128x512xi32>
    %110 = arith.cmpi eq, %87, %109 : vector<128x512xi32>
    %111 = arith.extui %110 : vector<128x512xi1> to vector<128x512xi32>
    %112 = arith.sitofp %111 : vector<128x512xi32> to vector<128x512xf32>
    %113 = arith.truncf %112 : vector<128x512xf32> to vector<128x512xbf16>
    %cst_17 = arith.constant dense<0.000000e+00> : vector<24x512xf32>
    %114 = tpu.matmul %88, %113, %cst_17 {dimension_numbers = #tpu.dot_dimension_numbers<[1], [0], [0], [1], [0, 0, 1, 1], [], []>} : vector<24x128xbf16>, vector<128x512xbf16>, vector<24x512xf32> -> vector<24x512xf32>
    %115 = vector.extract_strided_slice %114 {offsets = [0, 0], sizes = [8, 512], strides = [1, 1]} : vector<24x512xf32> to vector<8x512xf32>
    %116 = vector.broadcast %58 : vector<1x512xf32> to vector<8x512xf32>
    %117 = arith.mulf %116, %115 : vector<8x512xf32>
    %118 = arith.addf %107, %117 : vector<8x512xf32>
    %119 = vector.extract_strided_slice %114 {offsets = [8, 0], sizes = [8, 512], strides = [1, 1]} : vector<24x512xf32> to vector<8x512xf32>
    %120 = vector.broadcast %61 : vector<1x512xf32> to vector<8x512xf32>
    %121 = arith.mulf %120, %119 : vector<8x512xf32>
    %122 = arith.addf %118, %121 : vector<8x512xf32>
    %123 = vector.extract_strided_slice %114 {offsets = [16, 0], sizes = [8, 512], strides = [1, 1]} : vector<24x512xf32> to vector<8x512xf32>
    %124 = vector.broadcast %64 : vector<1x512xf32> to vector<8x512xf32>
    %125 = arith.mulf %124, %123 : vector<8x512xf32>
    %126 = arith.addf %122, %125 : vector<8x512xf32>
    %127 = vector.extract_strided_slice %83 {offsets = [2, 0], sizes = [1, 512], strides = [1, 1]} : vector<4x512xi32> to vector<1x512xi32>
    %128 = vector.broadcast %127 : vector<1x512xi32> to vector<128x512xi32>
    %129 = arith.cmpi eq, %87, %128 : vector<128x512xi32>
    %130 = arith.extui %129 : vector<128x512xi1> to vector<128x512xi32>
    %131 = arith.sitofp %130 : vector<128x512xi32> to vector<128x512xf32>
    %132 = arith.truncf %131 : vector<128x512xf32> to vector<128x512xbf16>
    %cst_18 = arith.constant dense<0.000000e+00> : vector<24x512xf32>
    %133 = tpu.matmul %88, %132, %cst_18 {dimension_numbers = #tpu.dot_dimension_numbers<[1], [0], [0], [1], [0, 0, 1, 1], [], []>} : vector<24x128xbf16>, vector<128x512xbf16>, vector<24x512xf32> -> vector<24x512xf32>
    %134 = vector.extract_strided_slice %133 {offsets = [0, 0], sizes = [8, 512], strides = [1, 1]} : vector<24x512xf32> to vector<8x512xf32>
    %135 = vector.broadcast %67 : vector<1x512xf32> to vector<8x512xf32>
    %136 = arith.mulf %135, %134 : vector<8x512xf32>
    %137 = arith.addf %126, %136 : vector<8x512xf32>
    %138 = vector.extract_strided_slice %133 {offsets = [8, 0], sizes = [8, 512], strides = [1, 1]} : vector<24x512xf32> to vector<8x512xf32>
    %139 = vector.broadcast %70 : vector<1x512xf32> to vector<8x512xf32>
    %140 = arith.mulf %139, %138 : vector<8x512xf32>
    %141 = arith.addf %137, %140 : vector<8x512xf32>
    %142 = vector.extract_strided_slice %133 {offsets = [16, 0], sizes = [8, 512], strides = [1, 1]} : vector<24x512xf32> to vector<8x512xf32>
    %143 = vector.broadcast %73 : vector<1x512xf32> to vector<8x512xf32>
    %144 = arith.mulf %143, %142 : vector<8x512xf32>
    %145 = arith.addf %141, %144 : vector<8x512xf32>
    %146 = vector.extract_strided_slice %83 {offsets = [3, 0], sizes = [1, 512], strides = [1, 1]} : vector<4x512xi32> to vector<1x512xi32>
    %147 = vector.broadcast %146 : vector<1x512xi32> to vector<128x512xi32>
    %148 = arith.cmpi eq, %87, %147 : vector<128x512xi32>
    %149 = arith.extui %148 : vector<128x512xi1> to vector<128x512xi32>
    %150 = arith.sitofp %149 : vector<128x512xi32> to vector<128x512xf32>
    %151 = arith.truncf %150 : vector<128x512xf32> to vector<128x512xbf16>
    %cst_19 = arith.constant dense<0.000000e+00> : vector<24x512xf32>
    %152 = tpu.matmul %88, %151, %cst_19 {dimension_numbers = #tpu.dot_dimension_numbers<[1], [0], [0], [1], [0, 0, 1, 1], [], []>} : vector<24x128xbf16>, vector<128x512xbf16>, vector<24x512xf32> -> vector<24x512xf32>
    %153 = vector.extract_strided_slice %152 {offsets = [0, 0], sizes = [8, 512], strides = [1, 1]} : vector<24x512xf32> to vector<8x512xf32>
    %154 = vector.broadcast %76 : vector<1x512xf32> to vector<8x512xf32>
    %155 = arith.mulf %154, %153 : vector<8x512xf32>
    %156 = arith.addf %145, %155 : vector<8x512xf32>
    %157 = vector.extract_strided_slice %152 {offsets = [8, 0], sizes = [8, 512], strides = [1, 1]} : vector<24x512xf32> to vector<8x512xf32>
    %158 = vector.broadcast %79 : vector<1x512xf32> to vector<8x512xf32>
    %159 = arith.mulf %158, %157 : vector<8x512xf32>
    %160 = arith.addf %156, %159 : vector<8x512xf32>
    %161 = vector.extract_strided_slice %152 {offsets = [16, 0], sizes = [8, 512], strides = [1, 1]} : vector<24x512xf32> to vector<8x512xf32>
    %162 = vector.broadcast %82 : vector<1x512xf32> to vector<8x512xf32>
    %163 = arith.mulf %162, %161 : vector<8x512xf32>
    %164 = arith.addf %160, %163 : vector<8x512xf32>
    %165 = tpu.iota {dimensions = array<i32: 0>} : vector<128x512xi32>
    %c128_i32 = arith.constant 128 : i32
    %166 = vector.broadcast %c128_i32 : i32 to vector<128x512xi32>
    %167 = arith.addi %165, %166 : vector<128x512xi32>
    %c0_20 = arith.constant 0 : index
    %c128 = arith.constant 128 : index
    %168 = vector.load %arg3[%c0_20, %c128] : memref<24x256xbf16, #tpu.memory_space<vmem>>, vector<24x128xbf16>
    %169 = vector.extract_strided_slice %83 {offsets = [0, 0], sizes = [1, 512], strides = [1, 1]} : vector<4x512xi32> to vector<1x512xi32>
    %170 = vector.broadcast %169 : vector<1x512xi32> to vector<128x512xi32>
    %171 = arith.cmpi eq, %167, %170 : vector<128x512xi32>
    %172 = arith.extui %171 : vector<128x512xi1> to vector<128x512xi32>
    %173 = arith.sitofp %172 : vector<128x512xi32> to vector<128x512xf32>
    %174 = arith.truncf %173 : vector<128x512xf32> to vector<128x512xbf16>
    %cst_21 = arith.constant dense<0.000000e+00> : vector<24x512xf32>
    %175 = tpu.matmul %168, %174, %cst_21 {dimension_numbers = #tpu.dot_dimension_numbers<[1], [0], [0], [1], [0, 0, 1, 1], [], []>} : vector<24x128xbf16>, vector<128x512xbf16>, vector<24x512xf32> -> vector<24x512xf32>
    %176 = vector.extract_strided_slice %175 {offsets = [0, 0], sizes = [8, 512], strides = [1, 1]} : vector<24x512xf32> to vector<8x512xf32>
    %177 = vector.broadcast %49 : vector<1x512xf32> to vector<8x512xf32>
    %178 = arith.mulf %177, %176 : vector<8x512xf32>
    %179 = arith.addf %164, %178 : vector<8x512xf32>
    %180 = vector.extract_strided_slice %175 {offsets = [8, 0], sizes = [8, 512], strides = [1, 1]} : vector<24x512xf32> to vector<8x512xf32>
    %181 = vector.broadcast %52 : vector<1x512xf32> to vector<8x512xf32>
    %182 = arith.mulf %181, %180 : vector<8x512xf32>
    %183 = arith.addf %179, %182 : vector<8x512xf32>
    %184 = vector.extract_strided_slice %175 {offsets = [16, 0], sizes = [8, 512], strides = [1, 1]} : vector<24x512xf32> to vector<8x512xf32>
    %185 = vector.broadcast %55 : vector<1x512xf32> to vector<8x512xf32>
    %186 = arith.mulf %185, %184 : vector<8x512xf32>
    %187 = arith.addf %183, %186 : vector<8x512xf32>
    %188 = vector.extract_strided_slice %83 {offsets = [1, 0], sizes = [1, 512], strides = [1, 1]} : vector<4x512xi32> to vector<1x512xi32>
    %189 = vector.broadcast %188 : vector<1x512xi32> to vector<128x512xi32>
    %190 = arith.cmpi eq, %167, %189 : vector<128x512xi32>
    %191 = arith.extui %190 : vector<128x512xi1> to vector<128x512xi32>
    %192 = arith.sitofp %191 : vector<128x512xi32> to vector<128x512xf32>
    %193 = arith.truncf %192 : vector<128x512xf32> to vector<128x512xbf16>
    %cst_22 = arith.constant dense<0.000000e+00> : vector<24x512xf32>
    %194 = tpu.matmul %168, %193, %cst_22 {dimension_numbers = #tpu.dot_dimension_numbers<[1], [0], [0], [1], [0, 0, 1, 1], [], []>} : vector<24x128xbf16>, vector<128x512xbf16>, vector<24x512xf32> -> vector<24x512xf32>
    %195 = vector.extract_strided_slice %194 {offsets = [0, 0], sizes = [8, 512], strides = [1, 1]} : vector<24x512xf32> to vector<8x512xf32>
    %196 = vector.broadcast %58 : vector<1x512xf32> to vector<8x512xf32>
    %197 = arith.mulf %196, %195 : vector<8x512xf32>
    %198 = arith.addf %187, %197 : vector<8x512xf32>
    %199 = vector.extract_strided_slice %194 {offsets = [8, 0], sizes = [8, 512], strides = [1, 1]} : vector<24x512xf32> to vector<8x512xf32>
    %200 = vector.broadcast %61 : vector<1x512xf32> to vector<8x512xf32>
    %201 = arith.mulf %200, %199 : vector<8x512xf32>
    %202 = arith.addf %198, %201 : vector<8x512xf32>
    %203 = vector.extract_strided_slice %194 {offsets = [16, 0], sizes = [8, 512], strides = [1, 1]} : vector<24x512xf32> to vector<8x512xf32>
    %204 = vector.broadcast %64 : vector<1x512xf32> to vector<8x512xf32>
    %205 = arith.mulf %204, %203 : vector<8x512xf32>
    %206 = arith.addf %202, %205 : vector<8x512xf32>
    %207 = vector.extract_strided_slice %83 {offsets = [2, 0], sizes = [1, 512], strides = [1, 1]} : vector<4x512xi32> to vector<1x512xi32>
    %208 = vector.broadcast %207 : vector<1x512xi32> to vector<128x512xi32>
    %209 = arith.cmpi eq, %167, %208 : vector<128x512xi32>
    %210 = arith.extui %209 : vector<128x512xi1> to vector<128x512xi32>
    %211 = arith.sitofp %210 : vector<128x512xi32> to vector<128x512xf32>
    %212 = arith.truncf %211 : vector<128x512xf32> to vector<128x512xbf16>
    %cst_23 = arith.constant dense<0.000000e+00> : vector<24x512xf32>
    %213 = tpu.matmul %168, %212, %cst_23 {dimension_numbers = #tpu.dot_dimension_numbers<[1], [0], [0], [1], [0, 0, 1, 1], [], []>} : vector<24x128xbf16>, vector<128x512xbf16>, vector<24x512xf32> -> vector<24x512xf32>
    %214 = vector.extract_strided_slice %213 {offsets = [0, 0], sizes = [8, 512], strides = [1, 1]} : vector<24x512xf32> to vector<8x512xf32>
    %215 = vector.broadcast %67 : vector<1x512xf32> to vector<8x512xf32>
    %216 = arith.mulf %215, %214 : vector<8x512xf32>
    %217 = arith.addf %206, %216 : vector<8x512xf32>
    %218 = vector.extract_strided_slice %213 {offsets = [8, 0], sizes = [8, 512], strides = [1, 1]} : vector<24x512xf32> to vector<8x512xf32>
    %219 = vector.broadcast %70 : vector<1x512xf32> to vector<8x512xf32>
    %220 = arith.mulf %219, %218 : vector<8x512xf32>
    %221 = arith.addf %217, %220 : vector<8x512xf32>
    %222 = vector.extract_strided_slice %213 {offsets = [16, 0], sizes = [8, 512], strides = [1, 1]} : vector<24x512xf32> to vector<8x512xf32>
    %223 = vector.broadcast %73 : vector<1x512xf32> to vector<8x512xf32>
    %224 = arith.mulf %223, %222 : vector<8x512xf32>
    %225 = arith.addf %221, %224 : vector<8x512xf32>
    %226 = vector.extract_strided_slice %83 {offsets = [3, 0], sizes = [1, 512], strides = [1, 1]} : vector<4x512xi32> to vector<1x512xi32>
    %227 = vector.broadcast %226 : vector<1x512xi32> to vector<128x512xi32>
    %228 = arith.cmpi eq, %167, %227 : vector<128x512xi32>
    %229 = arith.extui %228 : vector<128x512xi1> to vector<128x512xi32>
    %230 = arith.sitofp %229 : vector<128x512xi32> to vector<128x512xf32>
    %231 = arith.truncf %230 : vector<128x512xf32> to vector<128x512xbf16>
    %cst_24 = arith.constant dense<0.000000e+00> : vector<24x512xf32>
    %232 = tpu.matmul %168, %231, %cst_24 {dimension_numbers = #tpu.dot_dimension_numbers<[1], [0], [0], [1], [0, 0, 1, 1], [], []>} : vector<24x128xbf16>, vector<128x512xbf16>, vector<24x512xf32> -> vector<24x512xf32>
    %233 = vector.extract_strided_slice %232 {offsets = [0, 0], sizes = [8, 512], strides = [1, 1]} : vector<24x512xf32> to vector<8x512xf32>
    %234 = vector.broadcast %76 : vector<1x512xf32> to vector<8x512xf32>
    %235 = arith.mulf %234, %233 : vector<8x512xf32>
    %236 = arith.addf %225, %235 : vector<8x512xf32>
    %237 = vector.extract_strided_slice %232 {offsets = [8, 0], sizes = [8, 512], strides = [1, 1]} : vector<24x512xf32> to vector<8x512xf32>
    %238 = vector.broadcast %79 : vector<1x512xf32> to vector<8x512xf32>
    %239 = arith.mulf %238, %237 : vector<8x512xf32>
    %240 = arith.addf %236, %239 : vector<8x512xf32>
    %241 = vector.extract_strided_slice %232 {offsets = [16, 0], sizes = [8, 512], strides = [1, 1]} : vector<24x512xf32> to vector<8x512xf32>
    %242 = vector.broadcast %82 : vector<1x512xf32> to vector<8x512xf32>
    %243 = arith.mulf %242, %241 : vector<8x512xf32>
    %244 = arith.addf %240, %243 : vector<8x512xf32>
    %cst_25 = arith.constant 9.99999993E-9 : f32
    %245 = vector.broadcast %cst_25 : f32 to vector<8x512xf32>
    %246 = arith.addf %244, %245 : vector<8x512xf32>
    %247 = arith.mulf %246, %246 : vector<8x512xf32>
    %cst_26 = arith.constant dense<0.000000e+00> : vector<512xf32>
    %248 = vector.multi_reduction <add>, %247, %cst_26 [0] : vector<8x512xf32> to vector<512xf32>
    %249 = vector.shape_cast %248 : vector<512xf32> to vector<1x512xf32>
    %cst_27 = arith.constant 1.000000e-24 : f32
    %250 = vector.broadcast %cst_27 : f32 to vector<1x512xf32>
    %251 = arith.maximumf %249, %250 : vector<1x512xf32>
    %252 = math.rsqrt %251 : vector<1x512xf32>
    %253 = vector.broadcast %252 : vector<1x512xf32> to vector<8x512xf32>
    %254 = arith.mulf %246, %253 : vector<8x512xf32>
    %c0_28 = arith.constant 0 : index
    %c0_29 = arith.constant 0 : index
    %c0_30 = arith.constant 0 : index
    %255 = vector.load %arg4[%c0_28, %c0_29, %c0_30] : memref<1x9x512xf32, #tpu.memory_space<vmem>>, vector<1x8x512xf32>
    %256 = vector.shape_cast %255 : vector<1x8x512xf32> to vector<8x512xf32>
    %257 = vector.shape_cast %254 : vector<8x512xf32> to vector<1x8x512xf32>
    tpu.vector_store %arg4[%c0_28, %c0_29, %c0_30], %257 {strides = array<i32>} : memref<1x9x512xf32, #tpu.memory_space<vmem>>, vector<1x8x512xf32>,
    %c0_31 = arith.constant 0 : index
    %c8 = arith.constant 8 : index
    %c0_32 = arith.constant 0 : index
    %258 = vector.load %arg4[%c0_31, %c8, %c0_32] : memref<1x9x512xf32, #tpu.memory_space<vmem>>, vector<1x1x512xf32>
    %259 = vector.shape_cast %258 : vector<1x1x512xf32> to vector<1x512xf32>
    %260 = vector.shape_cast %43 : vector<1x512xf32> to vector<1x1x512xf32>
    tpu.vector_store %arg4[%c0_31, %c8, %c0_32], %260 {strides = array<i32>} : memref<1x9x512xf32, #tpu.memory_space<vmem>>, vector<1x1x512xf32>,
    return
  }
  func.func @transform_0(%arg0: i32, %arg1: i32) -> (i32, i32, i32) {
    %c0_i32 = arith.constant 0 : i32
    %c0_i32_0 = arith.constant 0 : i32
    return %arg0, %c0_i32, %arg1 : i32, i32, i32
  }
  func.func @transform_1(%arg0: i32, %arg1: i32) -> (i32, i32) {
    %c0_i32 = arith.constant 0 : i32
    %c0_i32_0 = arith.constant 0 : i32
    %c0_i32_1 = arith.constant 0 : i32
    return %c0_i32, %c0_i32_0 : i32, i32
  }
  func.func @transform_2(%arg0: i32, %arg1: i32) -> (i32, i32, i32) {
    %c0_i32 = arith.constant 0 : i32
    %c0_i32_0 = arith.constant 0 : i32
    return %arg0, %c0_i32, %arg1 : i32, i32, i32
  }
}

</mosaic_0001>

<llo_original>
// kernel: sub.146
$region0: #{sub.146}
  %s0 = inlined_call_operand.vmem [shape: f32[16,16], index: 0, kind: input, shape index: {}]
  %s1 = inlined_call_operand.vmem [shape: f32[256], index: 1, kind: output, shape index: {}]
  $region1: #{sub.146} parent=0
    #allocation0 [shape = 'u8[4096]{0}', space=vmem, size = 0x1000, scoped, tag = 'scoped mem for output reshape']
    %s2 = smov 3
    %v3 = vld [vmem:[%s0] ss:$8 sm:%s2]
    %vm4 = vcmask 130048
    %5 = vst.msk [vmem:[#allocation0] sm:$0x3] %vm4, %v3
    %s6 = scalar_lea.vmem %s0, 7
    %s7 = smov 3
    %v8 = vld [vmem:[%s6] ss:$8 sm:%s7]
    %9 = vrot.lane.b32.xlu0 %v8, 112
    %v10 = vpop.permute.xlu0 %9
    %vm11 = vcmask 1048448
    %12 = vst.msk [vmem:[#allocation0] sm:$0x3] %vm11, %v10
    %s13 = scalar_lea.vmem %s0, 6
    %s14 = smov 3
    %v15 = vld [vmem:[%s13] ss:$8 sm:%s14]
    %16 = vrot.lane.b32.xlu0 %v15, 96
    %v17 = vpop.permute.xlu0 %16
    %vm18 = vcmask 917248
    %19 = vst.msk [vmem:[#allocation0] sm:$0x3] %vm18, %v17
    %s20 = scalar_lea.vmem %s0, 5
    %s21 = smov 3
    %v22 = vld [vmem:[%s20] ss:$8 sm:%s21]
    %23 = vrot.lane.b32.xlu0 %v22, 80
    %v24 = vpop.permute.xlu0 %23
    %vm25 = vcmask 786048
    %26 = vst.msk [vmem:[#allocation0] sm:$0x3] %vm25, %v24
    %s27 = scalar_lea.vmem %s0, 4
    %s28 = smov 3
    %v29 = vld [vmem:[%s27] ss:$8 sm:%s28]
    %30 = vrot.lane.b32.xlu0 %v29, 64
    %v31 = vpop.permute.xlu0 %30
    %vm32 = vcmask 654848
    %33 = vst.msk [vmem:[#allocation0] sm:$0x3] %vm32, %v31
    %s34 = scalar_lea.vmem %s0, 3
    %s35 = smov 3
    %v36 = vld [vmem:[%s34] ss:$8 sm:%s35]
    %37 = vrot.lane.b32.xlu0 %v36, 48
    %v38 = vpop.permute.xlu0 %37
    %vm39 = vcmask 523648
    %40 = vst.msk [vmem:[#allocation0] sm:$0x3] %vm39, %v38
    %s41 = scalar_lea.vmem %s0, 2
    %s42 = smov 3
    %v43 = vld [vmem:[%s41] ss:$8 sm:%s42]
    %44 = vrot.lane.b32.xlu0 %v43, 32
    %v45 = vpop.permute.xlu0 %44
    %vm46 = vcmask 392448
    %47 = vst.msk [vmem:[#allocation0] sm:$0x3] %vm46, %v45
    %s48 = scalar_lea.vmem %s0, 1
    %s49 = smov 3
    %v50 = vld [vmem:[%s48] ss:$8 sm:%s49]
    %51 = vrot.lane.b32.xlu0 %v50, 16
    %v52 = vpop.permute.xlu0 %51
    %vm53 = vcmask 261248
    %54 = vst.msk [vmem:[#allocation0] sm:$0x3] %vm53, %v52
    %s56 = sshllo.u32 0, 2
    %v58 = vld [vmem:[#allocation0] sm:%s56]
    %s59 = sshllo.u32 0, 2
    %60 = vst [vmem:[%s1] sm:%s59] %v58

// kernel: neural_mesh_model_forward.1
$region0: #{neural_mesh_model_forward.1}
  #allocation0 [shape = 'u32[]', space=smem, size = 0x4, offset = 0x4, fixed_abs, tag = 'smem constant byte address 0x4 - core index']
  #allocation1 [shape = 'u32[144,128]{1,0:T(1,128)}', space=vmem, size = 0x12000, scoped, tag = 'internal scratch']
  %s0 = inlined_call_operand.vmem [shape: f32[2,24,512], index: 0, kind: input, shape index: {}]
  %s1 = inlined_call_operand.vmem [shape: bf16[24,256], index: 1, kind: input, shape index: {}]
  %s2 = inlined_call_operand.vmem [shape: f32[2,9,512], index: 2, kind: output, shape index: {}]
  %s3 = sld [smem:[#allocation0]]
  $region41: #{neural_mesh_model_forward.1} parent=0
    _
  %s5 = ssub.s32 1, %s3
  %s6 = scalar_select 0, %s5, %s3
  loop: start=0, step=1, limit=4
  $region2: #{neural_mesh_model_forward.1} parent=0 // loop_pre_header
    _
  $region3: #{neural_mesh_model_forward.1} parent=0 // loop_header
    %s8 = sphi 0, %s12
    %p9 = scmp.ge.s32.totalorder %s8, 4
    %s15 = sphi 0, %s27
    %s16 = sphi 0, %s23
    %s17 = sphi 0, %s15
    %s18 = sphi 0, %s16
    %s19 = sphi 0, %s17
    %s20 = sphi 0, %s18
    %s32 = sphi 0, %s34
    %s35 = sphi 0, %s32
    %s36 = sphi 0, %s35
    %s52 = sphi 0, %s36
    %s56 = sphi 0, %s56
    %s58 = sphi 0, %s56
    %s59 = sphi 0, %s58
    %s73 = sphi 0, %s59
    %s81 = sphi 0, %s83
    %s84 = sphi 0, %s81
    %s85 = sphi 0, %s84
    %s101 = sphi 0, %s85
  $region4: #{neural_mesh_model_forward.1} parent=0 // loop_header_branch
    %11 = sbr.rel (%p9) target = $region8
  $region5: #{neural_mesh_model_forward.1} parent=0 // loop_body
    %s13 = ssub.s32 %s8, 1
    %s14 = ssub.s32 %s8, 2
    %s21 = sadd.s32 1, %s16
    %p22 = scmp.ge.s32.totalorder %s21, 1
    %s23 = scalar_select %p22, 0, %s21
    %s24 = sadd.s32 1, %s15
    %s25 = scalar_select %p22, %s24, %s15
    %p26 = scmp.ge.s32.totalorder %s25, 2
    %s27 = scalar_select %p26, 0, %s25
    %s28 = ssub.s32 %s15, %s27
    %s29 = ssub.s32 %s16, %s23
    %s30 = sor.u32 %s28, %s29
    %p31 = scmp.eq.s32.totalorder %s30, 0
    %s33 = sadd.s32 %s32, 1
    %s34 = scalar_select %p31, %s32, %s33
    %p37 = pneg %p31
    %p38 = scmp.eq.s32.totalorder %s8, 1
    %p39 = por %p37, %p38
    %p40 = scmp.ne.s32.totalorder %s32, %s35
    %p41 = scmp.eq.s32.totalorder %s8, 0
    %p42 = por %p40, %p41
    %p43 = scmp.ne.s32.totalorder %s32, %s35
    %p44 = scmp.eq.s32.totalorder %s13, 1
    %p45 = por %p43, %p44
    %p46 = scmp.ne.s32.totalorder %s35, %s36
    %p47 = scmp.eq.s32.totalorder %s13, 0
    %p48 = por %p46, %p47
    %p49 = scmp.ne.s32.totalorder %s35, %s36
    %p50 = scmp.eq.s32.totalorder %s14, 1
    %p51 = por %p49, %p50
    %p53 = scmp.ne.s32.totalorder %s36, %s52
    %p54 = scmp.eq.s32.totalorder %s14, 0
    %p55 = por %p53, %p54
    %s57 = sadd.s32 %s56, 1
    %p60 = scmp.eq.s32.totalorder %s8, 1
    %p61 = scmp.ne.s32.totalorder %s56, %s58
    %p62 = scmp.eq.s32.totalorder %s8, 0
    %p63 = por %p61, %p62
    %p64 = scmp.ne.s32.totalorder %s56, %s58
    %p65 = scmp.eq.s32.totalorder %s13, 1
    %p66 = por %p64, %p65
    %p67 = scmp.ne.s32.totalorder %s58, %s59
    %p68 = scmp.eq.s32.totalorder %s13, 0
    %p69 = por %p67, %p68
    %p70 = scmp.ne.s32.totalorder %s58, %s59
    %p71 = scmp.eq.s32.totalorder %s14, 1
    %p72 = por %p70, %p71
    %p74 = scmp.ne.s32.totalorder %s59, %s73
    %p75 = scmp.eq.s32.totalorder %s14, 0
    %p76 = por %p74, %p75
    %s77 = ssub.s32 %s15, %s27
    %s78 = ssub.s32 %s16, %s23
    %s79 = sor.u32 %s77, %s78
    %p80 = scmp.eq.s32.totalorder %s79, 0
    %s82 = sadd.s32 %s81, 1
    %s83 = scalar_select %p80, %s81, %s82
    %p86 = pneg %p80
    %p87 = scmp.eq.s32.totalorder %s8, 1
    %p88 = por %p86, %p87
    %p89 = scmp.ne.s32.totalorder %s81, %s84
    %p90 = scmp.eq.s32.totalorder %s8, 0
    %p91 = por %p89, %p90
    %p92 = scmp.ne.s32.totalorder %s81, %s84
    %p93 = scmp.eq.s32.totalorder %s13, 1
    %p94 = por %p92, %p93
    %p95 = scmp.ne.s32.totalorder %s84, %s85
    %p96 = scmp.eq.s32.totalorder %s13, 0
    %p97 = por %p95, %p96
    %p98 = scmp.ne.s32.totalorder %s84, %s85
    %p99 = scmp.eq.s32.totalorder %s14, 1
    %p100 = por %p98, %p99
    %p102 = scmp.ne.s32.totalorder %s85, %s101
    %p103 = scmp.eq.s32.totalorder %s14, 0
    %p104 = por %p102, %p103
    %p105 = scmp.le.s32.totalorder 1, %s8
    %p106 = scmp.lt.s32.totalorder %s8, 3
    %p107 = pnand %p105, %p106
    %p108 = pneg %p107
    // Predicated region
    $region9: #{neural_mesh_model_forward.1} parent=5 // pred_check
      _
    $region10: #{neural_mesh_model_forward.1} parent=5 // pred_check_branch
      %110 = sbr.rel (%p107) target = $region12
    $region11: #{neural_mesh_model_forward.1} parent=5 // pred_region
      %s111 = ssub.s32 %s8, 1
      // Predicated region
      $region13: #{neural_mesh_model_forward.1} parent=11 // pred_check
        %p112 = pneg %p69
      $region14: #{neural_mesh_model_forward.1} parent=11 // pred_check_branch
        %114 = sbr.rel (%p112) target = $region16
      $region15: #{neural_mesh_model_forward.1} parent=11 // pred_region
        _
      $region16: #{neural_mesh_model_forward.1} parent=11 // pred_fallthru
        _
    $region12: #{neural_mesh_model_forward.1} parent=5 // pred_fallthru
      _
    %p115 = scmp.lt.s32.totalorder %s8, 2
    // Predicated region
    $region17: #{neural_mesh_model_forward.1} parent=5 // pred_check
      %p116 = pneg %p115
    $region18: #{neural_mesh_model_forward.1} parent=5 // pred_check_branch
      %118 = sbr.rel (%p116) target = $region20
    $region19: #{neural_mesh_model_forward.1} parent=5 // pred_region
      // Predicated region
      $region21: #{neural_mesh_model_forward.1} parent=19 // pred_check
        %p119 = pneg %p42
      $region22: #{neural_mesh_model_forward.1} parent=19 // pred_check_branch
        %121 = sbr.rel (%p119) target = $region24
      $region23: #{neural_mesh_model_forward.1} parent=19 // pred_region
        %s122 = smul.u32 4, %s16
        %p123 = scmp.lt.s32.totalorder %s15, 1
        %s124 = scalar_select %p123, %s15, 1
        %p125 = scmp.lt.s32.totalorder %s122, 3
        %s126 = scalar_select %p125, %s122, 3
        %s127 = smul.addr %s124, 12
        %s128 = sadd.s32 %s126, %s127
        %s129 = smul.addr %s128, 8
        %s130 = scalar_lea.vmem %s0, %s129
        %s131 = smul.u32 4, %s16
      $region24: #{neural_mesh_model_forward.1} parent=19 // pred_fallthru
        _
    $region20: #{neural_mesh_model_forward.1} parent=5 // pred_fallthru
      _
    %p132 = scmp.le.s32.totalorder 1, %s8
    %p133 = scmp.lt.s32.totalorder %s8, 3
    %p134 = pnand %p132, %p133
    %p135 = pneg %p134
    // Predicated region
    $region25: #{neural_mesh_model_forward.1} parent=5 // pred_check
      _
    $region26: #{neural_mesh_model_forward.1} parent=5 // pred_check_branch
      %137 = sbr.rel (%p134) target = $region28
    $region27: #{neural_mesh_model_forward.1} parent=5 // pred_region
      %s138 = ssub.s32 %s8, 1
      %s139 = smul.u32 4, %s18
      %p140 = scmp.lt.s32.totalorder %s17, 1
      %s141 = scalar_select %p140, %s17, 1
      %p142 = scmp.lt.s32.totalorder %s139, 3
      %s143 = scalar_select %p142, %s139, 3
      %s144 = smul.addr %s141, 12
      %s145 = sadd.s32 %s143, %s144
      %s146 = smul.addr %s145, 8
      %s147 = scalar_lea.vmem %s0, %s146
      %p148 = pneg %p48
      %p149 = pneg %p45
      %p150 = pneg %p69
      %p151 = pneg %p66
      %p152 = pneg %p97
      %p153 = pneg %p94
      %s154 = smul.u32 4, %s18
      %p155 = scmp.lt.s32.totalorder %s17, 1
      %s156 = scalar_select %p155, %s17, 1
      %p157 = scmp.lt.s32.totalorder %s154, 3
      %s158 = scalar_select %p157, %s154, 3
      %s159 = smul.addr %s156, 8
      %s160 = sadd.s32 %s158, %s159
      %s161 = smul.addr %s160, 8
      %s162 = scalar_lea.vmem %s2, %s161
      %s163 = smul.u32 4, %s18
      %p164 = scmp.lt.s32.totalorder %s17, 1
      %s165 = scalar_select %p164, %s17, 1
      %p166 = scmp.lt.s32.totalorder %s163, 3
      %s167 = scalar_select %p166, %s163, 3
      %s168 = smul.addr %s165, 12
      %s169 = sadd.s32 %s167, %s168
      %s170 = smul.addr %s169, 8
      %s171 = scalar_lea.vmem %s0, %s170
      %s172 = smul.u32 4, %s18
      %s173 = smul.u32 4, %s18
      %p174 = scmp.lt.s32.totalorder %s17, 1
      %s175 = scalar_select %p174, %s17, 1
      %p176 = scmp.lt.s32.totalorder %s173, 3
      %s177 = scalar_select %p176, %s173, 3
      %s178 = smul.addr %s175, 8
      %s179 = sadd.s32 %s177, %s178
      %s180 = smul.addr %s179, 8
      %s181 = scalar_lea.vmem %s2, %s180
      %s182 = smul.u32 4, %s18
      %v184 = vld [vmem:[%s171] sm:$0xff]
      %v185 = vld [vmem:[%s171 + $0x8] sm:$0xff]
      %v186 = vld [vmem:[%s171 + $0x10] sm:$0xff]
      %v187 = vld [vmem:[%s171 + $0x18] sm:$0xff]
      %v188 = vld [vmem:[%s171 + $0x20] sm:$0xff]
      %v189 = vld [vmem:[%s171 + $0x28] sm:$0xff]
      %v190 = vld [vmem:[%s171 + $0x30] sm:$0xff]
      %v191 = vld [vmem:[%s171 + $0x38] sm:$0xff]
      %v192 = vld [vmem:[%s171 + $0x40] sm:$0xff]
      %v193 = vld [vmem:[%s171 + $0x48] sm:$0xff]
      %v194 = vld [vmem:[%s171 + $0x50] sm:$0xff]
      %v195 = vld [vmem:[%s171 + $0x58] sm:$0xff]
      %vm196 = vcmp.ge.f32.partialorder %v184, 0.0
      %vm197 = vcmp.ge.f32.partialorder %v185, 0.0
      %vm198 = vcmp.ge.f32.partialorder %v186, 0.0
      %vm199 = vcmp.ge.f32.partialorder %v187, 0.0
      %v200 = vsel %vm196, 1, 0
      %v201 = vsel %vm197, 1, 0
      %v202 = vsel %vm198, 1, 0
      %v203 = vsel %vm199, 1, 0
      %v204 = vcvt.s32.f32 %v200
      %v205 = vcvt.s32.f32 %v201
      %v206 = vcvt.s32.f32 %v202
      %v207 = vcvt.s32.f32 %v203
      %v208 = vmul.f32 %v188, -9999.0
      %v209 = vmul.f32 %v189, -9999.0
      %v210 = vmul.f32 %v190, -9999.0
      %v211 = vmul.f32 %v191, -9999.0
      %v212 = vxor.u32 %v208, 2147483648
      %v213 = vxor.u32 %v209, 2147483648
      %v214 = vxor.u32 %v210, 2147483648
      %v215 = vxor.u32 %v211, 2147483648
      %v216 = vmul.f32 %v212, 1.442695
      %v217 = vpow.pop %v216
      %v218 = vmul.f32 %v213, 1.442695
      %v219 = vpow.pop %v218
      %v220 = vmul.f32 %v214, 1.442695
      %v221 = vpow.pop %v220
      %v222 = vmul.f32 %v215, 1.442695
      %v223 = vpow.pop %v222
      %v224 = vadd.f32 %v217, 1.0
      %v225 = vadd.f32 %v219, 1.0
      %v226 = vadd.f32 %v221, 1.0
      %v227 = vadd.f32 %v223, 1.0
      %v228 = vrcp.pop %v224
      %v229 = vmul.f32 1.0, %v228
      %v230 = vrcp.pop %v225
      %v231 = vmul.f32 1.0, %v230
      %v232 = vrcp.pop %v226
      %v233 = vmul.f32 1.0, %v232
      %v234 = vrcp.pop %v227
      %v235 = vmul.f32 1.0, %v234
      %v236 = vmul.f32 %v229, %v204
      %v237 = vmul.f32 %v231, %v205
      %v238 = vmul.f32 %v233, %v206
      %v239 = vmul.f32 %v235, %v207
      %v240 = vsub.f32 100.0, %v184
      %v241 = vsub.f32 100.0, %v185
      %v242 = vsub.f32 100.0, %v186
      %v243 = vsub.f32 100.0, %v187
      %v244 = vmul.f32 %v240, 0.01010101
      %v245 = vmul.f32 %v241, 0.01010101
      %v246 = vmul.f32 %v242, 0.01010101
      %v247 = vmul.f32 %v243, 0.01010101
      %v252 = vrot.slane %v204, 4
      %v253 = vrot.slane %v205, 4
      %v254 = vrot.slane %v206, 4
      %v255 = vrot.slane %v207, 4
      %v260 = vmul.f32 %v244, %v252
      %v261 = vmul.f32 %v245, %v253
      %v262 = vmul.f32 %v246, %v254
      %v263 = vmul.f32 %v247, %v255
      %vm264 = vcmask 1047556
      %v265 = vsel %vm264, %v260, -inf
      %v266 = vrot.slane %v265, 4
      %v267 = vmax.f32 %v265, %v266
      %v268 = vrot.slane %v267, 2
      %v269 = vmax.f32 %v267, %v268
      %v270 = vrot.slane %v269, 1
      %v271 = vmax.f32 %v269, %v270
      %v272 = vsel %vm264, %v261, -inf
      %v273 = vrot.slane %v272, 4
      %v274 = vmax.f32 %v272, %v273
      %v275 = vrot.slane %v274, 2
      %v276 = vmax.f32 %v274, %v275
      %v277 = vrot.slane %v276, 1
      %v278 = vmax.f32 %v276, %v277
      %v279 = vsel %vm264, %v262, -inf
      %v280 = vrot.slane %v279, 4
      %v281 = vmax.f32 %v279, %v280
      %v282 = vrot.slane %v281, 2
      %v283 = vmax.f32 %v281, %v282
      %v284 = vrot.slane %v283, 1
      %v285 = vmax.f32 %v283, %v284
      %v286 = vsel %vm264, %v263, -inf
      %v287 = vrot.slane %v286, 4
      %v288 = vmax.f32 %v286, %v287
      %v289 = vrot.slane %v288, 2
      %v290 = vmax.f32 %v288, %v289
      %v291 = vrot.slane %v290, 1
      %v292 = vmax.f32 %v290, %v291
      %v293 = vmax.f32 %v271, 1e-10
      %v294 = vmax.f32 %v278, 1e-10
      %v295 = vmax.f32 %v285, 1e-10
      %v296 = vmax.f32 %v292, 1e-10
      %v297 = vsub.f32 %v260, %v293
      %v298 = vsub.f32 %v261, %v294
      %v299 = vsub.f32 %v262, %v295
      %v300 = vsub.f32 %v263, %v296
      %v301 = vmul.f32 %v297, 10000.0
      %v302 = vmul.f32 %v298, 10000.0
      %v303 = vmul.f32 %v299, 10000.0
      %v304 = vmul.f32 %v300, 10000.0
      %v305 = vmul.f32 %v301, 1.442695
      %v306 = vpow.pop %v305
      %v307 = vmul.f32 %v302, 1.442695
      %v308 = vpow.pop %v307
      %v309 = vmul.f32 %v303, 1.442695
      %v310 = vpow.pop %v309
      %v311 = vmul.f32 %v304, 1.442695
      %v312 = vpow.pop %v311
      %v317 = vrot.slane %v306, 4
      %v318 = vrot.slane %v308, 4
      %v319 = vrot.slane %v310, 4
      %v320 = vrot.slane %v312, 4
      %v325 = vmul.f32 %v236, %v317
      %v326 = vmul.f32 %v237, %v318
      %v327 = vmul.f32 %v238, %v319
      %v328 = vmul.f32 %v239, %v320
      %v329 = vsub.f32 1e-10, %v293
      %v330 = vsub.f32 1e-10, %v294
      %v331 = vsub.f32 1e-10, %v295
      %v332 = vsub.f32 1e-10, %v296
      %v333 = vmul.f32 %v329, 10000.0
      %v334 = vmul.f32 %v330, 10000.0
      %v335 = vmul.f32 %v331, 10000.0
      %v336 = vmul.f32 %v332, 10000.0
      %v337 = vmul.f32 %v333, 1.442695
      %v338 = vpow.pop %v337
      %v339 = vmul.f32 %v334, 1.442695
      %v340 = vpow.pop %v339
      %v341 = vmul.f32 %v335, 1.442695
      %v342 = vpow.pop %v341
      %v343 = vmul.f32 %v336, 1.442695
      %v344 = vpow.pop %v343
      %v345 = vmax.f32 %v338, 1e-10
      %v346 = vmax.f32 %v340, 1e-10
      %v347 = vmax.f32 %v342, 1e-10
      %v348 = vmax.f32 %v344, 1e-10
      %vm349 = vcmask 1043456
      %v350 = vsel %vm349, %v325, 0.0
      %v351 = vrot.slane %v350, 4
      %v352 = vadd.f32 %v350, %v351
      %v353 = vrot.slane %v352, 2
      %v354 = vadd.f32 %v352, %v353
      %v355 = vrot.slane %v354, 1
      %v356 = vadd.f32 %v354, %v355
      %v357 = vsel %vm349, %v326, 0.0
      %v358 = vrot.slane %v357, 4
      %v359 = vadd.f32 %v357, %v358
      %v360 = vrot.slane %v359, 2
      %v361 = vadd.f32 %v359, %v360
      %v362 = vrot.slane %v361, 1
      %v363 = vadd.f32 %v361, %v362
      %v364 = vsel %vm349, %v327, 0.0
      %v365 = vrot.slane %v364, 4
      %v366 = vadd.f32 %v364, %v365
      %v367 = vrot.slane %v366, 2
      %v368 = vadd.f32 %v366, %v367
      %v369 = vrot.slane %v368, 1
      %v370 = vadd.f32 %v368, %v369
      %v371 = vsel %vm349, %v328, 0.0
      %v372 = vrot.slane %v371, 4
      %v373 = vadd.f32 %v371, %v372
      %v374 = vrot.slane %v373, 2
      %v375 = vadd.f32 %v373, %v374
      %v376 = vrot.slane %v375, 1
      %v377 = vadd.f32 %v375, %v376
      %v378 = vadd.f32 %v356, %v345
      %v379 = vadd.f32 %v363, %v346
      %v380 = vadd.f32 %v370, %v347
      %v381 = vadd.f32 %v377, %v348
      %v382 = vrcp.pop %v378
      %v383 = vmul.f32 %v356, %v382
      %v384 = vrcp.pop %v379
      %v385 = vmul.f32 %v363, %v384
      %v386 = vrcp.pop %v380
      %v387 = vmul.f32 %v370, %v386
      %v388 = vrcp.pop %v381
      %v389 = vmul.f32 %v377, %v388
      %v390 = vrcp.pop %v378
      %v391 = vrcp.pop %v379
      %v392 = vrcp.pop %v380
      %v393 = vrcp.pop %v381
      %v394 = vmul.f32 %v325, %v390
      %v395 = vmul.f32 %v326, %v391
      %v396 = vmul.f32 %v327, %v392
      %v397 = vmul.f32 %v328, %v393
      %v402 = vrot.slane %v188, 4
      %v403 = vrot.slane %v189, 4
      %v404 = vrot.slane %v190, 4
      %v405 = vrot.slane %v191, 4
      %v410 = vmul.f32 %v394, %v402
      %v411 = vmul.f32 %v395, %v403
      %v412 = vmul.f32 %v396, %v404
      %v413 = vmul.f32 %v397, %v405
      %v414 = vrot.slane %v188, 5
      %v415 = vrot.slane %v189, 5
      %v416 = vrot.slane %v190, 5
      %v417 = vrot.slane %v191, 5
      %v422 = vmul.f32 %v394, %v414
      %v423 = vmul.f32 %v395, %v415
      %v424 = vmul.f32 %v396, %v416
      %v425 = vmul.f32 %v397, %v417
      %v426 = vrot.slane %v188, 6
      %v427 = vrot.slane %v189, 6
      %v428 = vrot.slane %v190, 6
      %v429 = vrot.slane %v191, 6
      %v434 = vmul.f32 %v394, %v426
      %v435 = vmul.f32 %v395, %v427
      %v436 = vmul.f32 %v396, %v428
      %v437 = vmul.f32 %v397, %v429
      %v442 = vrot.slane %v192, 7
      %v443 = vrot.slane %v193, 7
      %v444 = vrot.slane %v194, 7
      %v445 = vrot.slane %v195, 7
      %v450 = vmul.f32 %v394, %v442
      %v451 = vmul.f32 %v395, %v443
      %v452 = vmul.f32 %v396, %v444
      %v453 = vmul.f32 %v397, %v445
      %v454 = vmul.f32 %v394, %v192
      %v455 = vmul.f32 %v395, %v193
      %v456 = vmul.f32 %v396, %v194
      %v457 = vmul.f32 %v397, %v195
      %v458 = vrot.slane %v192, 1
      %v459 = vrot.slane %v193, 1
      %v460 = vrot.slane %v194, 1
      %v461 = vrot.slane %v195, 1
      %v466 = vmul.f32 %v394, %v458
      %v467 = vmul.f32 %v395, %v459
      %v468 = vmul.f32 %v396, %v460
      %v469 = vmul.f32 %v397, %v461
      %v470 = vrot.slane %v192, 2
      %v471 = vrot.slane %v193, 2
      %v472 = vrot.slane %v194, 2
      %v473 = vrot.slane %v195, 2
      %v478 = vmul.f32 %v394, %v470
      %v479 = vmul.f32 %v395, %v471
      %v480 = vmul.f32 %v396, %v472
      %v481 = vmul.f32 %v397, %v473
      %v482 = vrot.slane %v192, 3
      %v483 = vrot.slane %v193, 3
      %v484 = vrot.slane %v194, 3
      %v485 = vrot.slane %v195, 3
      %v490 = vmul.f32 %v394, %v482
      %v491 = vmul.f32 %v395, %v483
      %v492 = vmul.f32 %v396, %v484
      %v493 = vmul.f32 %v397, %v485
      %v494 = vrot.slane %v192, 4
      %v495 = vrot.slane %v193, 4
      %v496 = vrot.slane %v194, 4
      %v497 = vrot.slane %v195, 4
      %v502 = vmul.f32 %v394, %v494
      %v503 = vmul.f32 %v395, %v495
      %v504 = vmul.f32 %v396, %v496
      %v505 = vmul.f32 %v397, %v497
      %v506 = vcvt.f32.s32.to.zero.pseudo %v184
      %v507 = vcvt.f32.s32.to.zero.pseudo %v185
      %v508 = vcvt.f32.s32.to.zero.pseudo %v186
      %v509 = vcvt.f32.s32.to.zero.pseudo %v187
      %v510 = vlaneseq
      %v511 = vshrl.u32 %v510, 7
      %v512 = vadd.s32 %v511, 8
      %v513 = vadd.s32 %v511, 16
      %v514 = vadd.s32 %v511, 24
      %v515 = vadd.s32 %v511, 32
      %v516 = vadd.s32 %v511, 40
      %v517 = vadd.s32 %v511, 48
      %v518 = vadd.s32 %v511, 56
      %v519 = vadd.s32 %v511, 64
      %v520 = vadd.s32 %v511, 72
      %v521 = vadd.s32 %v511, 80
      %v522 = vadd.s32 %v511, 88
      %v523 = vadd.s32 %v511, 96
      %v524 = vadd.s32 %v511, 104
      %v525 = vadd.s32 %v511, 112
      %v526 = vadd.s32 %v511, 120
      %v527 = vld [vmem:[%s1] sm:$0xf]
      %v528 = vld [vmem:[%s1 + $0x8] sm:$0xf]
      %v529 = vld [vmem:[%s1 + $0x10] sm:$0xf]
      %v530 = vlaneseq
      %v531 = vshrl.u32 %v530, 7
      %v532 = vsub.s32 0, %v531
      %v533 = vrot.slane %v506, %v532
      %v534 = vlaneseq
      %v535 = vshrl.u32 %v534, 7
      %v536 = vsub.s32 0, %v535
      %v537 = vrot.slane %v507, %v536
      %v538 = vlaneseq
      %v539 = vshrl.u32 %v538, 7
      %v540 = vsub.s32 0, %v539
      %v541 = vrot.slane %v508, %v540
      %v542 = vlaneseq
      %v543 = vshrl.u32 %v542, 7
      %v544 = vsub.s32 0, %v543
      %v545 = vrot.slane %v509, %v544
      %vm546 = vcmp.eq.s32.totalorder %v511, %v533
      %vm547 = vcmp.eq.s32.totalorder %v511, %v537
      %vm548 = vcmp.eq.s32.totalorder %v511, %v541
      %vm549 = vcmp.eq.s32.totalorder %v511, %v545
      %vm550 = vcmp.eq.s32.totalorder %v512, %v533
      %vm551 = vcmp.eq.s32.totalorder %v512, %v537
      %vm552 = vcmp.eq.s32.totalorder %v512, %v541
      %vm553 = vcmp.eq.s32.totalorder %v512, %v545
      %vm554 = vcmp.eq.s32.totalorder %v513, %v533
      %vm555 = vcmp.eq.s32.totalorder %v513, %v537
      %vm556 = vcmp.eq.s32.totalorder %v513, %v541
      %vm557 = vcmp.eq.s32.totalorder %v513, %v545
      %vm558 = vcmp.eq.s32.totalorder %v514, %v533
      %vm559 = vcmp.eq.s32.totalorder %v514, %v537
      %vm560 = vcmp.eq.s32.totalorder %v514, %v541
      %vm561 = vcmp.eq.s32.totalorder %v514, %v545
      %vm562 = vcmp.eq.s32.totalorder %v515, %v533
      %vm563 = vcmp.eq.s32.totalorder %v515, %v537
      %vm564 = vcmp.eq.s32.totalorder %v515, %v541
      %vm565 = vcmp.eq.s32.totalorder %v515, %v545
      %vm566 = vcmp.eq.s32.totalorder %v516, %v533
      %vm567 = vcmp.eq.s32.totalorder %v516, %v537
      %vm568 = vcmp.eq.s32.totalorder %v516, %v541
      %vm569 = vcmp.eq.s32.totalorder %v516, %v545
      %vm570 = vcmp.eq.s32.totalorder %v517, %v533
      %vm571 = vcmp.eq.s32.totalorder %v517, %v537
      %vm572 = vcmp.eq.s32.totalorder %v517, %v541
      %vm573 = vcmp.eq.s32.totalorder %v517, %v545
      %vm574 = vcmp.eq.s32.totalorder %v518, %v533
      %vm575 = vcmp.eq.s32.totalorder %v518, %v537
      %vm576 = vcmp.eq.s32.totalorder %v518, %v541
      %vm577 = vcmp.eq.s32.totalorder %v518, %v545
      %vm578 = vcmp.eq.s32.totalorder %v519, %v533
      %vm579 = vcmp.eq.s32.totalorder %v519, %v537
      %vm580 = vcmp.eq.s32.totalorder %v519, %v541
      %vm581 = vcmp.eq.s32.totalorder %v519, %v545
      %vm582 = vcmp.eq.s32.totalorder %v520, %v533
      %vm583 = vcmp.eq.s32.totalorder %v520, %v537
      %vm584 = vcmp.eq.s32.totalorder %v520, %v541
      %vm585 = vcmp.eq.s32.totalorder %v520, %v545
      %vm586 = vcmp.eq.s32.totalorder %v521, %v533
      %vm587 = vcmp.eq.s32.totalorder %v521, %v537
      %vm588 = vcmp.eq.s32.totalorder %v521, %v541
      %vm589 = vcmp.eq.s32.totalorder %v521, %v545
      %vm590 = vcmp.eq.s32.totalorder %v522, %v533
      %vm591 = vcmp.eq.s32.totalorder %v522, %v537
      %vm592 = vcmp.eq.s32.totalorder %v522, %v541
      %vm593 = vcmp.eq.s32.totalorder %v522, %v545
      %vm594 = vcmp.eq.s32.totalorder %v523, %v533
      %vm595 = vcmp.eq.s32.totalorder %v523, %v537
      %vm596 = vcmp.eq.s32.totalorder %v523, %v541
      %vm597 = vcmp.eq.s32.totalorder %v523, %v545
      %vm598 = vcmp.eq.s32.totalorder %v524, %v533
      %vm599 = vcmp.eq.s32.totalorder %v524, %v537
      %vm600 = vcmp.eq.s32.totalorder %v524, %v541
      %vm601 = vcmp.eq.s32.totalorder %v524, %v545
      %vm602 = vcmp.eq.s32.totalorder %v525, %v533
      %vm603 = vcmp.eq.s32.totalorder %v525, %v537
      %vm604 = vcmp.eq.s32.totalorder %v525, %v541
      %vm605 = vcmp.eq.s32.totalorder %v525, %v545
      %vm606 = vcmp.eq.s32.totalorder %v526, %v533
      %vm607 = vcmp.eq.s32.totalorder %v526, %v537
      %vm608 = vcmp.eq.s32.totalorder %v526, %v541
      %vm609 = vcmp.eq.s32.totalorder %v526, %v545
      %v610 = vsel %vm546, 1, 0
      %v611 = vsel %vm547, 1, 0
      %v612 = vsel %vm548, 1, 0
      %v613 = vsel %vm549, 1, 0
      %v614 = vsel %vm550, 1, 0
      %v615 = vsel %vm551, 1, 0
      %v616 = vsel %vm552, 1, 0
      %v617 = vsel %vm553, 1, 0
      %v618 = vsel %vm554, 1, 0
      %v619 = vsel %vm555, 1, 0
      %v620 = vsel %vm556, 1, 0
      %v621 = vsel %vm557, 1, 0
      %v622 = vsel %vm558, 1, 0
      %v623 = vsel %vm559, 1, 0
      %v624 = vsel %vm560, 1, 0
      %v625 = vsel %vm561, 1, 0
      %v626 = vsel %vm562, 1, 0
      %v627 = vsel %vm563, 1, 0
      %v628 = vsel %vm564, 1, 0
      %v629 = vsel %vm565, 1, 0
      %v630 = vsel %vm566, 1, 0
      %v631 = vsel %vm567, 1, 0
      %v632 = vsel %vm568, 1, 0
      %v633 = vsel %vm569, 1, 0
      %v634 = vsel %vm570, 1, 0
      %v635 = vsel %vm571, 1, 0
      %v636 = vsel %vm572, 1, 0
      %v637 = vsel %vm573, 1, 0
      %v638 = vsel %vm574, 1, 0
      %v639 = vsel %vm575, 1, 0
      %v640 = vsel %vm576, 1, 0
      %v641 = vsel %vm577, 1, 0
      %v642 = vsel %vm578, 1, 0
      %v643 = vsel %vm579, 1, 0
      %v644 = vsel %vm580, 1, 0
      %v645 = vsel %vm581, 1, 0
      %v646 = vsel %vm582, 1, 0
      %v647 = vsel %vm583, 1, 0
      %v648 = vsel %vm584, 1, 0
      %v649 = vsel %vm585, 1, 0
      %v650 = vsel %vm586, 1, 0
      %v651 = vsel %vm587, 1, 0
      %v652 = vsel %vm588, 1, 0
      %v653 = vsel %vm589, 1, 0
      %v654 = vsel %vm590, 1, 0
      %v655 = vsel %vm591, 1, 0
      %v656 = vsel %vm592, 1, 0
      %v657 = vsel %vm593, 1, 0
      %v658 = vsel %vm594, 1, 0
      %v659 = vsel %vm595, 1, 0
      %v660 = vsel %vm596, 1, 0
      %v661 = vsel %vm597, 1, 0
      %v662 = vsel %vm598, 1, 0
      %v663 = vsel %vm599, 1, 0
      %v664 = vsel %vm600, 1, 0
      %v665 = vsel %vm601, 1, 0
      %v666 = vsel %vm602, 1, 0
      %v667 = vsel %vm603, 1, 0
      %v668 = vsel %vm604, 1, 0
      %v669 = vsel %vm605, 1, 0
      %v670 = vsel %vm606, 1, 0
      %v671 = vsel %vm607, 1, 0
      %v672 = vsel %vm608, 1, 0
      %v673 = vsel %vm609, 1, 0
      %v674 = vcvt.s32.f32 %v610
      %v675 = vcvt.s32.f32 %v611
      %v676 = vcvt.s32.f32 %v612
      %v677 = vcvt.s32.f32 %v613
      %v678 = vcvt.s32.f32 %v614
      %v679 = vcvt.s32.f32 %v615
      %v680 = vcvt.s32.f32 %v616
      %v681 = vcvt.s32.f32 %v617
      %v682 = vcvt.s32.f32 %v618
      %v683 = vcvt.s32.f32 %v619
      %v684 = vcvt.s32.f32 %v620
      %v685 = vcvt.s32.f32 %v621
      %v686 = vcvt.s32.f32 %v622
      %v687 = vcvt.s32.f32 %v623
      %v688 = vcvt.s32.f32 %v624
      %v689 = vcvt.s32.f32 %v625
      %v690 = vcvt.s32.f32 %v626
      %v691 = vcvt.s32.f32 %v627
      %v692 = vcvt.s32.f32 %v628
      %v693 = vcvt.s32.f32 %v629
      %v694 = vcvt.s32.f32 %v630
      %v695 = vcvt.s32.f32 %v631
      %v696 = vcvt.s32.f32 %v632
      %v697 = vcvt.s32.f32 %v633
      %v698 = vcvt.s32.f32 %v634
      %v699 = vcvt.s32.f32 %v635
      %v700 = vcvt.s32.f32 %v636
      %v701 = vcvt.s32.f32 %v637
      %v702 = vcvt.s32.f32 %v638
      %v703 = vcvt.s32.f32 %v639
      %v704 = vcvt.s32.f32 %v640
      %v705 = vcvt.s32.f32 %v641
      %v706 = vcvt.s32.f32 %v642
      %v707 = vcvt.s32.f32 %v643
      %v708 = vcvt.s32.f32 %v644
      %v709 = vcvt.s32.f32 %v645
      %v710 = vcvt.s32.f32 %v646
      %v711 = vcvt.s32.f32 %v647
      %v712 = vcvt.s32.f32 %v648
      %v713 = vcvt.s32.f32 %v649
      %v714 = vcvt.s32.f32 %v650
      %v715 = vcvt.s32.f32 %v651
      %v716 = vcvt.s32.f32 %v652
      %v717 = vcvt.s32.f32 %v653
      %v718 = vcvt.s32.f32 %v654
      %v719 = vcvt.s32.f32 %v655
      %v720 = vcvt.s32.f32 %v656
      %v721 = vcvt.s32.f32 %v657
      %v722 = vcvt.s32.f32 %v658
      %v723 = vcvt.s32.f32 %v659
      %v724 = vcvt.s32.f32 %v660
      %v725 = vcvt.s32.f32 %v661
      %v726 = vcvt.s32.f32 %v662
      %v727 = vcvt.s32.f32 %v663
      %v728 = vcvt.s32.f32 %v664
      %v729 = vcvt.s32.f32 %v665
      %v730 = vcvt.s32.f32 %v666
      %v731 = vcvt.s32.f32 %v667
      %v732 = vcvt.s32.f32 %v668
      %v733 = vcvt.s32.f32 %v669
      %v734 = vcvt.s32.f32 %v670
      %v735 = vcvt.s32.f32 %v671
      %v736 = vcvt.s32.f32 %v672
      %v737 = vcvt.s32.f32 %v673
      %v738 = vpack.c.bf16 %v678, %v674
      %v739 = vpack.c.bf16 %v679, %v675
      %v740 = vpack.c.bf16 %v680, %v676
      %v741 = vpack.c.bf16 %v681, %v677
      %v742 = vpack.c.bf16 %v686, %v682
      %v743 = vpack.c.bf16 %v687, %v683
      %v744 = vpack.c.bf16 %v688, %v684
      %v745 = vpack.c.bf16 %v689, %v685
      %v746 = vpack.c.bf16 %v694, %v690
      %v747 = vpack.c.bf16 %v695, %v691
      %v748 = vpack.c.bf16 %v696, %v692
      %v749 = vpack.c.bf16 %v697, %v693
      %v750 = vpack.c.bf16 %v702, %v698
      %v751 = vpack.c.bf16 %v703, %v699
      %v752 = vpack.c.bf16 %v704, %v700
      %v753 = vpack.c.bf16 %v705, %v701
      %v754 = vpack.c.bf16 %v710, %v706
      %v755 = vpack.c.bf16 %v711, %v707
      %v756 = vpack.c.bf16 %v712, %v708
      %v757 = vpack.c.bf16 %v713, %v709
      %v758 = vpack.c.bf16 %v718, %v714
      %v759 = vpack.c.bf16 %v719, %v715
      %v760 = vpack.c.bf16 %v720, %v716
      %v761 = vpack.c.bf16 %v721, %v717
      %v762 = vpack.c.bf16 %v726, %v722
      %v763 = vpack.c.bf16 %v727, %v723
      %v764 = vpack.c.bf16 %v728, %v724
      %v765 = vpack.c.bf16 %v729, %v725
      %v766 = vpack.c.bf16 %v734, %v730
      %v767 = vpack.c.bf16 %v735, %v731
      %v768 = vpack.c.bf16 %v736, %v732
      %v769 = vpack.c.bf16 %v737, %v733
      %v773 = vunpack.c.l.b16 %v527
      %v774 = vunpack.c.l.b16 %v528
      %v775 = vunpack.c.l.b16 %v529
      %v776 = vpack.c.b16 %v774, %v773
      %v777 = vpack.c.b16 %v775, %v775
      %780 = vmatprep.subr.bf16.mxu0 %v739
      %781 = vmatpush1.bf16.msra.mxu0 %v738
      %782 = vmatprep.subr.bf16.mxu0 %v743
      %783 = vmatpush1.bf16.msra.mxu0 %v742
      %784 = vmatprep.subr.bf16.mxu0 %v747
      %785 = vmatpush1.bf16.msra.mxu0 %v746
      %786 = vmatprep.subr.bf16.mxu0 %v751
      %787 = vmatpush1.bf16.msra.mxu0 %v750
      %788 = vmatprep.subr.bf16.mxu0 %v755
      %789 = vmatpush1.bf16.msra.mxu0 %v754
      %790 = vmatprep.subr.bf16.mxu0 %v759
      %791 = vmatpush1.bf16.msra.mxu0 %v758
      %792 = vmatprep.subr.bf16.mxu0 %v763
      %793 = vmatpush1.bf16.msra.mxu0 %v762
      %794 = vmatprep.subr.bf16.mxu0 %v767
      %795 = vmatpush1.bf16.msra.mxu0 %v766
      %796 = vmatprep.subr.bf16.mxu0 0
      %797 = vmatpush1.bf16.msra.mxu0 0
      %798 = vmatprep.subr.bf16.mxu0 0
      %799 = vmatpush1.bf16.msra.mxu0 0
      %800 = vmatprep.subr.bf16.mxu0 0
      %801 = vmatpush1.bf16.msra.mxu0 0
      %802 = vmatprep.subr.bf16.mxu0 0
      %803 = vmatpush1.bf16.msra.mxu0 0
      %804 = vmatprep.subr.bf16.mxu0 0
      %805 = vmatpush1.bf16.msra.mxu0 0
      %806 = vmatprep.subr.bf16.mxu0 0
      %807 = vmatpush1.bf16.msra.mxu0 0
      %808 = vmatprep.subr.bf16.mxu0 0
      %809 = vmatpush1.bf16.msra.mxu0 0
      %810 = vmatprep.subr.bf16.mxu0 0
      %811 = vmatpush1.bf16.msra.mxu0 0
      %812 = vmatprep.mubr.bf16.mxu0 0
      %813 = vmatmul.mubr.bf16.gmra.mrb[0].mxu0 %v776
      %v814 = vpop.f32.mrb[0].mxu0
      %v815 = vadd.f32 0.0, %v814
      %v816 = vpop.f32.mrb[0].mxu0
      %v817 = vadd.f32 0.0, %v816
      %v818 = vpop.f32.mrb[0].mxu0
      %v819 = vadd.f32 0.0, %v818
      %v820 = vpop.f32.mrb[0].mxu0
      %v821 = vadd.f32 0.0, %v820
      %822 = vmatprep.mubr.bf16.mxu0 0
      %823 = vmatmul.mubr.bf16.gmra.mrb[0].mxu0 %v777
      %v824 = vpop.f32.mrb[0].mxu0
      %v825 = vadd.f32 0.0, %v824
      %v826 = vpop.f32.mrb[0].mxu0
      %v827 = vadd.f32 0.0, %v826
      %v828 = vpop.f32.mrb[0].mxu0
      %v829 = vpop.f32.mrb[0].mxu0
      %830 = vdwg.mxu0
      %831 = vmatprep.subr.bf16.mxu0 %v741
      %832 = vmatpush1.bf16.msra.mxu0 %v740
      %833 = vmatprep.subr.bf16.mxu0 %v745
      %834 = vmatpush1.bf16.msra.mxu0 %v744
      %835 = vmatprep.subr.bf16.mxu0 %v749
      %836 = vmatpush1.bf16.msra.mxu0 %v748
      %837 = vmatprep.subr.bf16.mxu0 %v753
      %838 = vmatpush1.bf16.msra.mxu0 %v752
      %839 = vmatprep.subr.bf16.mxu0 %v757
      %840 = vmatpush1.bf16.msra.mxu0 %v756
      %841 = vmatprep.subr.bf16.mxu0 %v761
      %842 = vmatpush1.bf16.msra.mxu0 %v760
      %843 = vmatprep.subr.bf16.mxu0 %v765
      %844 = vmatpush1.bf16.msra.mxu0 %v764
      %845 = vmatprep.subr.bf16.mxu0 %v769
      %846 = vmatpush1.bf16.msra.mxu0 %v768
      %847 = vmatprep.subr.bf16.mxu0 0
      %848 = vmatpush1.bf16.msra.mxu0 0
      %849 = vmatprep.subr.bf16.mxu0 0
      %850 = vmatpush1.bf16.msra.mxu0 0
      %851 = vmatprep.subr.bf16.mxu0 0
      %852 = vmatpush1.bf16.msra.mxu0 0
      %853 = vmatprep.subr.bf16.mxu0 0
      %854 = vmatpush1.bf16.msra.mxu0 0
      %855 = vmatprep.subr.bf16.mxu0 0
      %856 = vmatpush1.bf16.msra.mxu0 0
      %857 = vmatprep.subr.bf16.mxu0 0
      %858 = vmatpush1.bf16.msra.mxu0 0
      %859 = vmatprep.subr.bf16.mxu0 0
      %860 = vmatpush1.bf16.msra.mxu0 0
      %861 = vmatprep.subr.bf16.mxu0 0
      %862 = vmatpush1.bf16.msra.mxu0 0
      %863 = vmatprep.mubr.bf16.mxu0 0
      %864 = vmatmul.mubr.bf16.gmra.mrb[0].mxu0 %v776
      %v865 = vpop.f32.mrb[0].mxu0
      %v866 = vadd.f32 0.0, %v865
      %v867 = vpop.f32.mrb[0].mxu0
      %v868 = vadd.f32 0.0, %v867
      %v869 = vpop.f32.mrb[0].mxu0
      %v870 = vadd.f32 0.0, %v869
      %v871 = vpop.f32.mrb[0].mxu0
      %v872 = vadd.f32 0.0, %v871
      %873 = vmatprep.mubr.bf16.mxu0 0
      %874 = vmatmul.mubr.bf16.gmra.mrb[0].mxu0 %v777
      %v875 = vpop.f32.mrb[0].mxu0
      %v876 = vadd.f32 0.0, %v875
      %v877 = vpop.f32.mrb[0].mxu0
      %v878 = vadd.f32 0.0, %v877
      %v879 = vpop.f32.mrb[0].mxu0
      %v880 = vpop.f32.mrb[0].mxu0
      %881 = vdwg.mxu0
      %v882 = vlaneseq
      %v883 = vshrl.u32 %v882, 7
      %v884 = vsub.s32 0, %v883
      %v885 = vrot.slane %v410, %v884
      %v886 = vlaneseq
      %v887 = vshrl.u32 %v886, 7
      %v888 = vsub.s32 0, %v887
      %v889 = vrot.slane %v411, %v888
      %v890 = vlaneseq
      %v891 = vshrl.u32 %v890, 7
      %v892 = vsub.s32 0, %v891
      %v893 = vrot.slane %v412, %v892
      %v894 = vlaneseq
      %v895 = vshrl.u32 %v894, 7
      %v896 = vsub.s32 0, %v895
      %v897 = vrot.slane %v413, %v896
      %v898 = vmul.f32 %v885, %v815
      %v899 = vmul.f32 %v889, %v817
      %v900 = vmul.f32 %v893, %v866
      %v901 = vmul.f32 %v897, %v868
      %v902 = vadd.f32 %v898, 0.0
      %v903 = vadd.f32 %v899, 0.0
      %v904 = vadd.f32 %v900, 0.0
      %v905 = vadd.f32 %v901, 0.0
      %v906 = vlaneseq
      %v907 = vshrl.u32 %v906, 7
      %v908 = vsub.s32 0, %v907
      %v909 = vrot.slane %v422, %v908
      %v910 = vlaneseq
      %v911 = vshrl.u32 %v910, 7
      %v912 = vsub.s32 0, %v911
      %v913 = vrot.slane %v423, %v912
      %v914 = vlaneseq
      %v915 = vshrl.u32 %v914, 7
      %v916 = vsub.s32 0, %v915
      %v917 = vrot.slane %v424, %v916
      %v918 = vlaneseq
      %v919 = vshrl.u32 %v918, 7
      %v920 = vsub.s32 0, %v919
      %v921 = vrot.slane %v425, %v920
      %v922 = vmul.f32 %v909, %v819
      %v923 = vmul.f32 %v913, %v821
      %v924 = vmul.f32 %v917, %v870
      %v925 = vmul.f32 %v921, %v872
      %v926 = vadd.f32 %v902, %v922
      %v927 = vadd.f32 %v903, %v923
      %v928 = vadd.f32 %v904, %v924
      %v929 = vadd.f32 %v905, %v925
      %v930 = vlaneseq
      %v931 = vshrl.u32 %v930, 7
      %v932 = vsub.s32 0, %v931
      %v933 = vrot.slane %v434, %v932
      %v934 = vlaneseq
      %v935 = vshrl.u32 %v934, 7
      %v936 = vsub.s32 0, %v935
      %v937 = vrot.slane %v435, %v936
      %v938 = vlaneseq
      %v939 = vshrl.u32 %v938, 7
      %v940 = vsub.s32 0, %v939
      %v941 = vrot.slane %v436, %v940
      %v942 = vlaneseq
      %v943 = vshrl.u32 %v942, 7
      %v944 = vsub.s32 0, %v943
      %v945 = vrot.slane %v437, %v944
      %v946 = vmul.f32 %v933, %v825
      %v947 = vmul.f32 %v937, %v827
      %v948 = vmul.f32 %v941, %v876
      %v949 = vmul.f32 %v945, %v878
      %v950 = vadd.f32 %v926, %v946
      %v951 = vadd.f32 %v927, %v947
      %v952 = vadd.f32 %v928, %v948
      %v953 = vadd.f32 %v929, %v949
      %v954 = vlaneseq
      %v955 = vshrl.u32 %v954, 7
      %v956 = vsub.s32 1, %v955
      %v957 = vrot.slane %v506, %v956
      %v958 = vlaneseq
      %v959 = vshrl.u32 %v958, 7
      %v960 = vsub.s32 1, %v959
      %v961 = vrot.slane %v507, %v960
      %v962 = vlaneseq
      %v963 = vshrl.u32 %v962, 7
      %v964 = vsub.s32 1, %v963
      %v965 = vrot.slane %v508, %v964
      %v966 = vlaneseq
      %v967 = vshrl.u32 %v966, 7
      %v968 = vsub.s32 1, %v967
      %v969 = vrot.slane %v509, %v968
      %vm970 = vcmp.eq.s32.totalorder %v511, %v957
      %vm971 = vcmp.eq.s32.totalorder %v511, %v961
      %vm972 = vcmp.eq.s32.totalorder %v511, %v965
      %vm973 = vcmp.eq.s32.totalorder %v511, %v969
      %vm974 = vcmp.eq.s32.totalorder %v512, %v957
      %vm975 = vcmp.eq.s32.totalorder %v512, %v961
      %vm976 = vcmp.eq.s32.totalorder %v512, %v965
      %vm977 = vcmp.eq.s32.totalorder %v512, %v969
      %vm978 = vcmp.eq.s32.totalorder %v513, %v957
      %vm979 = vcmp.eq.s32.totalorder %v513, %v961
      %vm980 = vcmp.eq.s32.totalorder %v513, %v965
      %vm981 = vcmp.eq.s32.totalorder %v513, %v969
      %vm982 = vcmp.eq.s32.totalorder %v514, %v957
      %vm983 = vcmp.eq.s32.totalorder %v514, %v961
      %vm984 = vcmp.eq.s32.totalorder %v514, %v965
      %vm985 = vcmp.eq.s32.totalorder %v514, %v969
      %vm986 = vcmp.eq.s32.totalorder %v515, %v957
      %vm987 = vcmp.eq.s32.totalorder %v515, %v961
      %vm988 = vcmp.eq.s32.totalorder %v515, %v965
      %vm989 = vcmp.eq.s32.totalorder %v515, %v969
      %vm990 = vcmp.eq.s32.totalorder %v516, %v957
      %vm991 = vcmp.eq.s32.totalorder %v516, %v961
      %vm992 = vcmp.eq.s32.totalorder %v516, %v965
      %vm993 = vcmp.eq.s32.totalorder %v516, %v969
      %vm994 = vcmp.eq.s32.totalorder %v517, %v957
      %vm995 = vcmp.eq.s32.totalorder %v517, %v961
      %vm996 = vcmp.eq.s32.totalorder %v517, %v965
      %vm997 = vcmp.eq.s32.totalorder %v517, %v969
      %vm998 = vcmp.eq.s32.totalorder %v518, %v957
      %vm999 = vcmp.eq.s32.totalorder %v518, %v961
      %vm1000 = vcmp.eq.s32.totalorder %v518, %v965
      %vm1001 = vcmp.eq.s32.totalorder %v518, %v969
      %vm1002 = vcmp.eq.s32.totalorder %v519, %v957
      %vm1003 = vcmp.eq.s32.totalorder %v519, %v961
      %vm1004 = vcmp.eq.s32.totalorder %v519, %v965
      %vm1005 = vcmp.eq.s32.totalorder %v519, %v969
      %vm1006 = vcmp.eq.s32.totalorder %v520, %v957
      %vm1007 = vcmp.eq.s32.totalorder %v520, %v961
      %vm1008 = vcmp.eq.s32.totalorder %v520, %v965
      %vm1009 = vcmp.eq.s32.totalorder %v520, %v969
      %vm1010 = vcmp.eq.s32.totalorder %v521, %v957
      %vm1011 = vcmp.eq.s32.totalorder %v521, %v961
      %vm1012 = vcmp.eq.s32.totalorder %v521, %v965
      %vm1013 = vcmp.eq.s32.totalorder %v521, %v969
      %vm1014 = vcmp.eq.s32.totalorder %v522, %v957
      %vm1015 = vcmp.eq.s32.totalorder %v522, %v961
      %vm1016 = vcmp.eq.s32.totalorder %v522, %v965
      %vm1017 = vcmp.eq.s32.totalorder %v522, %v969
      %vm1018 = vcmp.eq.s32.totalorder %v523, %v957
      %vm1019 = vcmp.eq.s32.totalorder %v523, %v961
      %vm1020 = vcmp.eq.s32.totalorder %v523, %v965
      %vm1021 = vcmp.eq.s32.totalorder %v523, %v969
      %vm1022 = vcmp.eq.s32.totalorder %v524, %v957
      %vm1023 = vcmp.eq.s32.totalorder %v524, %v961
      %vm1024 = vcmp.eq.s32.totalorder %v524, %v965
      %vm1025 = vcmp.eq.s32.totalorder %v524, %v969
      %vm1026 = vcmp.eq.s32.totalorder %v525, %v957
      %vm1027 = vcmp.eq.s32.totalorder %v525, %v961
      %vm1028 = vcmp.eq.s32.totalorder %v525, %v965
      %vm1029 = vcmp.eq.s32.totalorder %v525, %v969
      %vm1030 = vcmp.eq.s32.totalorder %v526, %v957
      %vm1031 = vcmp.eq.s32.totalorder %v526, %v961
      %vm1032 = vcmp.eq.s32.totalorder %v526, %v965
      %vm1033 = vcmp.eq.s32.totalorder %v526, %v969
      %v1034 = vsel %vm970, 1, 0
      %v1035 = vsel %vm971, 1, 0
      %v1036 = vsel %vm972, 1, 0
      %v1037 = vsel %vm973, 1, 0
      %v1038 = vsel %vm974, 1, 0
      %v1039 = vsel %vm975, 1, 0
      %v1040 = vsel %vm976, 1, 0
      %v1041 = vsel %vm977, 1, 0
      %v1042 = vsel %vm978, 1, 0
      %v1043 = vsel %vm979, 1, 0
      %v1044 = vsel %vm980, 1, 0
      %v1045 = vsel %vm981, 1, 0
      %v1046 = vsel %vm982, 1, 0
      %v1047 = vsel %vm983, 1, 0
      %v1048 = vsel %vm984, 1, 0
      %v1049 = vsel %vm985, 1, 0
      %v1050 = vsel %vm986, 1, 0
      %v1051 = vsel %vm987, 1, 0
      %v1052 = vsel %vm988, 1, 0
      %v1053 = vsel %vm989, 1, 0
      %v1054 = vsel %vm990, 1, 0
      %v1055 = vsel %vm991, 1, 0
      %v1056 = vsel %vm992, 1, 0
      %v1057 = vsel %vm993, 1, 0
      %v1058 = vsel %vm994, 1, 0
      %v1059 = vsel %vm995, 1, 0
      %v1060 = vsel %vm996, 1, 0
      %v1061 = vsel %vm997, 1, 0
      %v1062 = vsel %vm998, 1, 0
      %v1063 = vsel %vm999, 1, 0
      %v1064 = vsel %vm1000, 1, 0
      %v1065 = vsel %vm1001, 1, 0
      %v1066 = vsel %vm1002, 1, 0
      %v1067 = vsel %vm1003, 1, 0
      %v1068 = vsel %vm1004, 1, 0
      %v1069 = vsel %vm1005, 1, 0
      %v1070 = vsel %vm1006, 1, 0
      %v1071 = vsel %vm1007, 1, 0
      %v1072 = vsel %vm1008, 1, 0
      %v1073 = vsel %vm1009, 1, 0
      %v1074 = vsel %vm1010, 1, 0
      %v1075 = vsel %vm1011, 1, 0
      %v1076 = vsel %vm1012, 1, 0
      %v1077 = vsel %vm1013, 1, 0
      %v1078 = vsel %vm1014, 1, 0
      %v1079 = vsel %vm1015, 1, 0
      %v1080 = vsel %vm1016, 1, 0
      %v1081 = vsel %vm1017, 1, 0
      %v1082 = vsel %vm1018, 1, 0
      %v1083 = vsel %vm1019, 1, 0
      %v1084 = vsel %vm1020, 1, 0
      %v1085 = vsel %vm1021, 1, 0
      %v1086 = vsel %vm1022, 1, 0
      %v1087 = vsel %vm1023, 1, 0
      %v1088 = vsel %vm1024, 1, 0
      %v1089 = vsel %vm1025, 1, 0
      %v1090 = vsel %vm1026, 1, 0
      %v1091 = vsel %vm1027, 1, 0
      %v1092 = vsel %vm1028, 1, 0
      %v1093 = vsel %vm1029, 1, 0
      %v1094 = vsel %vm1030, 1, 0
      %v1095 = vsel %vm1031, 1, 0
      %v1096 = vsel %vm1032, 1, 0
      %v1097 = vsel %vm1033, 1, 0
      %v1098 = vcvt.s32.f32 %v1034
      %v1099 = vcvt.s32.f32 %v1035
      %v1100 = vcvt.s32.f32 %v1036
      %v1101 = vcvt.s32.f32 %v1037
      %v1102 = vcvt.s32.f32 %v1038
      %v1103 = vcvt.s32.f32 %v1039
      %v1104 = vcvt.s32.f32 %v1040
      %v1105 = vcvt.s32.f32 %v1041
      %v1106 = vcvt.s32.f32 %v1042
      %v1107 = vcvt.s32.f32 %v1043
      %v1108 = vcvt.s32.f32 %v1044
      %v1109 = vcvt.s32.f32 %v1045
      %v1110 = vcvt.s32.f32 %v1046
      %v1111 = vcvt.s32.f32 %v1047
      %v1112 = vcvt.s32.f32 %v1048
      %v1113 = vcvt.s32.f32 %v1049
      %v1114 = vcvt.s32.f32 %v1050
      %v1115 = vcvt.s32.f32 %v1051
      %v1116 = vcvt.s32.f32 %v1052
      %v1117 = vcvt.s32.f32 %v1053
      %v1118 = vcvt.s32.f32 %v1054
      %v1119 = vcvt.s32.f32 %v1055
      %v1120 = vcvt.s32.f32 %v1056
      %v1121 = vcvt.s32.f32 %v1057
      %v1122 = vcvt.s32.f32 %v1058
      %v1123 = vcvt.s32.f32 %v1059
      %v1124 = vcvt.s32.f32 %v1060
      %v1125 = vcvt.s32.f32 %v1061
      %v1126 = vcvt.s32.f32 %v1062
      %v1127 = vcvt.s32.f32 %v1063
      %v1128 = vcvt.s32.f32 %v1064
      %v1129 = vcvt.s32.f32 %v1065
      %v1130 = vcvt.s32.f32 %v1066
      %v1131 = vcvt.s32.f32 %v1067
      %v1132 = vcvt.s32.f32 %v1068
      %v1133 = vcvt.s32.f32 %v1069
      %v1134 = vcvt.s32.f32 %v1070
      %v1135 = vcvt.s32.f32 %v1071
      %v1136 = vcvt.s32.f32 %v1072
      %v1137 = vcvt.s32.f32 %v1073
      %v1138 = vcvt.s32.f32 %v1074
      %v1139 = vcvt.s32.f32 %v1075
      %v1140 = vcvt.s32.f32 %v1076
      %v1141 = vcvt.s32.f32 %v1077
      %v1142 = vcvt.s32.f32 %v1078
      %v1143 = vcvt.s32.f32 %v1079
      %v1144 = vcvt.s32.f32 %v1080
      %v1145 = vcvt.s32.f32 %v1081
      %v1146 = vcvt.s32.f32 %v1082
      %v1147 = vcvt.s32.f32 %v1083
      %v1148 = vcvt.s32.f32 %v1084
      %v1149 = vcvt.s32.f32 %v1085
      %v1150 = vcvt.s32.f32 %v1086
      %v1151 = vcvt.s32.f32 %v1087
      %v1152 = vcvt.s32.f32 %v1088
      %v1153 = vcvt.s32.f32 %v1089
      %v1154 = vcvt.s32.f32 %v1090
      %v1155 = vcvt.s32.f32 %v1091
      %v1156 = vcvt.s32.f32 %v1092
      %v1157 = vcvt.s32.f32 %v1093
      %v1158 = vcvt.s32.f32 %v1094
      %v1159 = vcvt.s32.f32 %v1095
      %v1160 = vcvt.s32.f32 %v1096
      %v1161 = vcvt.s32.f32 %v1097
      %v1162 = vpack.c.bf16 %v1102, %v1098
      %v1163 = vpack.c.bf16 %v1103, %v1099
      %v1164 = vpack.c.bf16 %v1104, %v1100
      %v1165 = vpack.c.bf16 %v1105, %v1101
      %v1166 = vpack.c.bf16 %v1110, %v1106
      %v1167 = vpack.c.bf16 %v1111, %v1107
      %v1168 = vpack.c.bf16 %v1112, %v1108
      %v1169 = vpack.c.bf16 %v1113, %v1109
      %v1170 = vpack.c.bf16 %v1118, %v1114
      %v1171 = vpack.c.bf16 %v1119, %v1115
      %v1172 = vpack.c.bf16 %v1120, %v1116
      %v1173 = vpack.c.bf16 %v1121, %v1117
      %v1174 = vpack.c.bf16 %v1126, %v1122
      %v1175 = vpack.c.bf16 %v1127, %v1123
      %v1176 = vpack.c.bf16 %v1128, %v1124
      %v1177 = vpack.c.bf16 %v1129, %v1125
      %v1178 = vpack.c.bf16 %v1134, %v1130
      %v1179 = vpack.c.bf16 %v1135, %v1131
      %v1180 = vpack.c.bf16 %v1136, %v1132
      %v1181 = vpack.c.bf16 %v1137, %v1133
      %v1182 = vpack.c.bf16 %v1142, %v1138
      %v1183 = vpack.c.bf16 %v1143, %v1139
      %v1184 = vpack.c.bf16 %v1144, %v1140
      %v1185 = vpack.c.bf16 %v1145, %v1141
      %v1186 = vpack.c.bf16 %v1150, %v1146
      %v1187 = vpack.c.bf16 %v1151, %v1147
      %v1188 = vpack.c.bf16 %v1152, %v1148
      %v1189 = vpack.c.bf16 %v1153, %v1149
      %v1190 = vpack.c.bf16 %v1158, %v1154
      %v1191 = vpack.c.bf16 %v1159, %v1155
      %v1192 = vpack.c.bf16 %v1160, %v1156
      %v1193 = vpack.c.bf16 %v1161, %v1157
      %1194 = vmatprep.subr.bf16.mxu0 %v1163
      %1195 = vmatpush1.bf16.msra.mxu0 %v1162
      %1196 = vmatprep.subr.bf16.mxu0 %v1167
      %1197 = vmatpush1.bf16.msra.mxu0 %v1166
      %1198 = vmatprep.subr.bf16.mxu0 %v1171
      %1199 = vmatpush1.bf16.msra.mxu0 %v1170
      %1200 = vmatprep.subr.bf16.mxu0 %v1175
      %1201 = vmatpush1.bf16.msra.mxu0 %v1174
      %1202 = vmatprep.subr.bf16.mxu0 %v1179
      %1203 = vmatpush1.bf16.msra.mxu0 %v1178
      %1204 = vmatprep.subr.bf16.mxu0 %v1183
      %1205 = vmatpush1.bf16.msra.mxu0 %v1182
      %1206 = vmatprep.subr.bf16.mxu0 %v1187
      %1207 = vmatpush1.bf16.msra.mxu0 %v1186
      %1208 = vmatprep.subr.bf16.mxu0 %v1191
      %1209 = vmatpush1.bf16.msra.mxu0 %v1190
      %1210 = vmatprep.subr.bf16.mxu0 0
      %1211 = vmatpush1.bf16.msra.mxu0 0
      %1212 = vmatprep.subr.bf16.mxu0 0
      %1213 = vmatpush1.bf16.msra.mxu0 0
      %1214 = vmatprep.subr.bf16.mxu0 0
      %1215 = vmatpush1.bf16.msra.mxu0 0
      %1216 = vmatprep.subr.bf16.mxu0 0
      %1217 = vmatpush1.bf16.msra.mxu0 0
      %1218 = vmatprep.subr.bf16.mxu0 0
      %1219 = vmatpush1.bf16.msra.mxu0 0
      %1220 = vmatprep.subr.bf16.mxu0 0
      %1221 = vmatpush1.bf16.msra.mxu0 0
      %1222 = vmatprep.subr.bf16.mxu0 0
      %1223 = vmatpush1.bf16.msra.mxu0 0
      %1224 = vmatprep.subr.bf16.mxu0 0
      %1225 = vmatpush1.bf16.msra.mxu0 0
      %1226 = vmatprep.mubr.bf16.mxu0 0
      %1227 = vmatmul.mubr.bf16.gmra.mrb[0].mxu0 %v776
      %v1228 = vpop.f32.mrb[0].mxu0
      %v1229 = vadd.f32 0.0, %v1228
      %v1230 = vpop.f32.mrb[0].mxu0
      %v1231 = vadd.f32 0.0, %v1230
      %v1232 = vpop.f32.mrb[0].mxu0
      %v1233 = vadd.f32 0.0, %v1232
      %v1234 = vpop.f32.mrb[0].mxu0
      %v1235 = vadd.f32 0.0, %v1234
      %1236 = vmatprep.mubr.bf16.mxu0 0
      %1237 = vmatmul.mubr.bf16.gmra.mrb[0].mxu0 %v777
      %v1238 = vpop.f32.mrb[0].mxu0
      %v1239 = vadd.f32 0.0, %v1238
      %v1240 = vpop.f32.mrb[0].mxu0
      %v1241 = vadd.f32 0.0, %v1240
      %v1242 = vpop.f32.mrb[0].mxu0
      %v1243 = vpop.f32.mrb[0].mxu0
      %1244 = vdwg.mxu0
      %1245 = vmatprep.subr.bf16.mxu0 %v1165
      %1246 = vmatpush1.bf16.msra.mxu0 %v1164
      %1247 = vmatprep.subr.bf16.mxu0 %v1169
      %1248 = vmatpush1.bf16.msra.mxu0 %v1168
      %1249 = vmatprep.subr.bf16.mxu0 %v1173
      %1250 = vmatpush1.bf16.msra.mxu0 %v1172
      %1251 = vmatprep.subr.bf16.mxu0 %v1177
      %1252 = vmatpush1.bf16.msra.mxu0 %v1176
      %1253 = vmatprep.subr.bf16.mxu0 %v1181
      %1254 = vmatpush1.bf16.msra.mxu0 %v1180
      %1255 = vmatprep.subr.bf16.mxu0 %v1185
      %1256 = vmatpush1.bf16.msra.mxu0 %v1184
      %1257 = vmatprep.subr.bf16.mxu0 %v1189
      %1258 = vmatpush1.bf16.msra.mxu0 %v1188
      %1259 = vmatprep.subr.bf16.mxu0 %v1193
      %1260 = vmatpush1.bf16.msra.mxu0 %v1192
      %1261 = vmatprep.subr.bf16.mxu0 0
      %1262 = vmatpush1.bf16.msra.mxu0 0
      %1263 = vmatprep.subr.bf16.mxu0 0
      %1264 = vmatpush1.bf16.msra.mxu0 0
      %1265 = vmatprep.subr.bf16.mxu0 0
      %1266 = vmatpush1.bf16.msra.mxu0 0
      %1267 = vmatprep.subr.bf16.mxu0 0
      %1268 = vmatpush1.bf16.msra.mxu0 0
      %1269 = vmatprep.subr.bf16.mxu0 0
      %1270 = vmatpush1.bf16.msra.mxu0 0
      %1271 = vmatprep.subr.bf16.mxu0 0
      %1272 = vmatpush1.bf16.msra.mxu0 0
      %1273 = vmatprep.subr.bf16.mxu0 0
      %1274 = vmatpush1.bf16.msra.mxu0 0
      %1275 = vmatprep.subr.bf16.mxu0 0
      %1276 = vmatpush1.bf16.msra.mxu0 0
      %1277 = vmatprep.mubr.bf16.mxu0 0
      %1278 = vmatmul.mubr.bf16.gmra.mrb[0].mxu0 %v776
      %v1279 = vpop.f32.mrb[0].mxu0
      %v1280 = vadd.f32 0.0, %v1279
      %v1281 = vpop.f32.mrb[0].mxu0
      %v1282 = vadd.f32 0.0, %v1281
      %v1283 = vpop.f32.mrb[0].mxu0
      %v1284 = vadd.f32 0.0, %v1283
      %v1285 = vpop.f32.mrb[0].mxu0
      %v1286 = vadd.f32 0.0, %v1285
      %1287 = vmatprep.mubr.bf16.mxu0 0
      %1288 = vmatmul.mubr.bf16.gmra.mrb[0].mxu0 %v777
      %v1289 = vpop.f32.mrb[0].mxu0
      %v1290 = vadd.f32 0.0, %v1289
      %v1291 = vpop.f32.mrb[0].mxu0
      %v1292 = vadd.f32 0.0, %v1291
      %v1293 = vpop.f32.mrb[0].mxu0
      %v1294 = vpop.f32.mrb[0].mxu0
      %1295 = vdwg.mxu0
      %v1296 = vlaneseq
      %v1297 = vshrl.u32 %v1296, 7
      %v1298 = vsub.s32 1, %v1297
      %v1299 = vrot.slane %v434, %v1298
      %v1300 = vlaneseq
      %v1301 = vshrl.u32 %v1300, 7
      %v1302 = vsub.s32 1, %v1301
      %v1303 = vrot.slane %v435, %v1302
      %v1304 = vlaneseq
      %v1305 = vshrl.u32 %v1304, 7
      %v1306 = vsub.s32 1, %v1305
      %v1307 = vrot.slane %v436, %v1306
      %v1308 = vlaneseq
      %v1309 = vshrl.u32 %v1308, 7
      %v1310 = vsub.s32 1, %v1309
      %v1311 = vrot.slane %v437, %v1310
      %v1312 = vmul.f32 %v1299, %v1229
      %v1313 = vmul.f32 %v1303, %v1231
      %v1314 = vmul.f32 %v1307, %v1280
      %v1315 = vmul.f32 %v1311, %v1282
      %v1316 = vadd.f32 %v950, %v1312
      %v1317 = vadd.f32 %v951, %v1313
      %v1318 = vadd.f32 %v952, %v1314
      %v1319 = vadd.f32 %v953, %v1315
      %v1320 = vlaneseq
      %v1321 = vshrl.u32 %v1320, 7
      %v1322 = vsub.s32 1, %v1321
      %v1323 = vrot.slane %v450, %v1322
      %v1324 = vlaneseq
      %v1325 = vshrl.u32 %v1324, 7
      %v1326 = vsub.s32 1, %v1325
      %v1327 = vrot.slane %v451, %v1326
      %v1328 = vlaneseq
      %v1329 = vshrl.u32 %v1328, 7
      %v1330 = vsub.s32 1, %v1329
      %v1331 = vrot.slane %v452, %v1330
      %v1332 = vlaneseq
      %v1333 = vshrl.u32 %v1332, 7
      %v1334 = vsub.s32 1, %v1333
      %v1335 = vrot.slane %v453, %v1334
      %v1336 = vmul.f32 %v1323, %v1233
      %v1337 = vmul.f32 %v1327, %v1235
      %v1338 = vmul.f32 %v1331, %v1284
      %v1339 = vmul.f32 %v1335, %v1286
      %v1340 = vadd.f32 %v1316, %v1336
      %v1341 = vadd.f32 %v1317, %v1337
      %v1342 = vadd.f32 %v1318, %v1338
      %v1343 = vadd.f32 %v1319, %v1339
      %v1344 = vlaneseq
      %v1345 = vshrl.u32 %v1344, 7
      %v1346 = vsub.s32 1, %v1345
      %v1347 = vrot.slane %v454, %v1346
      %v1348 = vlaneseq
      %v1349 = vshrl.u32 %v1348, 7
      %v1350 = vsub.s32 1, %v1349
      %v1351 = vrot.slane %v455, %v1350
      %v1352 = vlaneseq
      %v1353 = vshrl.u32 %v1352, 7
      %v1354 = vsub.s32 1, %v1353
      %v1355 = vrot.slane %v456, %v1354
      %v1356 = vlaneseq
      %v1357 = vshrl.u32 %v1356, 7
      %v1358 = vsub.s32 1, %v1357
      %v1359 = vrot.slane %v457, %v1358
      %v1360 = vmul.f32 %v1347, %v1239
      %v1361 = vmul.f32 %v1351, %v1241
      %v1362 = vmul.f32 %v1355, %v1290
      %v1363 = vmul.f32 %v1359, %v1292
      %v1364 = vadd.f32 %v1340, %v1360
      %v1365 = vadd.f32 %v1341, %v1361
      %v1366 = vadd.f32 %v1342, %v1362
      %v1367 = vadd.f32 %v1343, %v1363
      %v1368 = vlaneseq
      %v1369 = vshrl.u32 %v1368, 7
      %v1370 = vsub.s32 2, %v1369
      %v1371 = vrot.slane %v506, %v1370
      %v1372 = vlaneseq
      %v1373 = vshrl.u32 %v1372, 7
      %v1374 = vsub.s32 2, %v1373
      %v1375 = vrot.slane %v507, %v1374
      %v1376 = vlaneseq
      %v1377 = vshrl.u32 %v1376, 7
      %v1378 = vsub.s32 2, %v1377
      %v1379 = vrot.slane %v508, %v1378
      %v1380 = vlaneseq
      %v1381 = vshrl.u32 %v1380, 7
      %v1382 = vsub.s32 2, %v1381
      %v1383 = vrot.slane %v509, %v1382
      %vm1384 = vcmp.eq.s32.totalorder %v511, %v1371
      %vm1385 = vcmp.eq.s32.totalorder %v511, %v1375
      %vm1386 = vcmp.eq.s32.totalorder %v511, %v1379
      %vm1387 = vcmp.eq.s32.totalorder %v511, %v1383
      %vm1388 = vcmp.eq.s32.totalorder %v512, %v1371
      %vm1389 = vcmp.eq.s32.totalorder %v512, %v1375
      %vm1390 = vcmp.eq.s32.totalorder %v512, %v1379
      %vm1391 = vcmp.eq.s32.totalorder %v512, %v1383
      %vm1392 = vcmp.eq.s32.totalorder %v513, %v1371
      %vm1393 = vcmp.eq.s32.totalorder %v513, %v1375
      %vm1394 = vcmp.eq.s32.totalorder %v513, %v1379
      %vm1395 = vcmp.eq.s32.totalorder %v513, %v1383
      %vm1396 = vcmp.eq.s32.totalorder %v514, %v1371
      %vm1397 = vcmp.eq.s32.totalorder %v514, %v1375
      %vm1398 = vcmp.eq.s32.totalorder %v514, %v1379
      %vm1399 = vcmp.eq.s32.totalorder %v514, %v1383
      %vm1400 = vcmp.eq.s32.totalorder %v515, %v1371
      %vm1401 = vcmp.eq.s32.totalorder %v515, %v1375
      %vm1402 = vcmp.eq.s32.totalorder %v515, %v1379
      %vm1403 = vcmp.eq.s32.totalorder %v515, %v1383
      %vm1404 = vcmp.eq.s32.totalorder %v516, %v1371
      %vm1405 = vcmp.eq.s32.totalorder %v516, %v1375
      %vm1406 = vcmp.eq.s32.totalorder %v516, %v1379
      %vm1407 = vcmp.eq.s32.totalorder %v516, %v1383
      %vm1408 = vcmp.eq.s32.totalorder %v517, %v1371
      %vm1409 = vcmp.eq.s32.totalorder %v517, %v1375
      %vm1410 = vcmp.eq.s32.totalorder %v517, %v1379
      %vm1411 = vcmp.eq.s32.totalorder %v517, %v1383
      %vm1412 = vcmp.eq.s32.totalorder %v518, %v1371
      %vm1413 = vcmp.eq.s32.totalorder %v518, %v1375
      %vm1414 = vcmp.eq.s32.totalorder %v518, %v1379
      %vm1415 = vcmp.eq.s32.totalorder %v518, %v1383
      %vm1416 = vcmp.eq.s32.totalorder %v519, %v1371
      %vm1417 = vcmp.eq.s32.totalorder %v519, %v1375
      %vm1418 = vcmp.eq.s32.totalorder %v519, %v1379
      %vm1419 = vcmp.eq.s32.totalorder %v519, %v1383
      %vm1420 = vcmp.eq.s32.totalorder %v520, %v1371
      %vm1421 = vcmp.eq.s32.totalorder %v520, %v1375
      %vm1422 = vcmp.eq.s32.totalorder %v520, %v1379
      %vm1423 = vcmp.eq.s32.totalorder %v520, %v1383
      %vm1424 = vcmp.eq.s32.totalorder %v521, %v1371
      %vm1425 = vcmp.eq.s32.totalorder %v521, %v1375
      %vm1426 = vcmp.eq.s32.totalorder %v521, %v1379
      %vm1427 = vcmp.eq.s32.totalorder %v521, %v1383
      %vm1428 = vcmp.eq.s32.totalorder %v522, %v1371
      %vm1429 = vcmp.eq.s32.totalorder %v522, %v1375
      %vm1430 = vcmp.eq.s32.totalorder %v522, %v1379
      %vm1431 = vcmp.eq.s32.totalorder %v522, %v1383
      %vm1432 = vcmp.eq.s32.totalorder %v523, %v1371
      %vm1433 = vcmp.eq.s32.totalorder %v523, %v1375
      %vm1434 = vcmp.eq.s32.totalorder %v523, %v1379
      %vm1435 = vcmp.eq.s32.totalorder %v523, %v1383
      %vm1436 = vcmp.eq.s32.totalorder %v524, %v1371
      %vm1437 = vcmp.eq.s32.totalorder %v524, %v1375
      %vm1438 = vcmp.eq.s32.totalorder %v524, %v1379
      %vm1439 = vcmp.eq.s32.totalorder %v524, %v1383
      %vm1440 = vcmp.eq.s32.totalorder %v525, %v1371
      %vm1441 = vcmp.eq.s32.totalorder %v525, %v1375
      %vm1442 = vcmp.eq.s32.totalorder %v525, %v1379
      %vm1443 = vcmp.eq.s32.totalorder %v525, %v1383
      %vm1444 = vcmp.eq.s32.totalorder %v526, %v1371
      %vm1445 = vcmp.eq.s32.totalorder %v526, %v1375
      %vm1446 = vcmp.eq.s32.totalorder %v526, %v1379
      %vm1447 = vcmp.eq.s32.totalorder %v526, %v1383
      %v1448 = vsel %vm1384, 1, 0
      %v1449 = vsel %vm1385, 1, 0
      %v1450 = vsel %vm1386, 1, 0
      %v1451 = vsel %vm1387, 1, 0
      %v1452 = vsel %vm1388, 1, 0
      %v1453 = vsel %vm1389, 1, 0
      %v1454 = vsel %vm1390, 1, 0
      %v1455 = vsel %vm1391, 1, 0
      %v1456 = vsel %vm1392, 1, 0
      %v1457 = vsel %vm1393, 1, 0
      %v1458 = vsel %vm1394, 1, 0
      %v1459 = vsel %vm1395, 1, 0
      %v1460 = vsel %vm1396, 1, 0
      %v1461 = vsel %vm1397, 1, 0
      %v1462 = vsel %vm1398, 1, 0
      %v1463 = vsel %vm1399, 1, 0
      %v1464 = vsel %vm1400, 1, 0
      %v1465 = vsel %vm1401, 1, 0
      %v1466 = vsel %vm1402, 1, 0
      %v1467 = vsel %vm1403, 1, 0
      %v1468 = vsel %vm1404, 1, 0
      %v1469 = vsel %vm1405, 1, 0
      %v1470 = vsel %vm1406, 1, 0
      %v1471 = vsel %vm1407, 1, 0
      %v1472 = vsel %vm1408, 1, 0
      %v1473 = vsel %vm1409, 1, 0
      %v1474 = vsel %vm1410, 1, 0
      %v1475 = vsel %vm1411, 1, 0
      %v1476 = vsel %vm1412, 1, 0
      %v1477 = vsel %vm1413, 1, 0
      %v1478 = vsel %vm1414, 1, 0
      %v1479 = vsel %vm1415, 1, 0
      %v1480 = vsel %vm1416, 1, 0
      %v1481 = vsel %vm1417, 1, 0
      %v1482 = vsel %vm1418, 1, 0
      %v1483 = vsel %vm1419, 1, 0
      %v1484 = vsel %vm1420, 1, 0
      %v1485 = vsel %vm1421, 1, 0
      %v1486 = vsel %vm1422, 1, 0
      %v1487 = vsel %vm1423, 1, 0
      %v1488 = vsel %vm1424, 1, 0
      %v1489 = vsel %vm1425, 1, 0
      %v1490 = vsel %vm1426, 1, 0
      %v1491 = vsel %vm1427, 1, 0
      %v1492 = vsel %vm1428, 1, 0
      %v1493 = vsel %vm1429, 1, 0
      %v1494 = vsel %vm1430, 1, 0
      %v1495 = vsel %vm1431, 1, 0
      %v1496 = vsel %vm1432, 1, 0
      %v1497 = vsel %vm1433, 1, 0
      %v1498 = vsel %vm1434, 1, 0
      %v1499 = vsel %vm1435, 1, 0
      %v1500 = vsel %vm1436, 1, 0
      %v1501 = vsel %vm1437, 1, 0
      %v1502 = vsel %vm1438, 1, 0
      %v1503 = vsel %vm1439, 1, 0
      %v1504 = vsel %vm1440, 1, 0
      %v1505 = vsel %vm1441, 1, 0
      %v1506 = vsel %vm1442, 1, 0
      %v1507 = vsel %vm1443, 1, 0
      %v1508 = vsel %vm1444, 1, 0
      %v1509 = vsel %vm1445, 1, 0
      %v1510 = vsel %vm1446, 1, 0
      %v1511 = vsel %vm1447, 1, 0
      %v1512 = vcvt.s32.f32 %v1448
      %v1513 = vcvt.s32.f32 %v1449
      %v1514 = vcvt.s32.f32 %v1450
      %v1515 = vcvt.s32.f32 %v1451
      %v1516 = vcvt.s32.f32 %v1452
      %v1517 = vcvt.s32.f32 %v1453
      %v1518 = vcvt.s32.f32 %v1454
      %v1519 = vcvt.s32.f32 %v1455
      %v1520 = vcvt.s32.f32 %v1456
      %v1521 = vcvt.s32.f32 %v1457
      %v1522 = vcvt.s32.f32 %v1458
      %v1523 = vcvt.s32.f32 %v1459
      %v1524 = vcvt.s32.f32 %v1460
      %v1525 = vcvt.s32.f32 %v1461
      %v1526 = vcvt.s32.f32 %v1462
      %v1527 = vcvt.s32.f32 %v1463
      %v1528 = vcvt.s32.f32 %v1464
      %v1529 = vcvt.s32.f32 %v1465
      %v1530 = vcvt.s32.f32 %v1466
      %v1531 = vcvt.s32.f32 %v1467
      %v1532 = vcvt.s32.f32 %v1468
      %v1533 = vcvt.s32.f32 %v1469
      %v1534 = vcvt.s32.f32 %v1470
      %v1535 = vcvt.s32.f32 %v1471
      %v1536 = vcvt.s32.f32 %v1472
      %v1537 = vcvt.s32.f32 %v1473
      %v1538 = vcvt.s32.f32 %v1474
      %v1539 = vcvt.s32.f32 %v1475
      %v1540 = vcvt.s32.f32 %v1476
      %v1541 = vcvt.s32.f32 %v1477
      %v1542 = vcvt.s32.f32 %v1478
      %v1543 = vcvt.s32.f32 %v1479
      %v1544 = vcvt.s32.f32 %v1480
      %v1545 = vcvt.s32.f32 %v1481
      %v1546 = vcvt.s32.f32 %v1482
      %v1547 = vcvt.s32.f32 %v1483
      %v1548 = vcvt.s32.f32 %v1484
      %v1549 = vcvt.s32.f32 %v1485
      %v1550 = vcvt.s32.f32 %v1486
      %v1551 = vcvt.s32.f32 %v1487
      %v1552 = vcvt.s32.f32 %v1488
      %v1553 = vcvt.s32.f32 %v1489
      %v1554 = vcvt.s32.f32 %v1490
      %v1555 = vcvt.s32.f32 %v1491
      %v1556 = vcvt.s32.f32 %v1492
      %v1557 = vcvt.s32.f32 %v1493
      %v1558 = vcvt.s32.f32 %v1494
      %v1559 = vcvt.s32.f32 %v1495
      %v1560 = vcvt.s32.f32 %v1496
      %v1561 = vcvt.s32.f32 %v1497
      %v1562 = vcvt.s32.f32 %v1498
      %v1563 = vcvt.s32.f32 %v1499
      %v1564 = vcvt.s32.f32 %v1500
      %v1565 = vcvt.s32.f32 %v1501
      %v1566 = vcvt.s32.f32 %v1502
      %v1567 = vcvt.s32.f32 %v1503
      %v1568 = vcvt.s32.f32 %v1504
      %v1569 = vcvt.s32.f32 %v1505
      %v1570 = vcvt.s32.f32 %v1506
      %v1571 = vcvt.s32.f32 %v1507
      %v1572 = vcvt.s32.f32 %v1508
      %v1573 = vcvt.s32.f32 %v1509
      %v1574 = vcvt.s32.f32 %v1510
      %v1575 = vcvt.s32.f32 %v1511
      %v1576 = vpack.c.bf16 %v1516, %v1512
      %v1577 = vpack.c.bf16 %v1517, %v1513
      %v1578 = vpack.c.bf16 %v1518, %v1514
      %v1579 = vpack.c.bf16 %v1519, %v1515
      %v1580 = vpack.c.bf16 %v1524, %v1520
      %v1581 = vpack.c.bf16 %v1525, %v1521
      %v1582 = vpack.c.bf16 %v1526, %v1522
      %v1583 = vpack.c.bf16 %v1527, %v1523
      %v1584 = vpack.c.bf16 %v1532, %v1528
      %v1585 = vpack.c.bf16 %v1533, %v1529
      %v1586 = vpack.c.bf16 %v1534, %v1530
      %v1587 = vpack.c.bf16 %v1535, %v1531
      %v1588 = vpack.c.bf16 %v1540, %v1536
      %v1589 = vpack.c.bf16 %v1541, %v1537
      %v1590 = vpack.c.bf16 %v1542, %v1538
      %v1591 = vpack.c.bf16 %v1543, %v1539
      %v1592 = vpack.c.bf16 %v1548, %v1544
      %v1593 = vpack.c.bf16 %v1549, %v1545
      %v1594 = vpack.c.bf16 %v1550, %v1546
      %v1595 = vpack.c.bf16 %v1551, %v1547
      %v1596 = vpack.c.bf16 %v1556, %v1552
      %v1597 = vpack.c.bf16 %v1557, %v1553
      %v1598 = vpack.c.bf16 %v1558, %v1554
      %v1599 = vpack.c.bf16 %v1559, %v1555
      %v1600 = vpack.c.bf16 %v1564, %v1560
      %v1601 = vpack.c.bf16 %v1565, %v1561
      %v1602 = vpack.c.bf16 %v1566, %v1562
      %v1603 = vpack.c.bf16 %v1567, %v1563
      %v1604 = vpack.c.bf16 %v1572, %v1568
      %v1605 = vpack.c.bf16 %v1573, %v1569
      %v1606 = vpack.c.bf16 %v1574, %v1570
      %v1607 = vpack.c.bf16 %v1575, %v1571
      %1608 = vmatprep.subr.bf16.mxu0 %v1577
      %1609 = vmatpush1.bf16.msra.mxu0 %v1576
      %1610 = vmatprep.subr.bf16.mxu0 %v1581
      %1611 = vmatpush1.bf16.msra.mxu0 %v1580
      %1612 = vmatprep.subr.bf16.mxu0 %v1585
      %1613 = vmatpush1.bf16.msra.mxu0 %v1584
      %1614 = vmatprep.subr.bf16.mxu0 %v1589
      %1615 = vmatpush1.bf16.msra.mxu0 %v1588
      %1616 = vmatprep.subr.bf16.mxu0 %v1593
      %1617 = vmatpush1.bf16.msra.mxu0 %v1592
      %1618 = vmatprep.subr.bf16.mxu0 %v1597
      %1619 = vmatpush1.bf16.msra.mxu0 %v1596
      %1620 = vmatprep.subr.bf16.mxu0 %v1601
      %1621 = vmatpush1.bf16.msra.mxu0 %v1600
      %1622 = vmatprep.subr.bf16.mxu0 %v1605
      %1623 = vmatpush1.bf16.msra.mxu0 %v1604
      %1624 = vmatprep.subr.bf16.mxu0 0
      %1625 = vmatpush1.bf16.msra.mxu0 0
      %1626 = vmatprep.subr.bf16.mxu0 0
      %1627 = vmatpush1.bf16.msra.mxu0 0
      %1628 = vmatprep.subr.bf16.mxu0 0
      %1629 = vmatpush1.bf16.msra.mxu0 0
      %1630 = vmatprep.subr.bf16.mxu0 0
      %1631 = vmatpush1.bf16.msra.mxu0 0
      %1632 = vmatprep.subr.bf16.mxu0 0
      %1633 = vmatpush1.bf16.msra.mxu0 0
      %1634 = vmatprep.subr.bf16.mxu0 0
      %1635 = vmatpush1.bf16.msra.mxu0 0
      %1636 = vmatprep.subr.bf16.mxu0 0
      %1637 = vmatpush1.bf16.msra.mxu0 0
      %1638 = vmatprep.subr.bf16.mxu0 0
      %1639 = vmatpush1.bf16.msra.mxu0 0
      %1640 = vmatprep.mubr.bf16.mxu0 0
      %1641 = vmatmul.mubr.bf16.gmra.mrb[0].mxu0 %v776
      %v1642 = vpop.f32.mrb[0].mxu0
      %v1643 = vadd.f32 0.0, %v1642
      %v1644 = vpop.f32.mrb[0].mxu0
      %v1645 = vadd.f32 0.0, %v1644
      %v1646 = vpop.f32.mrb[0].mxu0
      %v1647 = vadd.f32 0.0, %v1646
      %v1648 = vpop.f32.mrb[0].mxu0
      %v1649 = vadd.f32 0.0, %v1648
      %1650 = vmatprep.mubr.bf16.mxu0 0
      %1651 = vmatmul.mubr.bf16.gmra.mrb[0].mxu0 %v777
      %v1652 = vpop.f32.mrb[0].mxu0
      %v1653 = vadd.f32 0.0, %v1652
      %v1654 = vpop.f32.mrb[0].mxu0
      %v1655 = vadd.f32 0.0, %v1654
      %v1656 = vpop.f32.mrb[0].mxu0
      %v1657 = vpop.f32.mrb[0].mxu0
      %1658 = vdwg.mxu0
      %1659 = vmatprep.subr.bf16.mxu0 %v1579
      %1660 = vmatpush1.bf16.msra.mxu0 %v1578
      %1661 = vmatprep.subr.bf16.mxu0 %v1583
      %1662 = vmatpush1.bf16.msra.mxu0 %v1582
      %1663 = vmatprep.subr.bf16.mxu0 %v1587
      %1664 = vmatpush1.bf16.msra.mxu0 %v1586
      %1665 = vmatprep.subr.bf16.mxu0 %v1591
      %1666 = vmatpush1.bf16.msra.mxu0 %v1590
      %1667 = vmatprep.subr.bf16.mxu0 %v1595
      %1668 = vmatpush1.bf16.msra.mxu0 %v1594
      %1669 = vmatprep.subr.bf16.mxu0 %v1599
      %1670 = vmatpush1.bf16.msra.mxu0 %v1598
      %1671 = vmatprep.subr.bf16.mxu0 %v1603
      %1672 = vmatpush1.bf16.msra.mxu0 %v1602
      %1673 = vmatprep.subr.bf16.mxu0 %v1607
      %1674 = vmatpush1.bf16.msra.mxu0 %v1606
      %1675 = vmatprep.subr.bf16.mxu0 0
      %1676 = vmatpush1.bf16.msra.mxu0 0
      %1677 = vmatprep.subr.bf16.mxu0 0
      %1678 = vmatpush1.bf16.msra.mxu0 0
      %1679 = vmatprep.subr.bf16.mxu0 0
      %1680 = vmatpush1.bf16.msra.mxu0 0
      %1681 = vmatprep.subr.bf16.mxu0 0
      %1682 = vmatpush1.bf16.msra.mxu0 0
      %1683 = vmatprep.subr.bf16.mxu0 0
      %1684 = vmatpush1.bf16.msra.mxu0 0
      %1685 = vmatprep.subr.bf16.mxu0 0
      %1686 = vmatpush1.bf16.msra.mxu0 0
      %1687 = vmatprep.subr.bf16.mxu0 0
      %1688 = vmatpush1.bf16.msra.mxu0 0
      %1689 = vmatprep.subr.bf16.mxu0 0
      %1690 = vmatpush1.bf16.msra.mxu0 0
      %1691 = vmatprep.mubr.bf16.mxu0 0
      %1692 = vmatmul.mubr.bf16.gmra.mrb[0].mxu0 %v776
      %v1693 = vpop.f32.mrb[0].mxu0
      %v1694 = vadd.f32 0.0, %v1693
      %v1695 = vpop.f32.mrb[0].mxu0
      %v1696 = vadd.f32 0.0, %v1695
      %v1697 = vpop.f32.mrb[0].mxu0
      %v1698 = vadd.f32 0.0, %v1697
      %v1699 = vpop.f32.mrb[0].mxu0
      %v1700 = vadd.f32 0.0, %v1699
      %1701 = vmatprep.mubr.bf16.mxu0 0
      %1702 = vmatmul.mubr.bf16.gmra.mrb[0].mxu0 %v777
      %v1703 = vpop.f32.mrb[0].mxu0
      %v1704 = vadd.f32 0.0, %v1703
      %v1705 = vpop.f32.mrb[0].mxu0
      %v1706 = vadd.f32 0.0, %v1705
      %v1707 = vpop.f32.mrb[0].mxu0
      %v1708 = vpop.f32.mrb[0].mxu0
      %1709 = vdwg.mxu0
      %v1710 = vlaneseq
      %v1711 = vshrl.u32 %v1710, 7
      %v1712 = vsub.s32 2, %v1711
      %v1713 = vrot.slane %v454, %v1712
      %v1714 = vlaneseq
      %v1715 = vshrl.u32 %v1714, 7
      %v1716 = vsub.s32 2, %v1715
      %v1717 = vrot.slane %v455, %v1716
      %v1718 = vlaneseq
      %v1719 = vshrl.u32 %v1718, 7
      %v1720 = vsub.s32 2, %v1719
      %v1721 = vrot.slane %v456, %v1720
      %v1722 = vlaneseq
      %v1723 = vshrl.u32 %v1722, 7
      %v1724 = vsub.s32 2, %v1723
      %v1725 = vrot.slane %v457, %v1724
      %v1726 = vmul.f32 %v1713, %v1643
      %v1727 = vmul.f32 %v1717, %v1645
      %v1728 = vmul.f32 %v1721, %v1694
      %v1729 = vmul.f32 %v1725, %v1696
      %v1730 = vadd.f32 %v1364, %v1726
      %v1731 = vadd.f32 %v1365, %v1727
      %v1732 = vadd.f32 %v1366, %v1728
      %v1733 = vadd.f32 %v1367, %v1729
      %v1734 = vlaneseq
      %v1735 = vshrl.u32 %v1734, 7
      %v1736 = vsub.s32 2, %v1735
      %v1737 = vrot.slane %v466, %v1736
      %v1738 = vlaneseq
      %v1739 = vshrl.u32 %v1738, 7
      %v1740 = vsub.s32 2, %v1739
      %v1741 = vrot.slane %v467, %v1740
      %v1742 = vlaneseq
      %v1743 = vshrl.u32 %v1742, 7
      %v1744 = vsub.s32 2, %v1743
      %v1745 = vrot.slane %v468, %v1744
      %v1746 = vlaneseq
      %v1747 = vshrl.u32 %v1746, 7
      %v1748 = vsub.s32 2, %v1747
      %v1749 = vrot.slane %v469, %v1748
      %v1750 = vmul.f32 %v1737, %v1647
      %v1751 = vmul.f32 %v1741, %v1649
      %v1752 = vmul.f32 %v1745, %v1698
      %v1753 = vmul.f32 %v1749, %v1700
      %v1754 = vadd.f32 %v1730, %v1750
      %v1755 = vadd.f32 %v1731, %v1751
      %v1756 = vadd.f32 %v1732, %v1752
      %v1757 = vadd.f32 %v1733, %v1753
      %v1758 = vlaneseq
      %v1759 = vshrl.u32 %v1758, 7
      %v1760 = vsub.s32 2, %v1759
      %v1761 = vrot.slane %v478, %v1760
      %v1762 = vlaneseq
      %v1763 = vshrl.u32 %v1762, 7
      %v1764 = vsub.s32 2, %v1763
      %v1765 = vrot.slane %v479, %v1764
      %v1766 = vlaneseq
      %v1767 = vshrl.u32 %v1766, 7
      %v1768 = vsub.s32 2, %v1767
      %v1769 = vrot.slane %v480, %v1768
      %v1770 = vlaneseq
      %v1771 = vshrl.u32 %v1770, 7
      %v1772 = vsub.s32 2, %v1771
      %v1773 = vrot.slane %v481, %v1772
      %v1774 = vmul.f32 %v1761, %v1653
      %v1775 = vmul.f32 %v1765, %v1655
      %v1776 = vmul.f32 %v1769, %v1704
      %v1777 = vmul.f32 %v1773, %v1706
      %v1778 = vadd.f32 %v1754, %v1774
      %v1779 = vadd.f32 %v1755, %v1775
      %v1780 = vadd.f32 %v1756, %v1776
      %v1781 = vadd.f32 %v1757, %v1777
      %v1782 = vlaneseq
      %v1783 = vshrl.u32 %v1782, 7
      %v1784 = vsub.s32 3, %v1783
      %v1785 = vrot.slane %v506, %v1784
      %v1786 = vlaneseq
      %v1787 = vshrl.u32 %v1786, 7
      %v1788 = vsub.s32 3, %v1787
      %v1789 = vrot.slane %v507, %v1788
      %v1790 = vlaneseq
      %v1791 = vshrl.u32 %v1790, 7
      %v1792 = vsub.s32 3, %v1791
      %v1793 = vrot.slane %v508, %v1792
      %v1794 = vlaneseq
      %v1795 = vshrl.u32 %v1794, 7
      %v1796 = vsub.s32 3, %v1795
      %v1797 = vrot.slane %v509, %v1796
      %vm1798 = vcmp.eq.s32.totalorder %v511, %v1785
      %vm1799 = vcmp.eq.s32.totalorder %v511, %v1789
      %vm1800 = vcmp.eq.s32.totalorder %v511, %v1793
      %vm1801 = vcmp.eq.s32.totalorder %v511, %v1797
      %vm1802 = vcmp.eq.s32.totalorder %v512, %v1785
      %vm1803 = vcmp.eq.s32.totalorder %v512, %v1789
      %vm1804 = vcmp.eq.s32.totalorder %v512, %v1793
      %vm1805 = vcmp.eq.s32.totalorder %v512, %v1797
      %vm1806 = vcmp.eq.s32.totalorder %v513, %v1785
      %vm1807 = vcmp.eq.s32.totalorder %v513, %v1789
      %vm1808 = vcmp.eq.s32.totalorder %v513, %v1793
      %vm1809 = vcmp.eq.s32.totalorder %v513, %v1797
      %vm1810 = vcmp.eq.s32.totalorder %v514, %v1785
      %vm1811 = vcmp.eq.s32.totalorder %v514, %v1789
      %vm1812 = vcmp.eq.s32.totalorder %v514, %v1793
      %vm1813 = vcmp.eq.s32.totalorder %v514, %v1797
      %vm1814 = vcmp.eq.s32.totalorder %v515, %v1785
      %vm1815 = vcmp.eq.s32.totalorder %v515, %v1789
      %vm1816 = vcmp.eq.s32.totalorder %v515, %v1793
      %vm1817 = vcmp.eq.s32.totalorder %v515, %v1797
      %vm1818 = vcmp.eq.s32.totalorder %v516, %v1785
      %vm1819 = vcmp.eq.s32.totalorder %v516, %v1789
      %vm1820 = vcmp.eq.s32.totalorder %v516, %v1793
      %vm1821 = vcmp.eq.s32.totalorder %v516, %v1797
      %vm1822 = vcmp.eq.s32.totalorder %v517, %v1785
      %vm1823 = vcmp.eq.s32.totalorder %v517, %v1789
      %vm1824 = vcmp.eq.s32.totalorder %v517, %v1793
      %vm1825 = vcmp.eq.s32.totalorder %v517, %v1797
      %vm1826 = vcmp.eq.s32.totalorder %v518, %v1785
      %vm1827 = vcmp.eq.s32.totalorder %v518, %v1789
      %vm1828 = vcmp.eq.s32.totalorder %v518, %v1793
      %vm1829 = vcmp.eq.s32.totalorder %v518, %v1797
      %vm1830 = vcmp.eq.s32.totalorder %v519, %v1785
      %vm1831 = vcmp.eq.s32.totalorder %v519, %v1789
      %vm1832 = vcmp.eq.s32.totalorder %v519, %v1793
      %vm1833 = vcmp.eq.s32.totalorder %v519, %v1797
      %vm1834 = vcmp.eq.s32.totalorder %v520, %v1785
      %vm1835 = vcmp.eq.s32.totalorder %v520, %v1789
      %vm1836 = vcmp.eq.s32.totalorder %v520, %v1793
      %vm1837 = vcmp.eq.s32.totalorder %v520, %v1797
      %vm1838 = vcmp.eq.s32.totalorder %v521, %v1785
      %vm1839 = vcmp.eq.s32.totalorder %v521, %v1789
      %vm1840 = vcmp.eq.s32.totalorder %v521, %v1793
      %vm1841 = vcmp.eq.s32.totalorder %v521, %v1797
      %vm1842 = vcmp.eq.s32.totalorder %v522, %v1785
      %vm1843 = vcmp.eq.s32.totalorder %v522, %v1789
      %vm1844 = vcmp.eq.s32.totalorder %v522, %v1793
      %vm1845 = vcmp.eq.s32.totalorder %v522, %v1797
      %vm1846 = vcmp.eq.s32.totalorder %v523, %v1785
      %vm1847 = vcmp.eq.s32.totalorder %v523, %v1789
      %vm1848 = vcmp.eq.s32.totalorder %v523, %v1793
      %vm1849 = vcmp.eq.s32.totalorder %v523, %v1797
      %vm1850 = vcmp.eq.s32.totalorder %v524, %v1785
      %vm1851 = vcmp.eq.s32.totalorder %v524, %v1789
      %vm1852 = vcmp.eq.s32.totalorder %v524, %v1793
      %vm1853 = vcmp.eq.s32.totalorder %v524, %v1797
      %vm1854 = vcmp.eq.s32.totalorder %v525, %v1785
      %vm1855 = vcmp.eq.s32.totalorder %v525, %v1789
      %vm1856 = vcmp.eq.s32.totalorder %v525, %v1793
      %vm1857 = vcmp.eq.s32.totalorder %v525, %v1797
      %vm1858 = vcmp.eq.s32.totalorder %v526, %v1785
      %vm1859 = vcmp.eq.s32.totalorder %v526, %v1789
      %vm1860 = vcmp.eq.s32.totalorder %v526, %v1793
      %vm1861 = vcmp.eq.s32.totalorder %v526, %v1797
      %v1862 = vsel %vm1798, 1, 0
      %v1863 = vsel %vm1799, 1, 0
      %v1864 = vsel %vm1800, 1, 0
      %v1865 = vsel %vm1801, 1, 0
      %v1866 = vsel %vm1802, 1, 0
      %v1867 = vsel %vm1803, 1, 0
      %v1868 = vsel %vm1804, 1, 0
      %v1869 = vsel %vm1805, 1, 0
      %v1870 = vsel %vm1806, 1, 0
      %v1871 = vsel %vm1807, 1, 0
      %v1872 = vsel %vm1808, 1, 0
      %v1873 = vsel %vm1809, 1, 0
      %v1874 = vsel %vm1810, 1, 0
      %v1875 = vsel %vm1811, 1, 0
      %v1876 = vsel %vm1812, 1, 0
      %v1877 = vsel %vm1813, 1, 0
      %v1878 = vsel %vm1814, 1, 0
      %v1879 = vsel %vm1815, 1, 0
      %v1880 = vsel %vm1816, 1, 0
      %v1881 = vsel %vm1817, 1, 0
      %v1882 = vsel %vm1818, 1, 0
      %v1883 = vsel %vm1819, 1, 0
      %v1884 = vsel %vm1820, 1, 0
      %v1885 = vsel %vm1821, 1, 0
      %v1886 = vsel %vm1822, 1, 0
      %v1887 = vsel %vm1823, 1, 0
      %v1888 = vsel %vm1824, 1, 0
      %v1889 = vsel %vm1825, 1, 0
      %v1890 = vsel %vm1826, 1, 0
      %v1891 = vsel %vm1827, 1, 0
      %v1892 = vsel %vm1828, 1, 0
      %v1893 = vsel %vm1829, 1, 0
      %v1894 = vsel %vm1830, 1, 0
      %v1895 = vsel %vm1831, 1, 0
      %v1896 = vsel %vm1832, 1, 0
      %v1897 = vsel %vm1833, 1, 0
      %v1898 = vsel %vm1834, 1, 0
      %v1899 = vsel %vm1835, 1, 0
      %v1900 = vsel %vm1836, 1, 0
      %v1901 = vsel %vm1837, 1, 0
      %v1902 = vsel %vm1838, 1, 0
      %v1903 = vsel %vm1839, 1, 0
      %v1904 = vsel %vm1840, 1, 0
      %v1905 = vsel %vm1841, 1, 0
      %v1906 = vsel %vm1842, 1, 0
      %v1907 = vsel %vm1843, 1, 0
      %v1908 = vsel %vm1844, 1, 0
      %v1909 = vsel %vm1845, 1, 0
      %v1910 = vsel %vm1846, 1, 0
      %v1911 = vsel %vm1847, 1, 0
      %v1912 = vsel %vm1848, 1, 0
      %v1913 = vsel %vm1849, 1, 0
      %v1914 = vsel %vm1850, 1, 0
      %v1915 = vsel %vm1851, 1, 0
      %v1916 = vsel %vm1852, 1, 0
      %v1917 = vsel %vm1853, 1, 0
      %v1918 = vsel %vm1854, 1, 0
      %v1919 = vsel %vm1855, 1, 0
      %v1920 = vsel %vm1856, 1, 0
      %v1921 = vsel %vm1857, 1, 0
      %v1922 = vsel %vm1858, 1, 0
      %v1923 = vsel %vm1859, 1, 0
      %v1924 = vsel %vm1860, 1, 0
      %v1925 = vsel %vm1861, 1, 0
      %v1926 = vcvt.s32.f32 %v1862
      %v1927 = vcvt.s32.f32 %v1863
      %v1928 = vcvt.s32.f32 %v1864
      %v1929 = vcvt.s32.f32 %v1865
      %v1930 = vcvt.s32.f32 %v1866
      %v1931 = vcvt.s32.f32 %v1867
      %v1932 = vcvt.s32.f32 %v1868
      %v1933 = vcvt.s32.f32 %v1869
      %v1934 = vcvt.s32.f32 %v1870
      %v1935 = vcvt.s32.f32 %v1871
      %v1936 = vcvt.s32.f32 %v1872
      %v1937 = vcvt.s32.f32 %v1873
      %v1938 = vcvt.s32.f32 %v1874
      %v1939 = vcvt.s32.f32 %v1875
      %v1940 = vcvt.s32.f32 %v1876
      %v1941 = vcvt.s32.f32 %v1877
      %v1942 = vcvt.s32.f32 %v1878
      %v1943 = vcvt.s32.f32 %v1879
      %v1944 = vcvt.s32.f32 %v1880
      %v1945 = vcvt.s32.f32 %v1881
      %v1946 = vcvt.s32.f32 %v1882
      %v1947 = vcvt.s32.f32 %v1883
      %v1948 = vcvt.s32.f32 %v1884
      %v1949 = vcvt.s32.f32 %v1885
      %v1950 = vcvt.s32.f32 %v1886
      %v1951 = vcvt.s32.f32 %v1887
      %v1952 = vcvt.s32.f32 %v1888
      %v1953 = vcvt.s32.f32 %v1889
      %v1954 = vcvt.s32.f32 %v1890
      %v1955 = vcvt.s32.f32 %v1891
      %v1956 = vcvt.s32.f32 %v1892
      %v1957 = vcvt.s32.f32 %v1893
      %v1958 = vcvt.s32.f32 %v1894
      %v1959 = vcvt.s32.f32 %v1895
      %v1960 = vcvt.s32.f32 %v1896
      %v1961 = vcvt.s32.f32 %v1897
      %v1962 = vcvt.s32.f32 %v1898
      %v1963 = vcvt.s32.f32 %v1899
      %v1964 = vcvt.s32.f32 %v1900
      %v1965 = vcvt.s32.f32 %v1901
      %v1966 = vcvt.s32.f32 %v1902
      %v1967 = vcvt.s32.f32 %v1903
      %v1968 = vcvt.s32.f32 %v1904
      %v1969 = vcvt.s32.f32 %v1905
      %v1970 = vcvt.s32.f32 %v1906
      %v1971 = vcvt.s32.f32 %v1907
      %v1972 = vcvt.s32.f32 %v1908
      %v1973 = vcvt.s32.f32 %v1909
      %v1974 = vcvt.s32.f32 %v1910
      %v1975 = vcvt.s32.f32 %v1911
      %v1976 = vcvt.s32.f32 %v1912
      %v1977 = vcvt.s32.f32 %v1913
      %v1978 = vcvt.s32.f32 %v1914
      %v1979 = vcvt.s32.f32 %v1915
      %v1980 = vcvt.s32.f32 %v1916
      %v1981 = vcvt.s32.f32 %v1917
      %v1982 = vcvt.s32.f32 %v1918
      %v1983 = vcvt.s32.f32 %v1919
      %v1984 = vcvt.s32.f32 %v1920
      %v1985 = vcvt.s32.f32 %v1921
      %v1986 = vcvt.s32.f32 %v1922
      %v1987 = vcvt.s32.f32 %v1923
      %v1988 = vcvt.s32.f32 %v1924
      %v1989 = vcvt.s32.f32 %v1925
      %v1990 = vpack.c.bf16 %v1930, %v1926
      %v1991 = vpack.c.bf16 %v1931, %v1927
      %v1992 = vpack.c.bf16 %v1932, %v1928
      %v1993 = vpack.c.bf16 %v1933, %v1929
      %v1994 = vpack.c.bf16 %v1938, %v1934
      %v1995 = vpack.c.bf16 %v1939, %v1935
      %v1996 = vpack.c.bf16 %v1940, %v1936
      %v1997 = vpack.c.bf16 %v1941, %v1937
      %v1998 = vpack.c.bf16 %v1946, %v1942
      %v1999 = vpack.c.bf16 %v1947, %v1943
      %v2000 = vpack.c.bf16 %v1948, %v1944
      %v2001 = vpack.c.bf16 %v1949, %v1945
      %v2002 = vpack.c.bf16 %v1954, %v1950
      %v2003 = vpack.c.bf16 %v1955, %v1951
      %v2004 = vpack.c.bf16 %v1956, %v1952
      %v2005 = vpack.c.bf16 %v1957, %v1953
      %v2006 = vpack.c.bf16 %v1962, %v1958
      %v2007 = vpack.c.bf16 %v1963, %v1959
      %v2008 = vpack.c.bf16 %v1964, %v1960
      %v2009 = vpack.c.bf16 %v1965, %v1961
      %v2010 = vpack.c.bf16 %v1970, %v1966
      %v2011 = vpack.c.bf16 %v1971, %v1967
      %v2012 = vpack.c.bf16 %v1972, %v1968
      %v2013 = vpack.c.bf16 %v1973, %v1969
      %v2014 = vpack.c.bf16 %v1978, %v1974
      %v2015 = vpack.c.bf16 %v1979, %v1975
      %v2016 = vpack.c.bf16 %v1980, %v1976
      %v2017 = vpack.c.bf16 %v1981, %v1977
      %v2018 = vpack.c.bf16 %v1986, %v1982
      %v2019 = vpack.c.bf16 %v1987, %v1983
      %v2020 = vpack.c.bf16 %v1988, %v1984
      %v2021 = vpack.c.bf16 %v1989, %v1985
      %2022 = vmatprep.subr.bf16.mxu0 %v1991
      %2023 = vmatpush1.bf16.msra.mxu0 %v1990
      %2024 = vmatprep.subr.bf16.mxu0 %v1995
      %2025 = vmatpush1.bf16.msra.mxu0 %v1994
      %2026 = vmatprep.subr.bf16.mxu0 %v1999
      %2027 = vmatpush1.bf16.msra.mxu0 %v1998
      %2028 = vmatprep.subr.bf16.mxu0 %v2003
      %2029 = vmatpush1.bf16.msra.mxu0 %v2002
      %2030 = vmatprep.subr.bf16.mxu0 %v2007
      %2031 = vmatpush1.bf16.msra.mxu0 %v2006
      %2032 = vmatprep.subr.bf16.mxu0 %v2011
      %2033 = vmatpush1.bf16.msra.mxu0 %v2010
      %2034 = vmatprep.subr.bf16.mxu0 %v2015
      %2035 = vmatpush1.bf16.msra.mxu0 %v2014
      %2036 = vmatprep.subr.bf16.mxu0 %v2019
      %2037 = vmatpush1.bf16.msra.mxu0 %v2018
      %2038 = vmatprep.subr.bf16.mxu0 0
      %2039 = vmatpush1.bf16.msra.mxu0 0
      %2040 = vmatprep.subr.bf16.mxu0 0
      %2041 = vmatpush1.bf16.msra.mxu0 0
      %2042 = vmatprep.subr.bf16.mxu0 0
      %2043 = vmatpush1.bf16.msra.mxu0 0
      %2044 = vmatprep.subr.bf16.mxu0 0
      %2045 = vmatpush1.bf16.msra.mxu0 0
      %2046 = vmatprep.subr.bf16.mxu0 0
      %2047 = vmatpush1.bf16.msra.mxu0 0
      %2048 = vmatprep.subr.bf16.mxu0 0
      %2049 = vmatpush1.bf16.msra.mxu0 0
      %2050 = vmatprep.subr.bf16.mxu0 0
      %2051 = vmatpush1.bf16.msra.mxu0 0
      %2052 = vmatprep.subr.bf16.mxu0 0
      %2053 = vmatpush1.bf16.msra.mxu0 0
      %2054 = vmatprep.mubr.bf16.mxu0 0
      %2055 = vmatmul.mubr.bf16.gmra.mrb[0].mxu0 %v776
      %v2056 = vpop.f32.mrb[0].mxu0
      %v2057 = vadd.f32 0.0, %v2056
      %v2058 = vpop.f32.mrb[0].mxu0
      %v2059 = vadd.f32 0.0, %v2058
      %v2060 = vpop.f32.mrb[0].mxu0
      %v2061 = vadd.f32 0.0, %v2060
      %v2062 = vpop.f32.mrb[0].mxu0
      %v2063 = vadd.f32 0.0, %v2062
      %2064 = vmatprep.mubr.bf16.mxu0 0
      %2065 = vmatmul.mubr.bf16.gmra.mrb[0].mxu0 %v777
      %v2066 = vpop.f32.mrb[0].mxu0
      %v2067 = vadd.f32 0.0, %v2066
      %v2068 = vpop.f32.mrb[0].mxu0
      %v2069 = vadd.f32 0.0, %v2068
      %v2070 = vpop.f32.mrb[0].mxu0
      %v2071 = vpop.f32.mrb[0].mxu0
      %2072 = vdwg.mxu0
      %2073 = vmatprep.subr.bf16.mxu0 %v1993
      %2074 = vmatpush1.bf16.msra.mxu0 %v1992
      %2075 = vmatprep.subr.bf16.mxu0 %v1997
      %2076 = vmatpush1.bf16.msra.mxu0 %v1996
      %2077 = vmatprep.subr.bf16.mxu0 %v2001
      %2078 = vmatpush1.bf16.msra.mxu0 %v2000
      %2079 = vmatprep.subr.bf16.mxu0 %v2005
      %2080 = vmatpush1.bf16.msra.mxu0 %v2004
      %2081 = vmatprep.subr.bf16.mxu0 %v2009
      %2082 = vmatpush1.bf16.msra.mxu0 %v2008
      %2083 = vmatprep.subr.bf16.mxu0 %v2013
      %2084 = vmatpush1.bf16.msra.mxu0 %v2012
      %2085 = vmatprep.subr.bf16.mxu0 %v2017
      %2086 = vmatpush1.bf16.msra.mxu0 %v2016
      %2087 = vmatprep.subr.bf16.mxu0 %v2021
      %2088 = vmatpush1.bf16.msra.mxu0 %v2020
      %2089 = vmatprep.subr.bf16.mxu0 0
      %2090 = vmatpush1.bf16.msra.mxu0 0
      %2091 = vmatprep.subr.bf16.mxu0 0
      %2092 = vmatpush1.bf16.msra.mxu0 0
      %2093 = vmatprep.subr.bf16.mxu0 0
      %2094 = vmatpush1.bf16.msra.mxu0 0
      %2095 = vmatprep.subr.bf16.mxu0 0
      %2096 = vmatpush1.bf16.msra.mxu0 0
      %2097 = vmatprep.subr.bf16.mxu0 0
      %2098 = vmatpush1.bf16.msra.mxu0 0
      %2099 = vmatprep.subr.bf16.mxu0 0
      %2100 = vmatpush1.bf16.msra.mxu0 0
      %2101 = vmatprep.subr.bf16.mxu0 0
      %2102 = vmatpush1.bf16.msra.mxu0 0
      %2103 = vmatprep.subr.bf16.mxu0 0
      %2104 = vmatpush1.bf16.msra.mxu0 0
      %2105 = vmatprep.mubr.bf16.mxu0 0
      %2106 = vmatmul.mubr.bf16.gmra.mrb[0].mxu0 %v776
      %v2107 = vpop.f32.mrb[0].mxu0
      %v2108 = vadd.f32 0.0, %v2107
      %v2109 = vpop.f32.mrb[0].mxu0
      %v2110 = vadd.f32 0.0, %v2109
      %v2111 = vpop.f32.mrb[0].mxu0
      %v2112 = vadd.f32 0.0, %v2111
      %v2113 = vpop.f32.mrb[0].mxu0
      %v2114 = vadd.f32 0.0, %v2113
      %2115 = vmatprep.mubr.bf16.mxu0 0
      %2116 = vmatmul.mubr.bf16.gmra.mrb[0].mxu0 %v777
      %v2117 = vpop.f32.mrb[0].mxu0
      %v2118 = vadd.f32 0.0, %v2117
      %v2119 = vpop.f32.mrb[0].mxu0
      %v2120 = vadd.f32 0.0, %v2119
      %v2121 = vpop.f32.mrb[0].mxu0
      %v2122 = vpop.f32.mrb[0].mxu0
      %2123 = vdwg.mxu0
      %v2124 = vlaneseq
      %v2125 = vshrl.u32 %v2124, 7
      %v2126 = vsub.s32 3, %v2125
      %v2127 = vrot.slane %v478, %v2126
      %v2128 = vlaneseq
      %v2129 = vshrl.u32 %v2128, 7
      %v2130 = vsub.s32 3, %v2129
      %v2131 = vrot.slane %v479, %v2130
      %v2132 = vlaneseq
      %v2133 = vshrl.u32 %v2132, 7
      %v2134 = vsub.s32 3, %v2133
      %v2135 = vrot.slane %v480, %v2134
      %v2136 = vlaneseq
      %v2137 = vshrl.u32 %v2136, 7
      %v2138 = vsub.s32 3, %v2137
      %v2139 = vrot.slane %v481, %v2138
      %v2140 = vmul.f32 %v2127, %v2057
      %v2141 = vmul.f32 %v2131, %v2059
      %v2142 = vmul.f32 %v2135, %v2108
      %v2143 = vmul.f32 %v2139, %v2110
      %v2144 = vadd.f32 %v1778, %v2140
      %v2145 = vadd.f32 %v1779, %v2141
      %v2146 = vadd.f32 %v1780, %v2142
      %v2147 = vadd.f32 %v1781, %v2143
      %v2148 = vlaneseq
      %v2149 = vshrl.u32 %v2148, 7
      %v2150 = vsub.s32 3, %v2149
      %v2151 = vrot.slane %v490, %v2150
      %v2152 = vlaneseq
      %v2153 = vshrl.u32 %v2152, 7
      %v2154 = vsub.s32 3, %v2153
      %v2155 = vrot.slane %v491, %v2154
      %v2156 = vlaneseq
      %v2157 = vshrl.u32 %v2156, 7
      %v2158 = vsub.s32 3, %v2157
      %v2159 = vrot.slane %v492, %v2158
      %v2160 = vlaneseq
      %v2161 = vshrl.u32 %v2160, 7
      %v2162 = vsub.s32 3, %v2161
      %v2163 = vrot.slane %v493, %v2162
      %v2164 = vmul.f32 %v2151, %v2061
      %v2165 = vmul.f32 %v2155, %v2063
      %v2166 = vmul.f32 %v2159, %v2112
      %v2167 = vmul.f32 %v2163, %v2114
      %v2168 = vadd.f32 %v2144, %v2164
      %v2169 = vadd.f32 %v2145, %v2165
      %v2170 = vadd.f32 %v2146, %v2166
      %v2171 = vadd.f32 %v2147, %v2167
      %v2172 = vlaneseq
      %v2173 = vshrl.u32 %v2172, 7
      %v2174 = vsub.s32 3, %v2173
      %v2175 = vrot.slane %v502, %v2174
      %v2176 = vlaneseq
      %v2177 = vshrl.u32 %v2176, 7
      %v2178 = vsub.s32 3, %v2177
      %v2179 = vrot.slane %v503, %v2178
      %v2180 = vlaneseq
      %v2181 = vshrl.u32 %v2180, 7
      %v2182 = vsub.s32 3, %v2181
      %v2183 = vrot.slane %v504, %v2182
      %v2184 = vlaneseq
      %v2185 = vshrl.u32 %v2184, 7
      %v2186 = vsub.s32 3, %v2185
      %v2187 = vrot.slane %v505, %v2186
      %v2188 = vmul.f32 %v2175, %v2067
      %v2189 = vmul.f32 %v2179, %v2069
      %v2190 = vmul.f32 %v2183, %v2118
      %v2191 = vmul.f32 %v2187, %v2120
      %v2192 = vadd.f32 %v2168, %v2188
      %v2193 = vadd.f32 %v2169, %v2189
      %v2194 = vadd.f32 %v2170, %v2190
      %v2195 = vadd.f32 %v2171, %v2191
      %v2196 = vadd.s32 %v511, 128
      %v2197 = vadd.s32 %v512, 128
      %v2198 = vadd.s32 %v513, 128
      %v2199 = vadd.s32 %v514, 128
      %v2200 = vadd.s32 %v515, 128
      %v2201 = vadd.s32 %v516, 128
      %v2202 = vadd.s32 %v517, 128
      %v2203 = vadd.s32 %v518, 128
      %v2204 = vadd.s32 %v519, 128
      %v2205 = vadd.s32 %v520, 128
      %v2206 = vadd.s32 %v521, 128
      %v2207 = vadd.s32 %v522, 128
      %v2208 = vadd.s32 %v523, 128
      %v2209 = vadd.s32 %v524, 128
      %v2210 = vadd.s32 %v525, 128
      %v2211 = vadd.s32 %v526, 128
      %v2212 = vld [vmem:[%s1 + $0x4] sm:$0xf]
      %v2213 = vld [vmem:[%s1 + $0xc] sm:$0xf]
      %v2214 = vld [vmem:[%s1 + $0x14] sm:$0xf]
      %vm2215 = vcmp.eq.s32.totalorder %v2196, %v533
      %vm2216 = vcmp.eq.s32.totalorder %v2196, %v537
      %vm2217 = vcmp.eq.s32.totalorder %v2196, %v541
      %vm2218 = vcmp.eq.s32.totalorder %v2196, %v545
      %vm2219 = vcmp.eq.s32.totalorder %v2197, %v533
      %vm2220 = vcmp.eq.s32.totalorder %v2197, %v537
      %vm2221 = vcmp.eq.s32.totalorder %v2197, %v541
      %vm2222 = vcmp.eq.s32.totalorder %v2197, %v545
      %vm2223 = vcmp.eq.s32.totalorder %v2198, %v533
      %vm2224 = vcmp.eq.s32.totalorder %v2198, %v537
      %vm2225 = vcmp.eq.s32.totalorder %v2198, %v541
      %vm2226 = vcmp.eq.s32.totalorder %v2198, %v545
      %vm2227 = vcmp.eq.s32.totalorder %v2199, %v533
      %vm2228 = vcmp.eq.s32.totalorder %v2199, %v537
      %vm2229 = vcmp.eq.s32.totalorder %v2199, %v541
      %vm2230 = vcmp.eq.s32.totalorder %v2199, %v545
      %vm2231 = vcmp.eq.s32.totalorder %v2200, %v533
      %vm2232 = vcmp.eq.s32.totalorder %v2200, %v537
      %vm2233 = vcmp.eq.s32.totalorder %v2200, %v541
      %vm2234 = vcmp.eq.s32.totalorder %v2200, %v545
      %vm2235 = vcmp.eq.s32.totalorder %v2201, %v533
      %vm2236 = vcmp.eq.s32.totalorder %v2201, %v537
      %vm2237 = vcmp.eq.s32.totalorder %v2201, %v541
      %vm2238 = vcmp.eq.s32.totalorder %v2201, %v545
      %vm2239 = vcmp.eq.s32.totalorder %v2202, %v533
      %vm2240 = vcmp.eq.s32.totalorder %v2202, %v537
      %vm2241 = vcmp.eq.s32.totalorder %v2202, %v541
      %vm2242 = vcmp.eq.s32.totalorder %v2202, %v545
      %vm2243 = vcmp.eq.s32.totalorder %v2203, %v533
      %vm2244 = vcmp.eq.s32.totalorder %v2203, %v537
      %vm2245 = vcmp.eq.s32.totalorder %v2203, %v541
      %vm2246 = vcmp.eq.s32.totalorder %v2203, %v545
      %vm2247 = vcmp.eq.s32.totalorder %v2204, %v533
      %vm2248 = vcmp.eq.s32.totalorder %v2204, %v537
      %vm2249 = vcmp.eq.s32.totalorder %v2204, %v541
      %vm2250 = vcmp.eq.s32.totalorder %v2204, %v545
      %vm2251 = vcmp.eq.s32.totalorder %v2205, %v533
      %vm2252 = vcmp.eq.s32.totalorder %v2205, %v537
      %vm2253 = vcmp.eq.s32.totalorder %v2205, %v541
      %vm2254 = vcmp.eq.s32.totalorder %v2205, %v545
      %vm2255 = vcmp.eq.s32.totalorder %v2206, %v533
      %vm2256 = vcmp.eq.s32.totalorder %v2206, %v537
      %vm2257 = vcmp.eq.s32.totalorder %v2206, %v541
      %vm2258 = vcmp.eq.s32.totalorder %v2206, %v545
      %vm2259 = vcmp.eq.s32.totalorder %v2207, %v533
      %vm2260 = vcmp.eq.s32.totalorder %v2207, %v537
      %vm2261 = vcmp.eq.s32.totalorder %v2207, %v541
      %vm2262 = vcmp.eq.s32.totalorder %v2207, %v545
      %vm2263 = vcmp.eq.s32.totalorder %v2208, %v533
      %vm2264 = vcmp.eq.s32.totalorder %v2208, %v537
      %vm2265 = vcmp.eq.s32.totalorder %v2208, %v541
      %vm2266 = vcmp.eq.s32.totalorder %v2208, %v545
      %vm2267 = vcmp.eq.s32.totalorder %v2209, %v533
      %vm2268 = vcmp.eq.s32.totalorder %v2209, %v537
      %vm2269 = vcmp.eq.s32.totalorder %v2209, %v541
      %vm2270 = vcmp.eq.s32.totalorder %v2209, %v545
      %vm2271 = vcmp.eq.s32.totalorder %v2210, %v533
      %vm2272 = vcmp.eq.s32.totalorder %v2210, %v537
      %vm2273 = vcmp.eq.s32.totalorder %v2210, %v541
      %vm2274 = vcmp.eq.s32.totalorder %v2210, %v545
      %vm2275 = vcmp.eq.s32.totalorder %v2211, %v533
      %vm2276 = vcmp.eq.s32.totalorder %v2211, %v537
      %vm2277 = vcmp.eq.s32.totalorder %v2211, %v541
      %vm2278 = vcmp.eq.s32.totalorder %v2211, %v545
      %v2279 = vsel %vm2215, 1, 0
      %v2280 = vsel %vm2216, 1, 0
      %v2281 = vsel %vm2217, 1, 0
      %v2282 = vsel %vm2218, 1, 0
      %v2283 = vsel %vm2219, 1, 0
      %v2284 = vsel %vm2220, 1, 0
      %v2285 = vsel %vm2221, 1, 0
      %v2286 = vsel %vm2222, 1, 0
      %v2287 = vsel %vm2223, 1, 0
      %v2288 = vsel %vm2224, 1, 0
      %v2289 = vsel %vm2225, 1, 0
      %v2290 = vsel %vm2226, 1, 0
      %v2291 = vsel %vm2227, 1, 0
      %v2292 = vsel %vm2228, 1, 0
      %v2293 = vsel %vm2229, 1, 0
      %v2294 = vsel %vm2230, 1, 0
      %v2295 = vsel %vm2231, 1, 0
      %v2296 = vsel %vm2232, 1, 0
      %v2297 = vsel %vm2233, 1, 0
      %v2298 = vsel %vm2234, 1, 0
      %v2299 = vsel %vm2235, 1, 0
      %v2300 = vsel %vm2236, 1, 0
      %v2301 = vsel %vm2237, 1, 0
      %v2302 = vsel %vm2238, 1, 0
      %v2303 = vsel %vm2239, 1, 0
      %v2304 = vsel %vm2240, 1, 0
      %v2305 = vsel %vm2241, 1, 0
      %v2306 = vsel %vm2242, 1, 0
      %v2307 = vsel %vm2243, 1, 0
      %v2308 = vsel %vm2244, 1, 0
      %v2309 = vsel %vm2245, 1, 0
      %v2310 = vsel %vm2246, 1, 0
      %v2311 = vsel %vm2247, 1, 0
      %v2312 = vsel %vm2248, 1, 0
      %v2313 = vsel %vm2249, 1, 0
      %v2314 = vsel %vm2250, 1, 0
      %v2315 = vsel %vm2251, 1, 0
      %v2316 = vsel %vm2252, 1, 0
      %v2317 = vsel %vm2253, 1, 0
      %v2318 = vsel %vm2254, 1, 0
      %v2319 = vsel %vm2255, 1, 0
      %v2320 = vsel %vm2256, 1, 0
      %v2321 = vsel %vm2257, 1, 0
      %v2322 = vsel %vm2258, 1, 0
      %v2323 = vsel %vm2259, 1, 0
      %v2324 = vsel %vm2260, 1, 0
      %v2325 = vsel %vm2261, 1, 0
      %v2326 = vsel %vm2262, 1, 0
      %v2327 = vsel %vm2263, 1, 0
      %v2328 = vsel %vm2264, 1, 0
      %v2329 = vsel %vm2265, 1, 0
      %v2330 = vsel %vm2266, 1, 0
      %v2331 = vsel %vm2267, 1, 0
      %v2332 = vsel %vm2268, 1, 0
      %v2333 = vsel %vm2269, 1, 0
      %v2334 = vsel %vm2270, 1, 0
      %v2335 = vsel %vm2271, 1, 0
      %v2336 = vsel %vm2272, 1, 0
      %v2337 = vsel %vm2273, 1, 0
      %v2338 = vsel %vm2274, 1, 0
      %v2339 = vsel %vm2275, 1, 0
      %v2340 = vsel %vm2276, 1, 0
      %v2341 = vsel %vm2277, 1, 0
      %v2342 = vsel %vm2278, 1, 0
      %v2343 = vcvt.s32.f32 %v2279
      %v2344 = vcvt.s32.f32 %v2280
      %v2345 = vcvt.s32.f32 %v2281
      %v2346 = vcvt.s32.f32 %v2282
      %v2347 = vcvt.s32.f32 %v2283
      %v2348 = vcvt.s32.f32 %v2284
      %v2349 = vcvt.s32.f32 %v2285
      %v2350 = vcvt.s32.f32 %v2286
      %v2351 = vcvt.s32.f32 %v2287
      %v2352 = vcvt.s32.f32 %v2288
      %v2353 = vcvt.s32.f32 %v2289
      %v2354 = vcvt.s32.f32 %v2290
      %v2355 = vcvt.s32.f32 %v2291
      %v2356 = vcvt.s32.f32 %v2292
      %v2357 = vcvt.s32.f32 %v2293
      %v2358 = vcvt.s32.f32 %v2294
      %v2359 = vcvt.s32.f32 %v2295
      %v2360 = vcvt.s32.f32 %v2296
      %v2361 = vcvt.s32.f32 %v2297
      %v2362 = vcvt.s32.f32 %v2298
      %v2363 = vcvt.s32.f32 %v2299
      %v2364 = vcvt.s32.f32 %v2300
      %v2365 = vcvt.s32.f32 %v2301
      %v2366 = vcvt.s32.f32 %v2302
      %v2367 = vcvt.s32.f32 %v2303
      %v2368 = vcvt.s32.f32 %v2304
      %v2369 = vcvt.s32.f32 %v2305
      %v2370 = vcvt.s32.f32 %v2306
      %v2371 = vcvt.s32.f32 %v2307
      %v2372 = vcvt.s32.f32 %v2308
      %v2373 = vcvt.s32.f32 %v2309
      %v2374 = vcvt.s32.f32 %v2310
      %v2375 = vcvt.s32.f32 %v2311
      %v2376 = vcvt.s32.f32 %v2312
      %v2377 = vcvt.s32.f32 %v2313
      %v2378 = vcvt.s32.f32 %v2314
      %v2379 = vcvt.s32.f32 %v2315
      %v2380 = vcvt.s32.f32 %v2316
      %v2381 = vcvt.s32.f32 %v2317
      %v2382 = vcvt.s32.f32 %v2318
      %v2383 = vcvt.s32.f32 %v2319
      %v2384 = vcvt.s32.f32 %v2320
      %v2385 = vcvt.s32.f32 %v2321
      %v2386 = vcvt.s32.f32 %v2322
      %v2387 = vcvt.s32.f32 %v2323
      %v2388 = vcvt.s32.f32 %v2324
      %v2389 = vcvt.s32.f32 %v2325
      %v2390 = vcvt.s32.f32 %v2326
      %v2391 = vcvt.s32.f32 %v2327
      %v2392 = vcvt.s32.f32 %v2328
      %v2393 = vcvt.s32.f32 %v2329
      %v2394 = vcvt.s32.f32 %v2330
      %v2395 = vcvt.s32.f32 %v2331
      %v2396 = vcvt.s32.f32 %v2332
      %v2397 = vcvt.s32.f32 %v2333
      %v2398 = vcvt.s32.f32 %v2334
      %v2399 = vcvt.s32.f32 %v2335
      %v2400 = vcvt.s32.f32 %v2336
      %v2401 = vcvt.s32.f32 %v2337
      %v2402 = vcvt.s32.f32 %v2338
      %v2403 = vcvt.s32.f32 %v2339
      %v2404 = vcvt.s32.f32 %v2340
      %v2405 = vcvt.s32.f32 %v2341
      %v2406 = vcvt.s32.f32 %v2342
      %v2407 = vpack.c.bf16 %v2347, %v2343
      %v2408 = vpack.c.bf16 %v2348, %v2344
      %v2409 = vpack.c.bf16 %v2349, %v2345
      %v2410 = vpack.c.bf16 %v2350, %v2346
      %v2411 = vpack.c.bf16 %v2355, %v2351
      %v2412 = vpack.c.bf16 %v2356, %v2352
      %v2413 = vpack.c.bf16 %v2357, %v2353
      %v2414 = vpack.c.bf16 %v2358, %v2354
      %v2415 = vpack.c.bf16 %v2363, %v2359
      %v2416 = vpack.c.bf16 %v2364, %v2360
      %v2417 = vpack.c.bf16 %v2365, %v2361
      %v2418 = vpack.c.bf16 %v2366, %v2362
      %v2419 = vpack.c.bf16 %v2371, %v2367
      %v2420 = vpack.c.bf16 %v2372, %v2368
      %v2421 = vpack.c.bf16 %v2373, %v2369
      %v2422 = vpack.c.bf16 %v2374, %v2370
      %v2423 = vpack.c.bf16 %v2379, %v2375
      %v2424 = vpack.c.bf16 %v2380, %v2376
      %v2425 = vpack.c.bf16 %v2381, %v2377
      %v2426 = vpack.c.bf16 %v2382, %v2378
      %v2427 = vpack.c.bf16 %v2387, %v2383
      %v2428 = vpack.c.bf16 %v2388, %v2384
      %v2429 = vpack.c.bf16 %v2389, %v2385
      %v2430 = vpack.c.bf16 %v2390, %v2386
      %v2431 = vpack.c.bf16 %v2395, %v2391
      %v2432 = vpack.c.bf16 %v2396, %v2392
      %v2433 = vpack.c.bf16 %v2397, %v2393
      %v2434 = vpack.c.bf16 %v2398, %v2394
      %v2435 = vpack.c.bf16 %v2403, %v2399
      %v2436 = vpack.c.bf16 %v2404, %v2400
      %v2437 = vpack.c.bf16 %v2405, %v2401
      %v2438 = vpack.c.bf16 %v2406, %v2402
      %v2442 = vunpack.c.l.b16 %v2212
      %v2443 = vunpack.c.l.b16 %v2213
      %v2444 = vunpack.c.l.b16 %v2214
      %v2445 = vpack.c.b16 %v2443, %v2442
      %v2446 = vpack.c.b16 %v2444, %v2444
      %2449 = vmatprep.subr.bf16.mxu0 %v2408
      %2450 = vmatpush1.bf16.msra.mxu0 %v2407
      %2451 = vmatprep.subr.bf16.mxu0 %v2412
      %2452 = vmatpush1.bf16.msra.mxu0 %v2411
      %2453 = vmatprep.subr.bf16.mxu0 %v2416
      %2454 = vmatpush1.bf16.msra.mxu0 %v2415
      %2455 = vmatprep.subr.bf16.mxu0 %v2420
      %2456 = vmatpush1.bf16.msra.mxu0 %v2419
      %2457 = vmatprep.subr.bf16.mxu0 %v2424
      %2458 = vmatpush1.bf16.msra.mxu0 %v2423
      %2459 = vmatprep.subr.bf16.mxu0 %v2428
      %2460 = vmatpush1.bf16.msra.mxu0 %v2427
      %2461 = vmatprep.subr.bf16.mxu0 %v2432
      %2462 = vmatpush1.bf16.msra.mxu0 %v2431
      %2463 = vmatprep.subr.bf16.mxu0 %v2436
      %2464 = vmatpush1.bf16.msra.mxu0 %v2435
      %2465 = vmatprep.subr.bf16.mxu0 0
      %2466 = vmatpush1.bf16.msra.mxu0 0
      %2467 = vmatprep.subr.bf16.mxu0 0
      %2468 = vmatpush1.bf16.msra.mxu0 0
      %2469 = vmatprep.subr.bf16.mxu0 0
      %2470 = vmatpush1.bf16.msra.mxu0 0
      %2471 = vmatprep.subr.bf16.mxu0 0
      %2472 = vmatpush1.bf16.msra.mxu0 0
      %2473 = vmatprep.subr.bf16.mxu0 0
      %2474 = vmatpush1.bf16.msra.mxu0 0
      %2475 = vmatprep.subr.bf16.mxu0 0
      %2476 = vmatpush1.bf16.msra.mxu0 0
      %2477 = vmatprep.subr.bf16.mxu0 0
      %2478 = vmatpush1.bf16.msra.mxu0 0
      %2479 = vmatprep.subr.bf16.mxu0 0
      %2480 = vmatpush1.bf16.msra.mxu0 0
      %2481 = vmatprep.mubr.bf16.mxu0 0
      %2482 = vmatmul.mubr.bf16.gmra.mrb[0].mxu0 %v2445
      %v2483 = vpop.f32.mrb[0].mxu0
      %v2484 = vadd.f32 0.0, %v2483
      %v2485 = vpop.f32.mrb[0].mxu0
      %v2486 = vadd.f32 0.0, %v2485
      %v2487 = vpop.f32.mrb[0].mxu0
      %v2488 = vadd.f32 0.0, %v2487
      %v2489 = vpop.f32.mrb[0].mxu0
      %v2490 = vadd.f32 0.0, %v2489
      %2491 = vmatprep.mubr.bf16.mxu0 0
      %2492 = vmatmul.mubr.bf16.gmra.mrb[0].mxu0 %v2446
      %v2493 = vpop.f32.mrb[0].mxu0
      %v2494 = vadd.f32 0.0, %v2493
      %v2495 = vpop.f32.mrb[0].mxu0
      %v2496 = vadd.f32 0.0, %v2495
      %v2497 = vpop.f32.mrb[0].mxu0
      %v2498 = vpop.f32.mrb[0].mxu0
      %2499 = vdwg.mxu0
      %2500 = vmatprep.subr.bf16.mxu0 %v2410
      %2501 = vmatpush1.bf16.msra.mxu0 %v2409
      %2502 = vmatprep.subr.bf16.mxu0 %v2414
      %2503 = vmatpush1.bf16.msra.mxu0 %v2413
      %2504 = vmatprep.subr.bf16.mxu0 %v2418
      %2505 = vmatpush1.bf16.msra.mxu0 %v2417
      %2506 = vmatprep.subr.bf16.mxu0 %v2422
      %2507 = vmatpush1.bf16.msra.mxu0 %v2421
      %2508 = vmatprep.subr.bf16.mxu0 %v2426
      %2509 = vmatpush1.bf16.msra.mxu0 %v2425
      %2510 = vmatprep.subr.bf16.mxu0 %v2430
      %2511 = vmatpush1.bf16.msra.mxu0 %v2429
      %2512 = vmatprep.subr.bf16.mxu0 %v2434
      %2513 = vmatpush1.bf16.msra.mxu0 %v2433
      %2514 = vmatprep.subr.bf16.mxu0 %v2438
      %2515 = vmatpush1.bf16.msra.mxu0 %v2437
      %2516 = vmatprep.subr.bf16.mxu0 0
      %2517 = vmatpush1.bf16.msra.mxu0 0
      %2518 = vmatprep.subr.bf16.mxu0 0
      %2519 = vmatpush1.bf16.msra.mxu0 0
      %2520 = vmatprep.subr.bf16.mxu0 0
      %2521 = vmatpush1.bf16.msra.mxu0 0
      %2522 = vmatprep.subr.bf16.mxu0 0
      %2523 = vmatpush1.bf16.msra.mxu0 0
      %2524 = vmatprep.subr.bf16.mxu0 0
      %2525 = vmatpush1.bf16.msra.mxu0 0
      %2526 = vmatprep.subr.bf16.mxu0 0
      %2527 = vmatpush1.bf16.msra.mxu0 0
      %2528 = vmatprep.subr.bf16.mxu0 0
      %2529 = vmatpush1.bf16.msra.mxu0 0
      %2530 = vmatprep.subr.bf16.mxu0 0
      %2531 = vmatpush1.bf16.msra.mxu0 0
      %2532 = vmatprep.mubr.bf16.mxu0 0
      %2533 = vmatmul.mubr.bf16.gmra.mrb[0].mxu0 %v2445
      %v2534 = vpop.f32.mrb[0].mxu0
      %v2535 = vadd.f32 0.0, %v2534
      %v2536 = vpop.f32.mrb[0].mxu0
      %v2537 = vadd.f32 0.0, %v2536
      %v2538 = vpop.f32.mrb[0].mxu0
      %v2539 = vadd.f32 0.0, %v2538
      %v2540 = vpop.f32.mrb[0].mxu0
      %v2541 = vadd.f32 0.0, %v2540
      %2542 = vmatprep.mubr.bf16.mxu0 0
      %2543 = vmatmul.mubr.bf16.gmra.mrb[0].mxu0 %v2446
      %v2544 = vpop.f32.mrb[0].mxu0
      %v2545 = vadd.f32 0.0, %v2544
      %v2546 = vpop.f32.mrb[0].mxu0
      %v2547 = vadd.f32 0.0, %v2546
      %v2548 = vpop.f32.mrb[0].mxu0
      %v2549 = vpop.f32.mrb[0].mxu0
      %2550 = vdwg.mxu0
      %v2551 = vmul.f32 %v885, %v2484
      %v2552 = vmul.f32 %v889, %v2486
      %v2553 = vmul.f32 %v893, %v2535
      %v2554 = vmul.f32 %v897, %v2537
      %v2555 = vadd.f32 %v2192, %v2551
      %v2556 = vadd.f32 %v2193, %v2552
      %v2557 = vadd.f32 %v2194, %v2553
      %v2558 = vadd.f32 %v2195, %v2554
      %v2559 = vmul.f32 %v909, %v2488
      %v2560 = vmul.f32 %v913, %v2490
      %v2561 = vmul.f32 %v917, %v2539
      %v2562 = vmul.f32 %v921, %v2541
      %v2563 = vadd.f32 %v2555, %v2559
      %v2564 = vadd.f32 %v2556, %v2560
      %v2565 = vadd.f32 %v2557, %v2561
      %v2566 = vadd.f32 %v2558, %v2562
      %v2567 = vmul.f32 %v933, %v2494
      %v2568 = vmul.f32 %v937, %v2496
      %v2569 = vmul.f32 %v941, %v2545
      %v2570 = vmul.f32 %v945, %v2547
      %v2571 = vadd.f32 %v2563, %v2567
      %v2572 = vadd.f32 %v2564, %v2568
      %v2573 = vadd.f32 %v2565, %v2569
      %v2574 = vadd.f32 %v2566, %v2570
      %vm2575 = vcmp.eq.s32.totalorder %v2196, %v957
      %vm2576 = vcmp.eq.s32.totalorder %v2196, %v961
      %vm2577 = vcmp.eq.s32.totalorder %v2196, %v965
      %vm2578 = vcmp.eq.s32.totalorder %v2196, %v969
      %vm2579 = vcmp.eq.s32.totalorder %v2197, %v957
      %vm2580 = vcmp.eq.s32.totalorder %v2197, %v961
      %vm2581 = vcmp.eq.s32.totalorder %v2197, %v965
      %vm2582 = vcmp.eq.s32.totalorder %v2197, %v969
      %vm2583 = vcmp.eq.s32.totalorder %v2198, %v957
      %vm2584 = vcmp.eq.s32.totalorder %v2198, %v961
      %vm2585 = vcmp.eq.s32.totalorder %v2198, %v965
      %vm2586 = vcmp.eq.s32.totalorder %v2198, %v969
      %vm2587 = vcmp.eq.s32.totalorder %v2199, %v957
      %vm2588 = vcmp.eq.s32.totalorder %v2199, %v961
      %vm2589 = vcmp.eq.s32.totalorder %v2199, %v965
      %vm2590 = vcmp.eq.s32.totalorder %v2199, %v969
      %vm2591 = vcmp.eq.s32.totalorder %v2200, %v957
      %vm2592 = vcmp.eq.s32.totalorder %v2200, %v961
      %vm2593 = vcmp.eq.s32.totalorder %v2200, %v965
      %vm2594 = vcmp.eq.s32.totalorder %v2200, %v969
      %vm2595 = vcmp.eq.s32.totalorder %v2201, %v957
      %vm2596 = vcmp.eq.s32.totalorder %v2201, %v961
      %vm2597 = vcmp.eq.s32.totalorder %v2201, %v965
      %vm2598 = vcmp.eq.s32.totalorder %v2201, %v969
      %vm2599 = vcmp.eq.s32.totalorder %v2202, %v957
      %vm2600 = vcmp.eq.s32.totalorder %v2202, %v961
      %vm2601 = vcmp.eq.s32.totalorder %v2202, %v965
      %vm2602 = vcmp.eq.s32.totalorder %v2202, %v969
      %vm2603 = vcmp.eq.s32.totalorder %v2203, %v957
      %vm2604 = vcmp.eq.s32.totalorder %v2203, %v961
      %vm2605 = vcmp.eq.s32.totalorder %v2203, %v965
      %vm2606 = vcmp.eq.s32.totalorder %v2203, %v969
      %vm2607 = vcmp.eq.s32.totalorder %v2204, %v957
      %vm2608 = vcmp.eq.s32.totalorder %v2204, %v961
      %vm2609 = vcmp.eq.s32.totalorder %v2204, %v965
      %vm2610 = vcmp.eq.s32.totalorder %v2204, %v969
      %vm2611 = vcmp.eq.s32.totalorder %v2205, %v957
      %vm2612 = vcmp.eq.s32.totalorder %v2205, %v961
      %vm2613 = vcmp.eq.s32.totalorder %v2205, %v965
      %vm2614 = vcmp.eq.s32.totalorder %v2205, %v969
      %vm2615 = vcmp.eq.s32.totalorder %v2206, %v957
      %vm2616 = vcmp.eq.s32.totalorder %v2206, %v961
      %vm2617 = vcmp.eq.s32.totalorder %v2206, %v965
      %vm2618 = vcmp.eq.s32.totalorder %v2206, %v969
      %vm2619 = vcmp.eq.s32.totalorder %v2207, %v957
      %vm2620 = vcmp.eq.s32.totalorder %v2207, %v961
      %vm2621 = vcmp.eq.s32.totalorder %v2207, %v965
      %vm2622 = vcmp.eq.s32.totalorder %v2207, %v969
      %vm2623 = vcmp.eq.s32.totalorder %v2208, %v957
      %vm2624 = vcmp.eq.s32.totalorder %v2208, %v961
      %vm2625 = vcmp.eq.s32.totalorder %v2208, %v965
      %vm2626 = vcmp.eq.s32.totalorder %v2208, %v969
      %vm2627 = vcmp.eq.s32.totalorder %v2209, %v957
      %vm2628 = vcmp.eq.s32.totalorder %v2209, %v961
      %vm2629 = vcmp.eq.s32.totalorder %v2209, %v965
      %vm2630 = vcmp.eq.s32.totalorder %v2209, %v969
      %vm2631 = vcmp.eq.s32.totalorder %v2210, %v957
      %vm2632 = vcmp.eq.s32.totalorder %v2210, %v961
      %vm2633 = vcmp.eq.s32.totalorder %v2210, %v965
      %vm2634 = vcmp.eq.s32.totalorder %v2210, %v969
      %vm2635 = vcmp.eq.s32.totalorder %v2211, %v957
      %vm2636 = vcmp.eq.s32.totalorder %v2211, %v961
      %vm2637 = vcmp.eq.s32.totalorder %v2211, %v965
      %vm2638 = vcmp.eq.s32.totalorder %v2211, %v969
      %v2639 = vsel %vm2575, 1, 0
      %v2640 = vsel %vm2576, 1, 0
      %v2641 = vsel %vm2577, 1, 0
      %v2642 = vsel %vm2578, 1, 0
      %v2643 = vsel %vm2579, 1, 0
      %v2644 = vsel %vm2580, 1, 0
      %v2645 = vsel %vm2581, 1, 0
      %v2646 = vsel %vm2582, 1, 0
      %v2647 = vsel %vm2583, 1, 0
      %v2648 = vsel %vm2584, 1, 0
      %v2649 = vsel %vm2585, 1, 0
      %v2650 = vsel %vm2586, 1, 0
      %v2651 = vsel %vm2587, 1, 0
      %v2652 = vsel %vm2588, 1, 0
      %v2653 = vsel %vm2589, 1, 0
      %v2654 = vsel %vm2590, 1, 0
      %v2655 = vsel %vm2591, 1, 0
      %v2656 = vsel %vm2592, 1, 0
      %v2657 = vsel %vm2593, 1, 0
      %v2658 = vsel %vm2594, 1, 0
      %v2659 = vsel %vm2595, 1, 0
      %v2660 = vsel %vm2596, 1, 0
      %v2661 = vsel %vm2597, 1, 0
      %v2662 = vsel %vm2598, 1, 0
      %v2663 = vsel %vm2599, 1, 0
      %v2664 = vsel %vm2600, 1, 0
      %v2665 = vsel %vm2601, 1, 0
      %v2666 = vsel %vm2602, 1, 0
      %v2667 = vsel %vm2603, 1, 0
      %v2668 = vsel %vm2604, 1, 0
      %v2669 = vsel %vm2605, 1, 0
      %v2670 = vsel %vm2606, 1, 0
      %v2671 = vsel %vm2607, 1, 0
      %v2672 = vsel %vm2608, 1, 0
      %v2673 = vsel %vm2609, 1, 0
      %v2674 = vsel %vm2610, 1, 0
      %v2675 = vsel %vm2611, 1, 0
      %v2676 = vsel %vm2612, 1, 0
      %v2677 = vsel %vm2613, 1, 0
      %v2678 = vsel %vm2614, 1, 0
      %v2679 = vsel %vm2615, 1, 0
      %v2680 = vsel %vm2616, 1, 0
      %v2681 = vsel %vm2617, 1, 0
      %v2682 = vsel %vm2618, 1, 0
      %v2683 = vsel %vm2619, 1, 0
      %v2684 = vsel %vm2620, 1, 0
      %v2685 = vsel %vm2621, 1, 0
      %v2686 = vsel %vm2622, 1, 0
      %v2687 = vsel %vm2623, 1, 0
      %v2688 = vsel %vm2624, 1, 0
      %v2689 = vsel %vm2625, 1, 0
      %v2690 = vsel %vm2626, 1, 0
      %v2691 = vsel %vm2627, 1, 0
      %v2692 = vsel %vm2628, 1, 0
      %v2693 = vsel %vm2629, 1, 0
      %v2694 = vsel %vm2630, 1, 0
      %v2695 = vsel %vm2631, 1, 0
      %v2696 = vsel %vm2632, 1, 0
      %v2697 = vsel %vm2633, 1, 0
      %v2698 = vsel %vm2634, 1, 0
      %v2699 = vsel %vm2635, 1, 0
      %v2700 = vsel %vm2636, 1, 0
      %v2701 = vsel %vm2637, 1, 0
      %v2702 = vsel %vm2638, 1, 0
      %v2703 = vcvt.s32.f32 %v2639
      %v2704 = vcvt.s32.f32 %v2640
      %v2705 = vcvt.s32.f32 %v2641
      %v2706 = vcvt.s32.f32 %v2642
      %v2707 = vcvt.s32.f32 %v2643
      %v2708 = vcvt.s32.f32 %v2644
      %v2709 = vcvt.s32.f32 %v2645
      %v2710 = vcvt.s32.f32 %v2646
      %v2711 = vcvt.s32.f32 %v2647
      %v2712 = vcvt.s32.f32 %v2648
      %v2713 = vcvt.s32.f32 %v2649
      %v2714 = vcvt.s32.f32 %v2650
      %v2715 = vcvt.s32.f32 %v2651
      %v2716 = vcvt.s32.f32 %v2652
      %v2717 = vcvt.s32.f32 %v2653
      %v2718 = vcvt.s32.f32 %v2654
      %v2719 = vcvt.s32.f32 %v2655
      %v2720 = vcvt.s32.f32 %v2656
      %v2721 = vcvt.s32.f32 %v2657
      %v2722 = vcvt.s32.f32 %v2658
      %v2723 = vcvt.s32.f32 %v2659
      %v2724 = vcvt.s32.f32 %v2660
      %v2725 = vcvt.s32.f32 %v2661
      %v2726 = vcvt.s32.f32 %v2662
      %v2727 = vcvt.s32.f32 %v2663
      %v2728 = vcvt.s32.f32 %v2664
      %v2729 = vcvt.s32.f32 %v2665
      %v2730 = vcvt.s32.f32 %v2666
      %v2731 = vcvt.s32.f32 %v2667
      %v2732 = vcvt.s32.f32 %v2668
      %v2733 = vcvt.s32.f32 %v2669
      %v2734 = vcvt.s32.f32 %v2670
      %v2735 = vcvt.s32.f32 %v2671
      %v2736 = vcvt.s32.f32 %v2672
      %v2737 = vcvt.s32.f32 %v2673
      %v2738 = vcvt.s32.f32 %v2674
      %v2739 = vcvt.s32.f32 %v2675
      %v2740 = vcvt.s32.f32 %v2676
      %v2741 = vcvt.s32.f32 %v2677
      %v2742 = vcvt.s32.f32 %v2678
      %v2743 = vcvt.s32.f32 %v2679
      %v2744 = vcvt.s32.f32 %v2680
      %v2745 = vcvt.s32.f32 %v2681
      %v2746 = vcvt.s32.f32 %v2682
      %v2747 = vcvt.s32.f32 %v2683
      %v2748 = vcvt.s32.f32 %v2684
      %v2749 = vcvt.s32.f32 %v2685
      %v2750 = vcvt.s32.f32 %v2686
      %v2751 = vcvt.s32.f32 %v2687
      %v2752 = vcvt.s32.f32 %v2688
      %v2753 = vcvt.s32.f32 %v2689
      %v2754 = vcvt.s32.f32 %v2690
      %v2755 = vcvt.s32.f32 %v2691
      %v2756 = vcvt.s32.f32 %v2692
      %v2757 = vcvt.s32.f32 %v2693
      %v2758 = vcvt.s32.f32 %v2694
      %v2759 = vcvt.s32.f32 %v2695
      %v2760 = vcvt.s32.f32 %v2696
      %v2761 = vcvt.s32.f32 %v2697
      %v2762 = vcvt.s32.f32 %v2698
      %v2763 = vcvt.s32.f32 %v2699
      %v2764 = vcvt.s32.f32 %v2700
      %v2765 = vcvt.s32.f32 %v2701
      %v2766 = vcvt.s32.f32 %v2702
      %v2767 = vpack.c.bf16 %v2707, %v2703
      %v2768 = vpack.c.bf16 %v2708, %v2704
      %v2769 = vpack.c.bf16 %v2709, %v2705
      %v2770 = vpack.c.bf16 %v2710, %v2706
      %v2771 = vpack.c.bf16 %v2715, %v2711
      %v2772 = vpack.c.bf16 %v2716, %v2712
      %v2773 = vpack.c.bf16 %v2717, %v2713
      %v2774 = vpack.c.bf16 %v2718, %v2714
      %v2775 = vpack.c.bf16 %v2723, %v2719
      %v2776 = vpack.c.bf16 %v2724, %v2720
      %v2777 = vpack.c.bf16 %v2725, %v2721
      %v2778 = vpack.c.bf16 %v2726, %v2722
      %v2779 = vpack.c.bf16 %v2731, %v2727
      %v2780 = vpack.c.bf16 %v2732, %v2728
      %v2781 = vpack.c.bf16 %v2733, %v2729
      %v2782 = vpack.c.bf16 %v2734, %v2730
      %v2783 = vpack.c.bf16 %v2739, %v2735
      %v2784 = vpack.c.bf16 %v2740, %v2736
      %v2785 = vpack.c.bf16 %v2741, %v2737
      %v2786 = vpack.c.bf16 %v2742, %v2738
      %v2787 = vpack.c.bf16 %v2747, %v2743
      %v2788 = vpack.c.bf16 %v2748, %v2744
      %v2789 = vpack.c.bf16 %v2749, %v2745
      %v2790 = vpack.c.bf16 %v2750, %v2746
      %v2791 = vpack.c.bf16 %v2755, %v2751
      %v2792 = vpack.c.bf16 %v2756, %v2752
      %v2793 = vpack.c.bf16 %v2757, %v2753
      %v2794 = vpack.c.bf16 %v2758, %v2754
      %v2795 = vpack.c.bf16 %v2763, %v2759
      %v2796 = vpack.c.bf16 %v2764, %v2760
      %v2797 = vpack.c.bf16 %v2765, %v2761
      %v2798 = vpack.c.bf16 %v2766, %v2762
      %2799 = vmatprep.subr.bf16.mxu0 %v2768
      %2800 = vmatpush1.bf16.msra.mxu0 %v2767
      %2801 = vmatprep.subr.bf16.mxu0 %v2772
      %2802 = vmatpush1.bf16.msra.mxu0 %v2771
      %2803 = vmatprep.subr.bf16.mxu0 %v2776
      %2804 = vmatpush1.bf16.msra.mxu0 %v2775
      %2805 = vmatprep.subr.bf16.mxu0 %v2780
      %2806 = vmatpush1.bf16.msra.mxu0 %v2779
      %2807 = vmatprep.subr.bf16.mxu0 %v2784
      %2808 = vmatpush1.bf16.msra.mxu0 %v2783
      %2809 = vmatprep.subr.bf16.mxu0 %v2788
      %2810 = vmatpush1.bf16.msra.mxu0 %v2787
      %2811 = vmatprep.subr.bf16.mxu0 %v2792
      %2812 = vmatpush1.bf16.msra.mxu0 %v2791
      %2813 = vmatprep.subr.bf16.mxu0 %v2796
      %2814 = vmatpush1.bf16.msra.mxu0 %v2795
      %2815 = vmatprep.subr.bf16.mxu0 0
      %2816 = vmatpush1.bf16.msra.mxu0 0
      %2817 = vmatprep.subr.bf16.mxu0 0
      %2818 = vmatpush1.bf16.msra.mxu0 0
      %2819 = vmatprep.subr.bf16.mxu0 0
      %2820 = vmatpush1.bf16.msra.mxu0 0
      %2821 = vmatprep.subr.bf16.mxu0 0
      %2822 = vmatpush1.bf16.msra.mxu0 0
      %2823 = vmatprep.subr.bf16.mxu0 0
      %2824 = vmatpush1.bf16.msra.mxu0 0
      %2825 = vmatprep.subr.bf16.mxu0 0
      %2826 = vmatpush1.bf16.msra.mxu0 0
      %2827 = vmatprep.subr.bf16.mxu0 0
      %2828 = vmatpush1.bf16.msra.mxu0 0
      %2829 = vmatprep.subr.bf16.mxu0 0
      %2830 = vmatpush1.bf16.msra.mxu0 0
      %2831 = vmatprep.mubr.bf16.mxu0 0
      %2832 = vmatmul.mubr.bf16.gmra.mrb[0].mxu0 %v2445
      %v2833 = vpop.f32.mrb[0].mxu0
      %v2834 = vadd.f32 0.0, %v2833
      %v2835 = vpop.f32.mrb[0].mxu0
      %v2836 = vadd.f32 0.0, %v2835
      %v2837 = vpop.f32.mrb[0].mxu0
      %v2838 = vadd.f32 0.0, %v2837
      %v2839 = vpop.f32.mrb[0].mxu0
      %v2840 = vadd.f32 0.0, %v2839
      %2841 = vmatprep.mubr.bf16.mxu0 0
      %2842 = vmatmul.mubr.bf16.gmra.mrb[0].mxu0 %v2446
      %v2843 = vpop.f32.mrb[0].mxu0
      %v2844 = vadd.f32 0.0, %v2843
      %v2845 = vpop.f32.mrb[0].mxu0
      %v2846 = vadd.f32 0.0, %v2845
      %v2847 = vpop.f32.mrb[0].mxu0
      %v2848 = vpop.f32.mrb[0].mxu0
      %2849 = vdwg.mxu0
      %2850 = vmatprep.subr.bf16.mxu0 %v2770
      %2851 = vmatpush1.bf16.msra.mxu0 %v2769
      %2852 = vmatprep.subr.bf16.mxu0 %v2774
      %2853 = vmatpush1.bf16.msra.mxu0 %v2773
      %2854 = vmatprep.subr.bf16.mxu0 %v2778
      %2855 = vmatpush1.bf16.msra.mxu0 %v2777
      %2856 = vmatprep.subr.bf16.mxu0 %v2782
      %2857 = vmatpush1.bf16.msra.mxu0 %v2781
      %2858 = vmatprep.subr.bf16.mxu0 %v2786
      %2859 = vmatpush1.bf16.msra.mxu0 %v2785
      %2860 = vmatprep.subr.bf16.mxu0 %v2790
      %2861 = vmatpush1.bf16.msra.mxu0 %v2789
      %2862 = vmatprep.subr.bf16.mxu0 %v2794
      %2863 = vmatpush1.bf16.msra.mxu0 %v2793
      %2864 = vmatprep.subr.bf16.mxu0 %v2798
      %2865 = vmatpush1.bf16.msra.mxu0 %v2797
      %2866 = vmatprep.subr.bf16.mxu0 0
      %2867 = vmatpush1.bf16.msra.mxu0 0
      %2868 = vmatprep.subr.bf16.mxu0 0
      %2869 = vmatpush1.bf16.msra.mxu0 0
      %2870 = vmatprep.subr.bf16.mxu0 0
      %2871 = vmatpush1.bf16.msra.mxu0 0
      %2872 = vmatprep.subr.bf16.mxu0 0
      %2873 = vmatpush1.bf16.msra.mxu0 0
      %2874 = vmatprep.subr.bf16.mxu0 0
      %2875 = vmatpush1.bf16.msra.mxu0 0
      %2876 = vmatprep.subr.bf16.mxu0 0
      %2877 = vmatpush1.bf16.msra.mxu0 0
      %2878 = vmatprep.subr.bf16.mxu0 0
      %2879 = vmatpush1.bf16.msra.mxu0 0
      %2880 = vmatprep.subr.bf16.mxu0 0
      %2881 = vmatpush1.bf16.msra.mxu0 0
      %2882 = vmatprep.mubr.bf16.mxu0 0
      %2883 = vmatmul.mubr.bf16.gmra.mrb[0].mxu0 %v2445
      %v2884 = vpop.f32.mrb[0].mxu0
      %v2885 = vadd.f32 0.0, %v2884
      %v2886 = vpop.f32.mrb[0].mxu0
      %v2887 = vadd.f32 0.0, %v2886
      %v2888 = vpop.f32.mrb[0].mxu0
      %v2889 = vadd.f32 0.0, %v2888
      %v2890 = vpop.f32.mrb[0].mxu0
      %v2891 = vadd.f32 0.0, %v2890
      %2892 = vmatprep.mubr.bf16.mxu0 0
      %2893 = vmatmul.mubr.bf16.gmra.mrb[0].mxu0 %v2446
      %v2894 = vpop.f32.mrb[0].mxu0
      %v2895 = vadd.f32 0.0, %v2894
      %v2896 = vpop.f32.mrb[0].mxu0
      %v2897 = vadd.f32 0.0, %v2896
      %v2898 = vpop.f32.mrb[0].mxu0
      %v2899 = vpop.f32.mrb[0].mxu0
      %2900 = vdwg.mxu0
      %v2901 = vmul.f32 %v1299, %v2834
      %v2902 = vmul.f32 %v1303, %v2836
      %v2903 = vmul.f32 %v1307, %v2885
      %v2904 = vmul.f32 %v1311, %v2887
      %v2905 = vadd.f32 %v2571, %v2901
      %v2906 = vadd.f32 %v2572, %v2902
      %v2907 = vadd.f32 %v2573, %v2903
      %v2908 = vadd.f32 %v2574, %v2904
      %v2909 = vmul.f32 %v1323, %v2838
      %v2910 = vmul.f32 %v1327, %v2840
      %v2911 = vmul.f32 %v1331, %v2889
      %v2912 = vmul.f32 %v1335, %v2891
      %v2913 = vadd.f32 %v2905, %v2909
      %v2914 = vadd.f32 %v2906, %v2910
      %v2915 = vadd.f32 %v2907, %v2911
      %v2916 = vadd.f32 %v2908, %v2912
      %v2917 = vmul.f32 %v1347, %v2844
      %v2918 = vmul.f32 %v1351, %v2846
      %v2919 = vmul.f32 %v1355, %v2895
      %v2920 = vmul.f32 %v1359, %v2897
      %v2921 = vadd.f32 %v2913, %v2917
      %v2922 = vadd.f32 %v2914, %v2918
      %v2923 = vadd.f32 %v2915, %v2919
      %v2924 = vadd.f32 %v2916, %v2920
      %vm2925 = vcmp.eq.s32.totalorder %v2196, %v1371
      %vm2926 = vcmp.eq.s32.totalorder %v2196, %v1375
      %vm2927 = vcmp.eq.s32.totalorder %v2196, %v1379
      %vm2928 = vcmp.eq.s32.totalorder %v2196, %v1383
      %vm2929 = vcmp.eq.s32.totalorder %v2197, %v1371
      %vm2930 = vcmp.eq.s32.totalorder %v2197, %v1375
      %vm2931 = vcmp.eq.s32.totalorder %v2197, %v1379
      %vm2932 = vcmp.eq.s32.totalorder %v2197, %v1383
      %vm2933 = vcmp.eq.s32.totalorder %v2198, %v1371
      %vm2934 = vcmp.eq.s32.totalorder %v2198, %v1375
      %vm2935 = vcmp.eq.s32.totalorder %v2198, %v1379
      %vm2936 = vcmp.eq.s32.totalorder %v2198, %v1383
      %vm2937 = vcmp.eq.s32.totalorder %v2199, %v1371
      %vm2938 = vcmp.eq.s32.totalorder %v2199, %v1375
      %vm2939 = vcmp.eq.s32.totalorder %v2199, %v1379
      %vm2940 = vcmp.eq.s32.totalorder %v2199, %v1383
      %vm2941 = vcmp.eq.s32.totalorder %v2200, %v1371
      %vm2942 = vcmp.eq.s32.totalorder %v2200, %v1375
      %vm2943 = vcmp.eq.s32.totalorder %v2200, %v1379
      %vm2944 = vcmp.eq.s32.totalorder %v2200, %v1383
      %vm2945 = vcmp.eq.s32.totalorder %v2201, %v1371
      %vm2946 = vcmp.eq.s32.totalorder %v2201, %v1375
      %vm2947 = vcmp.eq.s32.totalorder %v2201, %v1379
      %vm2948 = vcmp.eq.s32.totalorder %v2201, %v1383
      %vm2949 = vcmp.eq.s32.totalorder %v2202, %v1371
      %vm2950 = vcmp.eq.s32.totalorder %v2202, %v1375
      %vm2951 = vcmp.eq.s32.totalorder %v2202, %v1379
      %vm2952 = vcmp.eq.s32.totalorder %v2202, %v1383
      %vm2953 = vcmp.eq.s32.totalorder %v2203, %v1371
      %vm2954 = vcmp.eq.s32.totalorder %v2203, %v1375
      %vm2955 = vcmp.eq.s32.totalorder %v2203, %v1379
      %vm2956 = vcmp.eq.s32.totalorder %v2203, %v1383
      %vm2957 = vcmp.eq.s32.totalorder %v2204, %v1371
      %vm2958 = vcmp.eq.s32.totalorder %v2204, %v1375
      %vm2959 = vcmp.eq.s32.totalorder %v2204, %v1379
      %vm2960 = vcmp.eq.s32.totalorder %v2204, %v1383
      %vm2961 = vcmp.eq.s32.totalorder %v2205, %v1371
      %vm2962 = vcmp.eq.s32.totalorder %v2205, %v1375
      %vm2963 = vcmp.eq.s32.totalorder %v2205, %v1379
      %vm2964 = vcmp.eq.s32.totalorder %v2205, %v1383
      %vm2965 = vcmp.eq.s32.totalorder %v2206, %v1371
      %vm2966 = vcmp.eq.s32.totalorder %v2206, %v1375
      %vm2967 = vcmp.eq.s32.totalorder %v2206, %v1379
      %vm2968 = vcmp.eq.s32.totalorder %v2206, %v1383
      %vm2969 = vcmp.eq.s32.totalorder %v2207, %v1371
      %vm2970 = vcmp.eq.s32.totalorder %v2207, %v1375
      %vm2971 = vcmp.eq.s32.totalorder %v2207, %v1379
      %vm2972 = vcmp.eq.s32.totalorder %v2207, %v1383
      %vm2973 = vcmp.eq.s32.totalorder %v2208, %v1371
      %vm2974 = vcmp.eq.s32.totalorder %v2208, %v1375
      %vm2975 = vcmp.eq.s32.totalorder %v2208, %v1379
      %vm2976 = vcmp.eq.s32.totalorder %v2208, %v1383
      %vm2977 = vcmp.eq.s32.totalorder %v2209, %v1371
      %vm2978 = vcmp.eq.s32.totalorder %v2209, %v1375
      %vm2979 = vcmp.eq.s32.totalorder %v2209, %v1379
      %vm2980 = vcmp.eq.s32.totalorder %v2209, %v1383
      %vm2981 = vcmp.eq.s32.totalorder %v2210, %v1371
      %vm2982 = vcmp.eq.s32.totalorder %v2210, %v1375
      %vm2983 = vcmp.eq.s32.totalorder %v2210, %v1379
      %vm2984 = vcmp.eq.s32.totalorder %v2210, %v1383
      %vm2985 = vcmp.eq.s32.totalorder %v2211, %v1371
      %vm2986 = vcmp.eq.s32.totalorder %v2211, %v1375
      %vm2987 = vcmp.eq.s32.totalorder %v2211, %v1379
      %vm2988 = vcmp.eq.s32.totalorder %v2211, %v1383
      %v2989 = vsel %vm2925, 1, 0
      %v2990 = vsel %vm2926, 1, 0
      %v2991 = vsel %vm2927, 1, 0
      %v2992 = vsel %vm2928, 1, 0
      %v2993 = vsel %vm2929, 1, 0
      %v2994 = vsel %vm2930, 1, 0
      %v2995 = vsel %vm2931, 1, 0
      %v2996 = vsel %vm2932, 1, 0
      %v2997 = vsel %vm2933, 1, 0
      %v2998 = vsel %vm2934, 1, 0
      %v2999 = vsel %vm2935, 1, 0
      %v3000 = vsel %vm2936, 1, 0
      %v3001 = vsel %vm2937, 1, 0
      %v3002 = vsel %vm2938, 1, 0
      %v3003 = vsel %vm2939, 1, 0
      %v3004 = vsel %vm2940, 1, 0
      %v3005 = vsel %vm2941, 1, 0
      %v3006 = vsel %vm2942, 1, 0
      %v3007 = vsel %vm2943, 1, 0
      %v3008 = vsel %vm2944, 1, 0
      %v3009 = vsel %vm2945, 1, 0
      %v3010 = vsel %vm2946, 1, 0
      %v3011 = vsel %vm2947, 1, 0
      %v3012 = vsel %vm2948, 1, 0
      %v3013 = vsel %vm2949, 1, 0
      %v3014 = vsel %vm2950, 1, 0
      %v3015 = vsel %vm2951, 1, 0
      %v3016 = vsel %vm2952, 1, 0
      %v3017 = vsel %vm2953, 1, 0
      %v3018 = vsel %vm2954, 1, 0
      %v3019 = vsel %vm2955, 1, 0
      %v3020 = vsel %vm2956, 1, 0
      %v3021 = vsel %vm2957, 1, 0
      %v3022 = vsel %vm2958, 1, 0
      %v3023 = vsel %vm2959, 1, 0
      %v3024 = vsel %vm2960, 1, 0
      %v3025 = vsel %vm2961, 1, 0
      %v3026 = vsel %vm2962, 1, 0
      %v3027 = vsel %vm2963, 1, 0
      %v3028 = vsel %vm2964, 1, 0
      %v3029 = vsel %vm2965, 1, 0
      %v3030 = vsel %vm2966, 1, 0
      %v3031 = vsel %vm2967, 1, 0
      %v3032 = vsel %vm2968, 1, 0
      %v3033 = vsel %vm2969, 1, 0
      %v3034 = vsel %vm2970, 1, 0
      %v3035 = vsel %vm2971, 1, 0
      %v3036 = vsel %vm2972, 1, 0
      %v3037 = vsel %vm2973, 1, 0
      %v3038 = vsel %vm2974, 1, 0
      %v3039 = vsel %vm2975, 1, 0
      %v3040 = vsel %vm2976, 1, 0
      %v3041 = vsel %vm2977, 1, 0
      %v3042 = vsel %vm2978, 1, 0
      %v3043 = vsel %vm2979, 1, 0
      %v3044 = vsel %vm2980, 1, 0
      %v3045 = vsel %vm2981, 1, 0
      %v3046 = vsel %vm2982, 1, 0
      %v3047 = vsel %vm2983, 1, 0
      %v3048 = vsel %vm2984, 1, 0
      %v3049 = vsel %vm2985, 1, 0
      %v3050 = vsel %vm2986, 1, 0
      %v3051 = vsel %vm2987, 1, 0
      %v3052 = vsel %vm2988, 1, 0
      %v3053 = vcvt.s32.f32 %v2989
      %v3054 = vcvt.s32.f32 %v2990
      %v3055 = vcvt.s32.f32 %v2991
      %v3056 = vcvt.s32.f32 %v2992
      %v3057 = vcvt.s32.f32 %v2993
      %v3058 = vcvt.s32.f32 %v2994
      %v3059 = vcvt.s32.f32 %v2995
      %v3060 = vcvt.s32.f32 %v2996
      %v3061 = vcvt.s32.f32 %v2997
      %v3062 = vcvt.s32.f32 %v2998
      %v3063 = vcvt.s32.f32 %v2999
      %v3064 = vcvt.s32.f32 %v3000
      %v3065 = vcvt.s32.f32 %v3001
      %v3066 = vcvt.s32.f32 %v3002
      %v3067 = vcvt.s32.f32 %v3003
      %v3068 = vcvt.s32.f32 %v3004
      %v3069 = vcvt.s32.f32 %v3005
      %v3070 = vcvt.s32.f32 %v3006
      %v3071 = vcvt.s32.f32 %v3007
      %v3072 = vcvt.s32.f32 %v3008
      %v3073 = vcvt.s32.f32 %v3009
      %v3074 = vcvt.s32.f32 %v3010
      %v3075 = vcvt.s32.f32 %v3011
      %v3076 = vcvt.s32.f32 %v3012
      %v3077 = vcvt.s32.f32 %v3013
      %v3078 = vcvt.s32.f32 %v3014
      %v3079 = vcvt.s32.f32 %v3015
      %v3080 = vcvt.s32.f32 %v3016
      %v3081 = vcvt.s32.f32 %v3017
      %v3082 = vcvt.s32.f32 %v3018
      %v3083 = vcvt.s32.f32 %v3019
      %v3084 = vcvt.s32.f32 %v3020
      %v3085 = vcvt.s32.f32 %v3021
      %v3086 = vcvt.s32.f32 %v3022
      %v3087 = vcvt.s32.f32 %v3023
      %v3088 = vcvt.s32.f32 %v3024
      %v3089 = vcvt.s32.f32 %v3025
      %v3090 = vcvt.s32.f32 %v3026
      %v3091 = vcvt.s32.f32 %v3027
      %v3092 = vcvt.s32.f32 %v3028
      %v3093 = vcvt.s32.f32 %v3029
      %v3094 = vcvt.s32.f32 %v3030
      %v3095 = vcvt.s32.f32 %v3031
      %v3096 = vcvt.s32.f32 %v3032
      %v3097 = vcvt.s32.f32 %v3033
      %v3098 = vcvt.s32.f32 %v3034
      %v3099 = vcvt.s32.f32 %v3035
      %v3100 = vcvt.s32.f32 %v3036
      %v3101 = vcvt.s32.f32 %v3037
      %v3102 = vcvt.s32.f32 %v3038
      %v3103 = vcvt.s32.f32 %v3039
      %v3104 = vcvt.s32.f32 %v3040
      %v3105 = vcvt.s32.f32 %v3041
      %v3106 = vcvt.s32.f32 %v3042
      %v3107 = vcvt.s32.f32 %v3043
      %v3108 = vcvt.s32.f32 %v3044
      %v3109 = vcvt.s32.f32 %v3045
      %v3110 = vcvt.s32.f32 %v3046
      %v3111 = vcvt.s32.f32 %v3047
      %v3112 = vcvt.s32.f32 %v3048
      %v3113 = vcvt.s32.f32 %v3049
      %v3114 = vcvt.s32.f32 %v3050
      %v3115 = vcvt.s32.f32 %v3051
      %v3116 = vcvt.s32.f32 %v3052
      %v3117 = vpack.c.bf16 %v3057, %v3053
      %v3118 = vpack.c.bf16 %v3058, %v3054
      %v3119 = vpack.c.bf16 %v3059, %v3055
      %v3120 = vpack.c.bf16 %v3060, %v3056
      %v3121 = vpack.c.bf16 %v3065, %v3061
      %v3122 = vpack.c.bf16 %v3066, %v3062
      %v3123 = vpack.c.bf16 %v3067, %v3063
      %v3124 = vpack.c.bf16 %v3068, %v3064
      %v3125 = vpack.c.bf16 %v3073, %v3069
      %v3126 = vpack.c.bf16 %v3074, %v3070
      %v3127 = vpack.c.bf16 %v3075, %v3071
      %v3128 = vpack.c.bf16 %v3076, %v3072
      %v3129 = vpack.c.bf16 %v3081, %v3077
      %v3130 = vpack.c.bf16 %v3082, %v3078
      %v3131 = vpack.c.bf16 %v3083, %v3079
      %v3132 = vpack.c.bf16 %v3084, %v3080
      %v3133 = vpack.c.bf16 %v3089, %v3085
      %v3134 = vpack.c.bf16 %v3090, %v3086
      %v3135 = vpack.c.bf16 %v3091, %v3087
      %v3136 = vpack.c.bf16 %v3092, %v3088
      %v3137 = vpack.c.bf16 %v3097, %v3093
      %v3138 = vpack.c.bf16 %v3098, %v3094
      %v3139 = vpack.c.bf16 %v3099, %v3095
      %v3140 = vpack.c.bf16 %v3100, %v3096
      %v3141 = vpack.c.bf16 %v3105, %v3101
      %v3142 = vpack.c.bf16 %v3106, %v3102
      %v3143 = vpack.c.bf16 %v3107, %v3103
      %v3144 = vpack.c.bf16 %v3108, %v3104
      %v3145 = vpack.c.bf16 %v3113, %v3109
      %v3146 = vpack.c.bf16 %v3114, %v3110
      %v3147 = vpack.c.bf16 %v3115, %v3111
      %v3148 = vpack.c.bf16 %v3116, %v3112
      %3149 = vmatprep.subr.bf16.mxu0 %v3118
      %3150 = vmatpush1.bf16.msra.mxu0 %v3117
      %3151 = vmatprep.subr.bf16.mxu0 %v3122
      %3152 = vmatpush1.bf16.msra.mxu0 %v3121
      %3153 = vmatprep.subr.bf16.mxu0 %v3126
      %3154 = vmatpush1.bf16.msra.mxu0 %v3125
      %3155 = vmatprep.subr.bf16.mxu0 %v3130
      %3156 = vmatpush1.bf16.msra.mxu0 %v3129
      %3157 = vmatprep.subr.bf16.mxu0 %v3134
      %3158 = vmatpush1.bf16.msra.mxu0 %v3133
      %3159 = vmatprep.subr.bf16.mxu0 %v3138
      %3160 = vmatpush1.bf16.msra.mxu0 %v3137
      %3161 = vmatprep.subr.bf16.mxu0 %v3142
      %3162 = vmatpush1.bf16.msra.mxu0 %v3141
      %3163 = vmatprep.subr.bf16.mxu0 %v3146
      %3164 = vmatpush1.bf16.msra.mxu0 %v3145
      %3165 = vmatprep.subr.bf16.mxu0 0
      %3166 = vmatpush1.bf16.msra.mxu0 0
      %3167 = vmatprep.subr.bf16.mxu0 0
      %3168 = vmatpush1.bf16.msra.mxu0 0
      %3169 = vmatprep.subr.bf16.mxu0 0
      %3170 = vmatpush1.bf16.msra.mxu0 0
      %3171 = vmatprep.subr.bf16.mxu0 0
      %3172 = vmatpush1.bf16.msra.mxu0 0
      %3173 = vmatprep.subr.bf16.mxu0 0
      %3174 = vmatpush1.bf16.msra.mxu0 0
      %3175 = vmatprep.subr.bf16.mxu0 0
      %3176 = vmatpush1.bf16.msra.mxu0 0
      %3177 = vmatprep.subr.bf16.mxu0 0
      %3178 = vmatpush1.bf16.msra.mxu0 0
      %3179 = vmatprep.subr.bf16.mxu0 0
      %3180 = vmatpush1.bf16.msra.mxu0 0
      %3181 = vmatprep.mubr.bf16.mxu0 0
      %3182 = vmatmul.mubr.bf16.gmra.mrb[0].mxu0 %v2445
      %v3183 = vpop.f32.mrb[0].mxu0
      %v3184 = vadd.f32 0.0, %v3183
      %v3185 = vpop.f32.mrb[0].mxu0
      %v3186 = vadd.f32 0.0, %v3185
      %v3187 = vpop.f32.mrb[0].mxu0
      %v3188 = vadd.f32 0.0, %v3187
      %v3189 = vpop.f32.mrb[0].mxu0
      %v3190 = vadd.f32 0.0, %v3189
      %3191 = vmatprep.mubr.bf16.mxu0 0
      %3192 = vmatmul.mubr.bf16.gmra.mrb[0].mxu0 %v2446
      %v3193 = vpop.f32.mrb[0].mxu0
      %v3194 = vadd.f32 0.0, %v3193
      %v3195 = vpop.f32.mrb[0].mxu0
      %v3196 = vadd.f32 0.0, %v3195
      %v3197 = vpop.f32.mrb[0].mxu0
      %v3198 = vpop.f32.mrb[0].mxu0
      %3199 = vdwg.mxu0
      %3200 = vmatprep.subr.bf16.mxu0 %v3120
      %3201 = vmatpush1.bf16.msra.mxu0 %v3119
      %3202 = vmatprep.subr.bf16.mxu0 %v3124
      %3203 = vmatpush1.bf16.msra.mxu0 %v3123
      %3204 = vmatprep.subr.bf16.mxu0 %v3128
      %3205 = vmatpush1.bf16.msra.mxu0 %v3127
      %3206 = vmatprep.subr.bf16.mxu0 %v3132
      %3207 = vmatpush1.bf16.msra.mxu0 %v3131
      %3208 = vmatprep.subr.bf16.mxu0 %v3136
      %3209 = vmatpush1.bf16.msra.mxu0 %v3135
      %3210 = vmatprep.subr.bf16.mxu0 %v3140
      %3211 = vmatpush1.bf16.msra.mxu0 %v3139
      %3212 = vmatprep.subr.bf16.mxu0 %v3144
      %3213 = vmatpush1.bf16.msra.mxu0 %v3143
      %3214 = vmatprep.subr.bf16.mxu0 %v3148
      %3215 = vmatpush1.bf16.msra.mxu0 %v3147
      %3216 = vmatprep.subr.bf16.mxu0 0
      %3217 = vmatpush1.bf16.msra.mxu0 0
      %3218 = vmatprep.subr.bf16.mxu0 0
      %3219 = vmatpush1.bf16.msra.mxu0 0
      %3220 = vmatprep.subr.bf16.mxu0 0
      %3221 = vmatpush1.bf16.msra.mxu0 0
      %3222 = vmatprep.subr.bf16.mxu0 0
      %3223 = vmatpush1.bf16.msra.mxu0 0
      %3224 = vmatprep.subr.bf16.mxu0 0
      %3225 = vmatpush1.bf16.msra.mxu0 0
      %3226 = vmatprep.subr.bf16.mxu0 0
      %3227 = vmatpush1.bf16.msra.mxu0 0
      %3228 = vmatprep.subr.bf16.mxu0 0
      %3229 = vmatpush1.bf16.msra.mxu0 0
      %3230 = vmatprep.subr.bf16.mxu0 0
      %3231 = vmatpush1.bf16.msra.mxu0 0
      %3232 = vmatprep.mubr.bf16.mxu0 0
      %3233 = vmatmul.mubr.bf16.gmra.mrb[0].mxu0 %v2445
      %v3234 = vpop.f32.mrb[0].mxu0
      %v3235 = vadd.f32 0.0, %v3234
      %v3236 = vpop.f32.mrb[0].mxu0
      %v3237 = vadd.f32 0.0, %v3236
      %v3238 = vpop.f32.mrb[0].mxu0
      %v3239 = vadd.f32 0.0, %v3238
      %v3240 = vpop.f32.mrb[0].mxu0
      %v3241 = vadd.f32 0.0, %v3240
      %3242 = vmatprep.mubr.bf16.mxu0 0
      %3243 = vmatmul.mubr.bf16.gmra.mrb[0].mxu0 %v2446
      %v3244 = vpop.f32.mrb[0].mxu0
      %v3245 = vadd.f32 0.0, %v3244
      %v3246 = vpop.f32.mrb[0].mxu0
      %v3247 = vadd.f32 0.0, %v3246
      %v3248 = vpop.f32.mrb[0].mxu0
      %v3249 = vpop.f32.mrb[0].mxu0
      %3250 = vdwg.mxu0
      %v3251 = vmul.f32 %v1713, %v3184
      %v3252 = vmul.f32 %v1717, %v3186
      %v3253 = vmul.f32 %v1721, %v3235
      %v3254 = vmul.f32 %v1725, %v3237
      %v3255 = vadd.f32 %v2921, %v3251
      %v3256 = vadd.f32 %v2922, %v3252
      %v3257 = vadd.f32 %v2923, %v3253
      %v3258 = vadd.f32 %v2924, %v3254
      %v3259 = vmul.f32 %v1737, %v3188
      %v3260 = vmul.f32 %v1741, %v3190
      %v3261 = vmul.f32 %v1745, %v3239
      %v3262 = vmul.f32 %v1749, %v3241
      %v3263 = vadd.f32 %v3255, %v3259
      %v3264 = vadd.f32 %v3256, %v3260
      %v3265 = vadd.f32 %v3257, %v3261
      %v3266 = vadd.f32 %v3258, %v3262
      %v3267 = vmul.f32 %v1761, %v3194
      %v3268 = vmul.f32 %v1765, %v3196
      %v3269 = vmul.f32 %v1769, %v3245
      %v3270 = vmul.f32 %v1773, %v3247
      %v3271 = vadd.f32 %v3263, %v3267
      %v3272 = vadd.f32 %v3264, %v3268
      %v3273 = vadd.f32 %v3265, %v3269
      %v3274 = vadd.f32 %v3266, %v3270
      %vm3275 = vcmp.eq.s32.totalorder %v2196, %v1785
      %vm3276 = vcmp.eq.s32.totalorder %v2196, %v1789
      %vm3277 = vcmp.eq.s32.totalorder %v2196, %v1793
      %vm3278 = vcmp.eq.s32.totalorder %v2196, %v1797
      %vm3279 = vcmp.eq.s32.totalorder %v2197, %v1785
      %vm3280 = vcmp.eq.s32.totalorder %v2197, %v1789
      %vm3281 = vcmp.eq.s32.totalorder %v2197, %v1793
      %vm3282 = vcmp.eq.s32.totalorder %v2197, %v1797
      %vm3283 = vcmp.eq.s32.totalorder %v2198, %v1785
      %vm3284 = vcmp.eq.s32.totalorder %v2198, %v1789
      %vm3285 = vcmp.eq.s32.totalorder %v2198, %v1793
      %vm3286 = vcmp.eq.s32.totalorder %v2198, %v1797
      %vm3287 = vcmp.eq.s32.totalorder %v2199, %v1785
      %vm3288 = vcmp.eq.s32.totalorder %v2199, %v1789
      %vm3289 = vcmp.eq.s32.totalorder %v2199, %v1793
      %vm3290 = vcmp.eq.s32.totalorder %v2199, %v1797
      %vm3291 = vcmp.eq.s32.totalorder %v2200, %v1785
      %vm3292 = vcmp.eq.s32.totalorder %v2200, %v1789
      %vm3293 = vcmp.eq.s32.totalorder %v2200, %v1793
      %vm3294 = vcmp.eq.s32.totalorder %v2200, %v1797
      %vm3295 = vcmp.eq.s32.totalorder %v2201, %v1785
      %vm3296 = vcmp.eq.s32.totalorder %v2201, %v1789
      %vm3297 = vcmp.eq.s32.totalorder %v2201, %v1793
      %vm3298 = vcmp.eq.s32.totalorder %v2201, %v1797
      %vm3299 = vcmp.eq.s32.totalorder %v2202, %v1785
      %vm3300 = vcmp.eq.s32.totalorder %v2202, %v1789
      %vm3301 = vcmp.eq.s32.totalorder %v2202, %v1793
      %vm3302 = vcmp.eq.s32.totalorder %v2202, %v1797
      %vm3303 = vcmp.eq.s32.totalorder %v2203, %v1785
      %vm3304 = vcmp.eq.s32.totalorder %v2203, %v1789
      %vm3305 = vcmp.eq.s32.totalorder %v2203, %v1793
      %vm3306 = vcmp.eq.s32.totalorder %v2203, %v1797
      %vm3307 = vcmp.eq.s32.totalorder %v2204, %v1785
      %vm3308 = vcmp.eq.s32.totalorder %v2204, %v1789
      %vm3309 = vcmp.eq.s32.totalorder %v2204, %v1793
      %vm3310 = vcmp.eq.s32.totalorder %v2204, %v1797
      %vm3311 = vcmp.eq.s32.totalorder %v2205, %v1785
      %vm3312 = vcmp.eq.s32.totalorder %v2205, %v1789
      %vm3313 = vcmp.eq.s32.totalorder %v2205, %v1793
      %vm3314 = vcmp.eq.s32.totalorder %v2205, %v1797
      %vm3315 = vcmp.eq.s32.totalorder %v2206, %v1785
      %vm3316 = vcmp.eq.s32.totalorder %v2206, %v1789
      %vm3317 = vcmp.eq.s32.totalorder %v2206, %v1793
      %vm3318 = vcmp.eq.s32.totalorder %v2206, %v1797
      %vm3319 = vcmp.eq.s32.totalorder %v2207, %v1785
      %vm3320 = vcmp.eq.s32.totalorder %v2207, %v1789
      %vm3321 = vcmp.eq.s32.totalorder %v2207, %v1793
      %vm3322 = vcmp.eq.s32.totalorder %v2207, %v1797
      %vm3323 = vcmp.eq.s32.totalorder %v2208, %v1785
      %vm3324 = vcmp.eq.s32.totalorder %v2208, %v1789
      %vm3325 = vcmp.eq.s32.totalorder %v2208, %v1793
      %vm3326 = vcmp.eq.s32.totalorder %v2208, %v1797
      %vm3327 = vcmp.eq.s32.totalorder %v2209, %v1785
      %vm3328 = vcmp.eq.s32.totalorder %v2209, %v1789
      %vm3329 = vcmp.eq.s32.totalorder %v2209, %v1793
      %vm3330 = vcmp.eq.s32.totalorder %v2209, %v1797
      %vm3331 = vcmp.eq.s32.totalorder %v2210, %v1785
      %vm3332 = vcmp.eq.s32.totalorder %v2210, %v1789
      %vm3333 = vcmp.eq.s32.totalorder %v2210, %v1793
      %vm3334 = vcmp.eq.s32.totalorder %v2210, %v1797
      %vm3335 = vcmp.eq.s32.totalorder %v2211, %v1785
      %vm3336 = vcmp.eq.s32.totalorder %v2211, %v1789
      %vm3337 = vcmp.eq.s32.totalorder %v2211, %v1793
      %vm3338 = vcmp.eq.s32.totalorder %v2211, %v1797
      %v3339 = vsel %vm3275, 1, 0
      %v3340 = vsel %vm3276, 1, 0
      %v3341 = vsel %vm3277, 1, 0
      %v3342 = vsel %vm3278, 1, 0
      %v3343 = vsel %vm3279, 1, 0
      %v3344 = vsel %vm3280, 1, 0
      %v3345 = vsel %vm3281, 1, 0
      %v3346 = vsel %vm3282, 1, 0
      %v3347 = vsel %vm3283, 1, 0
      %v3348 = vsel %vm3284, 1, 0
      %v3349 = vsel %vm3285, 1, 0
      %v3350 = vsel %vm3286, 1, 0
      %v3351 = vsel %vm3287, 1, 0
      %v3352 = vsel %vm3288, 1, 0
      %v3353 = vsel %vm3289, 1, 0
      %v3354 = vsel %vm3290, 1, 0
      %v3355 = vsel %vm3291, 1, 0
      %v3356 = vsel %vm3292, 1, 0
      %v3357 = vsel %vm3293, 1, 0
      %v3358 = vsel %vm3294, 1, 0
      %v3359 = vsel %vm3295, 1, 0
      %v3360 = vsel %vm3296, 1, 0
      %v3361 = vsel %vm3297, 1, 0
      %v3362 = vsel %vm3298, 1, 0
      %v3363 = vsel %vm3299, 1, 0
      %v3364 = vsel %vm3300, 1, 0
      %v3365 = vsel %vm3301, 1, 0
      %v3366 = vsel %vm3302, 1, 0
      %v3367 = vsel %vm3303, 1, 0
      %v3368 = vsel %vm3304, 1, 0
      %v3369 = vsel %vm3305, 1, 0
      %v3370 = vsel %vm3306, 1, 0
      %v3371 = vsel %vm3307, 1, 0
      %v3372 = vsel %vm3308, 1, 0
      %v3373 = vsel %vm3309, 1, 0
      %v3374 = vsel %vm3310, 1, 0
      %v3375 = vsel %vm3311, 1, 0
      %v3376 = vsel %vm3312, 1, 0
      %v3377 = vsel %vm3313, 1, 0
      %v3378 = vsel %vm3314, 1, 0
      %v3379 = vsel %vm3315, 1, 0
      %v3380 = vsel %vm3316, 1, 0
      %v3381 = vsel %vm3317, 1, 0
      %v3382 = vsel %vm3318, 1, 0
      %v3383 = vsel %vm3319, 1, 0
      %v3384 = vsel %vm3320, 1, 0
      %v3385 = vsel %vm3321, 1, 0
      %v3386 = vsel %vm3322, 1, 0
      %v3387 = vsel %vm3323, 1, 0
      %v3388 = vsel %vm3324, 1, 0
      %v3389 = vsel %vm3325, 1, 0
      %v3390 = vsel %vm3326, 1, 0
      %v3391 = vsel %vm3327, 1, 0
      %v3392 = vsel %vm3328, 1, 0
      %v3393 = vsel %vm3329, 1, 0
      %v3394 = vsel %vm3330, 1, 0
      %v3395 = vsel %vm3331, 1, 0
      %v3396 = vsel %vm3332, 1, 0
      %v3397 = vsel %vm3333, 1, 0
      %v3398 = vsel %vm3334, 1, 0
      %v3399 = vsel %vm3335, 1, 0
      %v3400 = vsel %vm3336, 1, 0
      %v3401 = vsel %vm3337, 1, 0
      %v3402 = vsel %vm3338, 1, 0
      %v3403 = vcvt.s32.f32 %v3339
      %v3404 = vcvt.s32.f32 %v3340
      %v3405 = vcvt.s32.f32 %v3341
      %v3406 = vcvt.s32.f32 %v3342
      %v3407 = vcvt.s32.f32 %v3343
      %v3408 = vcvt.s32.f32 %v3344
      %v3409 = vcvt.s32.f32 %v3345
      %v3410 = vcvt.s32.f32 %v3346
      %v3411 = vcvt.s32.f32 %v3347
      %v3412 = vcvt.s32.f32 %v3348
      %v3413 = vcvt.s32.f32 %v3349
      %v3414 = vcvt.s32.f32 %v3350
      %v3415 = vcvt.s32.f32 %v3351
      %v3416 = vcvt.s32.f32 %v3352
      %v3417 = vcvt.s32.f32 %v3353
      %v3418 = vcvt.s32.f32 %v3354
      %v3419 = vcvt.s32.f32 %v3355
      %v3420 = vcvt.s32.f32 %v3356
      %v3421 = vcvt.s32.f32 %v3357
      %v3422 = vcvt.s32.f32 %v3358
      %v3423 = vcvt.s32.f32 %v3359
      %v3424 = vcvt.s32.f32 %v3360
      %v3425 = vcvt.s32.f32 %v3361
      %v3426 = vcvt.s32.f32 %v3362
      %v3427 = vcvt.s32.f32 %v3363
      %v3428 = vcvt.s32.f32 %v3364
      %v3429 = vcvt.s32.f32 %v3365
      %v3430 = vcvt.s32.f32 %v3366
      %v3431 = vcvt.s32.f32 %v3367
      %v3432 = vcvt.s32.f32 %v3368
      %v3433 = vcvt.s32.f32 %v3369
      %v3434 = vcvt.s32.f32 %v3370
      %v3435 = vcvt.s32.f32 %v3371
      %v3436 = vcvt.s32.f32 %v3372
      %v3437 = vcvt.s32.f32 %v3373
      %v3438 = vcvt.s32.f32 %v3374
      %v3439 = vcvt.s32.f32 %v3375
      %v3440 = vcvt.s32.f32 %v3376
      %v3441 = vcvt.s32.f32 %v3377
      %v3442 = vcvt.s32.f32 %v3378
      %v3443 = vcvt.s32.f32 %v3379
      %v3444 = vcvt.s32.f32 %v3380
      %v3445 = vcvt.s32.f32 %v3381
      %v3446 = vcvt.s32.f32 %v3382
      %v3447 = vcvt.s32.f32 %v3383
      %v3448 = vcvt.s32.f32 %v3384
      %v3449 = vcvt.s32.f32 %v3385
      %v3450 = vcvt.s32.f32 %v3386
      %v3451 = vcvt.s32.f32 %v3387
      %v3452 = vcvt.s32.f32 %v3388
      %v3453 = vcvt.s32.f32 %v3389
      %v3454 = vcvt.s32.f32 %v3390
      %v3455 = vcvt.s32.f32 %v3391
      %v3456 = vcvt.s32.f32 %v3392
      %v3457 = vcvt.s32.f32 %v3393
      %v3458 = vcvt.s32.f32 %v3394
      %v3459 = vcvt.s32.f32 %v3395
      %v3460 = vcvt.s32.f32 %v3396
      %v3461 = vcvt.s32.f32 %v3397
      %v3462 = vcvt.s32.f32 %v3398
      %v3463 = vcvt.s32.f32 %v3399
      %v3464 = vcvt.s32.f32 %v3400
      %v3465 = vcvt.s32.f32 %v3401
      %v3466 = vcvt.s32.f32 %v3402
      %v3467 = vpack.c.bf16 %v3407, %v3403
      %v3468 = vpack.c.bf16 %v3408, %v3404
      %v3469 = vpack.c.bf16 %v3409, %v3405
      %v3470 = vpack.c.bf16 %v3410, %v3406
      %v3471 = vpack.c.bf16 %v3415, %v3411
      %v3472 = vpack.c.bf16 %v3416, %v3412
      %v3473 = vpack.c.bf16 %v3417, %v3413
      %v3474 = vpack.c.bf16 %v3418, %v3414
      %v3475 = vpack.c.bf16 %v3423, %v3419
      %v3476 = vpack.c.bf16 %v3424, %v3420
      %v3477 = vpack.c.bf16 %v3425, %v3421
      %v3478 = vpack.c.bf16 %v3426, %v3422
      %v3479 = vpack.c.bf16 %v3431, %v3427
      %v3480 = vpack.c.bf16 %v3432, %v3428
      %v3481 = vpack.c.bf16 %v3433, %v3429
      %v3482 = vpack.c.bf16 %v3434, %v3430
      %v3483 = vpack.c.bf16 %v3439, %v3435
      %v3484 = vpack.c.bf16 %v3440, %v3436
      %v3485 = vpack.c.bf16 %v3441, %v3437
      %v3486 = vpack.c.bf16 %v3442, %v3438
      %v3487 = vpack.c.bf16 %v3447, %v3443
      %v3488 = vpack.c.bf16 %v3448, %v3444
      %v3489 = vpack.c.bf16 %v3449, %v3445
      %v3490 = vpack.c.bf16 %v3450, %v3446
      %v3491 = vpack.c.bf16 %v3455, %v3451
      %v3492 = vpack.c.bf16 %v3456, %v3452
      %v3493 = vpack.c.bf16 %v3457, %v3453
      %v3494 = vpack.c.bf16 %v3458, %v3454
      %v3495 = vpack.c.bf16 %v3463, %v3459
      %v3496 = vpack.c.bf16 %v3464, %v3460
      %v3497 = vpack.c.bf16 %v3465, %v3461
      %v3498 = vpack.c.bf16 %v3466, %v3462
      %3499 = vmatprep.subr.bf16.mxu0 %v3468
      %3500 = vmatpush1.bf16.msra.mxu0 %v3467
      %3501 = vmatprep.subr.bf16.mxu0 %v3472
      %3502 = vmatpush1.bf16.msra.mxu0 %v3471
      %3503 = vmatprep.subr.bf16.mxu0 %v3476
      %3504 = vmatpush1.bf16.msra.mxu0 %v3475
      %3505 = vmatprep.subr.bf16.mxu0 %v3480
      %3506 = vmatpush1.bf16.msra.mxu0 %v3479
      %3507 = vmatprep.subr.bf16.mxu0 %v3484
      %3508 = vmatpush1.bf16.msra.mxu0 %v3483
      %3509 = vmatprep.subr.bf16.mxu0 %v3488
      %3510 = vmatpush1.bf16.msra.mxu0 %v3487
      %3511 = vmatprep.subr.bf16.mxu0 %v3492
      %3512 = vmatpush1.bf16.msra.mxu0 %v3491
      %3513 = vmatprep.subr.bf16.mxu0 %v3496
      %3514 = vmatpush1.bf16.msra.mxu0 %v3495
      %3515 = vmatprep.subr.bf16.mxu0 0
      %3516 = vmatpush1.bf16.msra.mxu0 0
      %3517 = vmatprep.subr.bf16.mxu0 0
      %3518 = vmatpush1.bf16.msra.mxu0 0
      %3519 = vmatprep.subr.bf16.mxu0 0
      %3520 = vmatpush1.bf16.msra.mxu0 0
      %3521 = vmatprep.subr.bf16.mxu0 0
      %3522 = vmatpush1.bf16.msra.mxu0 0
      %3523 = vmatprep.subr.bf16.mxu0 0
      %3524 = vmatpush1.bf16.msra.mxu0 0
      %3525 = vmatprep.subr.bf16.mxu0 0
      %3526 = vmatpush1.bf16.msra.mxu0 0
      %3527 = vmatprep.subr.bf16.mxu0 0
      %3528 = vmatpush1.bf16.msra.mxu0 0
      %3529 = vmatprep.subr.bf16.mxu0 0
      %3530 = vmatpush1.bf16.msra.mxu0 0
      %3531 = vmatprep.mubr.bf16.mxu0 0
      %3532 = vmatmul.mubr.bf16.gmra.mrb[0].mxu0 %v2445
      %v3533 = vpop.f32.mrb[0].mxu0
      %v3534 = vadd.f32 0.0, %v3533
      %v3535 = vpop.f32.mrb[0].mxu0
      %v3536 = vadd.f32 0.0, %v3535
      %v3537 = vpop.f32.mrb[0].mxu0
      %v3538 = vadd.f32 0.0, %v3537
      %v3539 = vpop.f32.mrb[0].mxu0
      %v3540 = vadd.f32 0.0, %v3539
      %3541 = vmatprep.mubr.bf16.mxu0 0
      %3542 = vmatmul.mubr.bf16.gmra.mrb[0].mxu0 %v2446
      %v3543 = vpop.f32.mrb[0].mxu0
      %v3544 = vadd.f32 0.0, %v3543
      %v3545 = vpop.f32.mrb[0].mxu0
      %v3546 = vadd.f32 0.0, %v3545
      %v3547 = vpop.f32.mrb[0].mxu0
      %v3548 = vpop.f32.mrb[0].mxu0
      %3549 = vdwg.mxu0
      %3550 = vmatprep.subr.bf16.mxu0 %v3470
      %3551 = vmatpush1.bf16.msra.mxu0 %v3469
      %3552 = vmatprep.subr.bf16.mxu0 %v3474
      %3553 = vmatpush1.bf16.msra.mxu0 %v3473
      %3554 = vmatprep.subr.bf16.mxu0 %v3478
      %3555 = vmatpush1.bf16.msra.mxu0 %v3477
      %3556 = vmatprep.subr.bf16.mxu0 %v3482
      %3557 = vmatpush1.bf16.msra.mxu0 %v3481
      %3558 = vmatprep.subr.bf16.mxu0 %v3486
      %3559 = vmatpush1.bf16.msra.mxu0 %v3485
      %3560 = vmatprep.subr.bf16.mxu0 %v3490
      %3561 = vmatpush1.bf16.msra.mxu0 %v3489
      %3562 = vmatprep.subr.bf16.mxu0 %v3494
      %3563 = vmatpush1.bf16.msra.mxu0 %v3493
      %3564 = vmatprep.subr.bf16.mxu0 %v3498
      %3565 = vmatpush1.bf16.msra.mxu0 %v3497
      %3566 = vmatprep.subr.bf16.mxu0 0
      %3567 = vmatpush1.bf16.msra.mxu0 0
      %3568 = vmatprep.subr.bf16.mxu0 0
      %3569 = vmatpush1.bf16.msra.mxu0 0
      %3570 = vmatprep.subr.bf16.mxu0 0
      %3571 = vmatpush1.bf16.msra.mxu0 0
      %3572 = vmatprep.subr.bf16.mxu0 0
      %3573 = vmatpush1.bf16.msra.mxu0 0
      %3574 = vmatprep.subr.bf16.mxu0 0
      %3575 = vmatpush1.bf16.msra.mxu0 0
      %3576 = vmatprep.subr.bf16.mxu0 0
      %3577 = vmatpush1.bf16.msra.mxu0 0
      %3578 = vmatprep.subr.bf16.mxu0 0
      %3579 = vmatpush1.bf16.msra.mxu0 0
      %3580 = vmatprep.subr.bf16.mxu0 0
      %3581 = vmatpush1.bf16.msra.mxu0 0
      %3582 = vmatprep.mubr.bf16.mxu0 0
      %3583 = vmatmul.mubr.bf16.gmra.mrb[0].mxu0 %v2445
      %v3584 = vpop.f32.mrb[0].mxu0
      %v3585 = vadd.f32 0.0, %v3584
      %v3586 = vpop.f32.mrb[0].mxu0
      %v3587 = vadd.f32 0.0, %v3586
      %v3588 = vpop.f32.mrb[0].mxu0
      %v3589 = vadd.f32 0.0, %v3588
      %v3590 = vpop.f32.mrb[0].mxu0
      %v3591 = vadd.f32 0.0, %v3590
      %3592 = vmatprep.mubr.bf16.mxu0 0
      %3593 = vmatmul.mubr.bf16.gmra.mrb[0].mxu0 %v2446
      %v3594 = vpop.f32.mrb[0].mxu0
      %v3595 = vadd.f32 0.0, %v3594
      %v3596 = vpop.f32.mrb[0].mxu0
      %v3597 = vadd.f32 0.0, %v3596
      %v3598 = vpop.f32.mrb[0].mxu0
      %v3599 = vpop.f32.mrb[0].mxu0
      %3600 = vdwg.mxu0
      %v3601 = vmul.f32 %v2127, %v3534
      %v3602 = vmul.f32 %v2131, %v3536
      %v3603 = vmul.f32 %v2135, %v3585
      %v3604 = vmul.f32 %v2139, %v3587
      %v3605 = vadd.f32 %v3271, %v3601
      %v3606 = vadd.f32 %v3272, %v3602
      %v3607 = vadd.f32 %v3273, %v3603
      %v3608 = vadd.f32 %v3274, %v3604
      %v3609 = vmul.f32 %v2151, %v3538
      %v3610 = vmul.f32 %v2155, %v3540
      %v3611 = vmul.f32 %v2159, %v3589
      %v3612 = vmul.f32 %v2163, %v3591
      %v3613 = vadd.f32 %v3605, %v3609
      %v3614 = vadd.f32 %v3606, %v3610
      %v3615 = vadd.f32 %v3607, %v3611
      %v3616 = vadd.f32 %v3608, %v3612
      %v3617 = vmul.f32 %v2175, %v3544
      %v3618 = vmul.f32 %v2179, %v3546
      %v3619 = vmul.f32 %v2183, %v3595
      %v3620 = vmul.f32 %v2187, %v3597
      %v3621 = vadd.f32 %v3613, %v3617
      %v3622 = vadd.f32 %v3614, %v3618
      %v3623 = vadd.f32 %v3615, %v3619
      %v3624 = vadd.f32 %v3616, %v3620
      %v3625 = vadd.f32 %v3621, 1e-08
      %v3626 = vadd.f32 %v3622, 1e-08
      %v3627 = vadd.f32 %v3623, 1e-08
      %v3628 = vadd.f32 %v3624, 1e-08
      %v3629 = vmul.f32 %v3625, %v3625
      %v3630 = vmul.f32 %v3626, %v3626
      %v3631 = vmul.f32 %v3627, %v3627
      %v3632 = vmul.f32 %v3628, %v3628
      %v3633 = vrot.slane %v3629, 4
      %v3634 = vadd.f32 %v3629, %v3633
      %v3635 = vrot.slane %v3634, 2
      %v3636 = vadd.f32 %v3634, %v3635
      %v3637 = vrot.slane %v3636, 1
      %v3638 = vadd.f32 %v3636, %v3637
      %v3639 = vrot.slane %v3630, 4
      %v3640 = vadd.f32 %v3630, %v3639
      %v3641 = vrot.slane %v3640, 2
      %v3642 = vadd.f32 %v3640, %v3641
      %v3643 = vrot.slane %v3642, 1
      %v3644 = vadd.f32 %v3642, %v3643
      %v3645 = vrot.slane %v3631, 4
      %v3646 = vadd.f32 %v3631, %v3645
      %v3647 = vrot.slane %v3646, 2
      %v3648 = vadd.f32 %v3646, %v3647
      %v3649 = vrot.slane %v3648, 1
      %v3650 = vadd.f32 %v3648, %v3649
      %v3651 = vrot.slane %v3632, 4
      %v3652 = vadd.f32 %v3632, %v3651
      %v3653 = vrot.slane %v3652, 2
      %v3654 = vadd.f32 %v3652, %v3653
      %v3655 = vrot.slane %v3654, 1
      %v3656 = vadd.f32 %v3654, %v3655
      %v3657 = vmax.f32 %v3638, 1e-24
      %v3658 = vmax.f32 %v3644, 1e-24
      %v3659 = vmax.f32 %v3650, 1e-24
      %v3660 = vmax.f32 %v3656, 1e-24
      %v3661 = vrsqrt.pop %v3657
      %v3662 = vrsqrt.pop %v3658
      %v3663 = vrsqrt.pop %v3659
      %v3664 = vrsqrt.pop %v3660
      %v3665 = vmul.f32 %v3625, %v3661
      %v3666 = vmul.f32 %v3626, %v3662
      %v3667 = vmul.f32 %v3627, %v3663
      %v3668 = vmul.f32 %v3628, %v3664
      %3669 = vst [vmem:[%s181] sm:$0xff] %v3665
      %3670 = vst [vmem:[%s181 + $0x8] sm:$0xff] %v3666
      %3671 = vst [vmem:[%s181 + $0x10] sm:$0xff] %v3667
      %3672 = vst [vmem:[%s181 + $0x18] sm:$0xff] %v3668
      %v3677 = vcombine.low %v383, %v385
      %v3678 = vcombine.low %v387, %v389
      %v3680 = vunpack.c.l.s4 1966171168
      %v3681 = vunpack.c.0.s8 %v3680
      %v3682 = vlaneseq
      %v3683 = vshrl.u32 %v3682, 7
      %v3684 = vsub.s32 %v3681, %v3683
      %v3685 = vrot.slane %v3677, %v3684
      %v3687 = vunpack.c.l.s4 1966171168
      %v3688 = vunpack.c.0.s8 %v3687
      %v3689 = vlaneseq
      %v3690 = vshrl.u32 %v3689, 7
      %v3691 = vsub.s32 %v3688, %v3690
      %v3692 = vrot.slane %v3678, %v3691
      %v3693 = vcombine.low %v3685, %v3692
      %v3695 = vunpack.c.l.s4 1966171168
      %v3696 = vunpack.c.0.s8 %v3695
      %v3697 = vlaneseq
      %v3698 = vshrl.u32 %v3697, 7
      %v3699 = vsub.s32 %v3696, %v3698
      %v3700 = vrot.slane %v3693, %v3699
      %v3702 = vlaneseq
      %vm3703 = vcmp.ge.s32.totalorder %v3702, 0
      %vm3704 = vcmp.lt.s32.totalorder %v3702, 512
      %vm3705 = vmand %vm3703, %vm3704
      %s3706 = scalar_lea.vmem %s181, 32
      %3707 = vst.msk [vmem:[%s3706] ss:$8 sm:$0xf] %vm3705, %v3700
      %3708 = vst.msk [vmem:[%s3706] ss:$8 sm:$0x0] %vm3705, %v3700
      %s3709 = smul.u32 4, %s18
      %p3710 = scmp.lt.s32.totalorder %s17, 1
      %s3711 = scalar_select %p3710, %s17, 1
      %p3712 = scmp.lt.s32.totalorder %s3709, 3
      %s3713 = scalar_select %p3712, %s3709, 3
      %s3714 = smul.addr %s3711, 8
      %s3715 = sadd.s32 %s3713, %s3714
      %s3716 = smul.addr %s3715, 8
      %s3717 = scalar_lea.vmem %s2, %s3716
      // Predicated region
      $region29: #{neural_mesh_model_forward.1} parent=27 // pred_check
        %p3718 = pneg %p94
      $region30: #{neural_mesh_model_forward.1} parent=27 // pred_check_branch
        %3720 = sbr.rel (%p3718) target = $region32
      $region31: #{neural_mesh_model_forward.1} parent=27 // pred_region
        %s3721 = smul.u32 4, %s18
      $region32: #{neural_mesh_model_forward.1} parent=27 // pred_fallthru
        _
    $region28: #{neural_mesh_model_forward.1} parent=5 // pred_fallthru
      _
    %p3722 = scmp.le.s32.totalorder 2, %s8
    // Predicated region
    $region33: #{neural_mesh_model_forward.1} parent=5 // pred_check
      %p3723 = pneg %p3722
    $region34: #{neural_mesh_model_forward.1} parent=5 // pred_check_branch
      %3725 = sbr.rel (%p3723) target = $region36
    $region35: #{neural_mesh_model_forward.1} parent=5 // pred_region
      %s3726 = ssub.s32 %s8, 2
      // Predicated region
      $region37: #{neural_mesh_model_forward.1} parent=35 // pred_check
        %p3727 = pneg %p100
      $region38: #{neural_mesh_model_forward.1} parent=35 // pred_check_branch
        %3729 = sbr.rel (%p3727) target = $region40
      $region39: #{neural_mesh_model_forward.1} parent=35 // pred_region
        %s3730 = smul.u32 4, %s20
        %p3731 = scmp.lt.s32.totalorder %s19, 1
        %s3732 = scalar_select %p3731, %s19, 1
        %p3733 = scmp.lt.s32.totalorder %s3730, 3
        %s3734 = scalar_select %p3733, %s3730, 3
        %s3735 = smul.addr %s3732, 8
        %s3736 = sadd.s32 %s3734, %s3735
        %s3737 = smul.addr %s3736, 8
        %s3738 = scalar_lea.vmem %s2, %s3737
      $region40: #{neural_mesh_model_forward.1} parent=35 // pred_fallthru
        _
    $region36: #{neural_mesh_model_forward.1} parent=5 // pred_fallthru
      _
  $region6: #{neural_mesh_model_forward.1} parent=0 // loop_footer
    %s12 = sadd.s32 1, %s8
  $region7: #{neural_mesh_model_forward.1} parent=0 // loop_footer_branch
    %7 = sbr.rel target = $region3
  $region8: #{neural_mesh_model_forward.1} parent=0 // loop_exit
    _

</llo_original>
